<compile_context>
chip_gen: v7x
topology: tpu7x:2x2x1
jax: 0.10.0
libtpu: 0.0.40
codegen_flags: <defaults>
</compile_context>

<pallas_src>
import math
import functools

import jax
import jax.numpy as jnp
from jax import lax
from jax.experimental import pallas as pl
from jax.experimental.pallas import tpu as pltpu


def _round_up(x, m):
    return ((x + m - 1) // m) * m


# ----------------------------------------------------------------------------
# Pallas kernel: fused bidirectional LSTM, TT timesteps per grid step.
# ----------------------------------------------------------------------------
def _bilstm_kernel(maxlen_ref, lens_ref, gxf_ref, gxb_ref, whhf_ref, whhb_ref,
                   yf_ref, yb_ref,
                   hf_sc, cf_sc, hb_sc, cb_sc,
                   *, tt, hp, t_total):
    """One time-block of a fused forward+backward LSTM layer.

    maxlen_ref : (nBb,)          int32  scalar-prefetched per-batch-block max length
    lens_ref   : (Bblk, 1)       int32  valid sequence length per batch row
    gx*_ref    : (TT, Bblk, 4Hp) bf16   precomputed x@W_ih + b (gate order i,f,g,o)
    whh*_ref   : (Hp, 4Hp)       bf16   recurrent weights (single-buffered)
    y*_ref     : (TT, Bblk, Hp)  bf16   per-direction hidden-state outputs
    h/c scratch: (Bblk, Hp)      f32    carries, persist across the time axis
    """
    bb = pl.program_id(0)          # batch-block index ("parallel")
    tb = pl.program_id(1)          # time-block index  ("arbitrary")
    t0 = tb * tt                   # first global (forward) timestep of block
    max_len = maxlen_ref[bb]       # scalar, SMEM

    @pl.when(tb == 0)
    def _():
        hf_sc[...] = jnp.zeros_like(hf_sc)
        cf_sc[...] = jnp.zeros_like(cf_sc)
        hb_sc[...] = jnp.zeros_like(hb_sc)
        cb_sc[...] = jnp.zeros_like(cb_sc)

    lens = lens_ref[...]           # (Bblk, 1) int32

    def cell(gx_row, h_prev, c_prev, whh_ref, valid):
        # Recurrent matmul on the MXU: bf16 inputs, f32 accumulation.  The
        # weight is read from VMEM inside the step (not held live in vregs
        # across the unrolled loop) to avoid a large spill source.
        # TODO(synk): for tiny batch blocks, drive the MXU weight-stationary
        # (pltpu.matmul_push_rhs once per grid step, matmul_acc_lhs per step).
        gates = gx_row.astype(jnp.float32) + jnp.dot(
            h_prev.astype(jnp.bfloat16), whh_ref[...],
            preferred_element_type=jnp.float32)              # (Bblk, 4Hp) f32
        # Lane-aligned gate slices (Hp is a multiple of 128).
        i_g = jax.nn.sigmoid(gates[:, 0 * hp:1 * hp])
        f_g = jax.nn.sigmoid(gates[:, 1 * hp:2 * hp])
        g_g = jnp.tanh(gates[:, 2 * hp:3 * hp])
        o_g = jax.nn.sigmoid(gates[:, 3 * hp:4 * hp])
        c_new = f_g * c_prev + i_g * g_g
        h_new = o_g * jnp.tanh(c_new)
        # Packed-sequence semantics: carry only through valid timesteps,
        # zero the output at padded timesteps.
        c_out = jnp.where(valid, c_new, c_prev)
        h_out = jnp.where(valid, h_new, h_prev)
        y_out = jnp.where(valid, h_new, jnp.zeros_like(h_new))
        return h_out, c_out, y_out

    # ---- forward direction: global times t0 .. t0+tt-1 -----------------
    fwd_active = t0 < max_len

    @pl.when(fwd_active)
    def _():
        h, c = hf_sc[...], cf_sc[...]
        # Static, fully unrolled loop (TT is kept modest; carries stay in
        # vregs for small Bblk*Hp).
        # TODO(synk): switch to lax.fori_loop(unroll=2-4) if Bblk*Hp carries
        # exceed a few vregs and the bundle dump shows ld/st spills.
        for s in range(tt):
            valid = (t0 + s) < lens
            h, c, y = cell(gxf_ref[s], h, c, whhf_ref, valid)
            yf_ref[s] = y.astype(yf_ref.dtype)
        hf_sc[...], cf_sc[...] = h, c

    @pl.when(jnp.logical_not(fwd_active))
    def _():
        # Whole block is padding for every row in this batch block.
        yf_ref[...] = jnp.zeros_like(yf_ref)

    # ---- backward direction: global times T-1-t0 .. T-tt-t0 ------------
    bwd_active = (t_total - tt - t0) < max_len

    @pl.when(bwd_active)
    def _():
        h, c = hb_sc[...], cb_sc[...]
        for s in range(tt):
            valid = (t_total - 1 - (t0 + s)) < lens
            h, c, y = cell(gxb_ref[tt - 1 - s], h, c, whhb_ref, valid)
            yb_ref[tt - 1 - s] = y.astype(yb_ref.dtype)
        hb_sc[...], cb_sc[...] = h, c

    @pl.when(jnp.logical_not(bwd_active))
    def _():
        yb_ref[...] = jnp.zeros_like(yb_ref)


def _weight_block_spec(hp):
    """Constant-index recurrent-weight spec, single-buffered when supported."""
    idx = lambda bb, tb, ml: (0, 0)
    try:
        return pl.BlockSpec((hp, 4 * hp), idx, pipeline_mode=pl.Buffered(1))
    except Exception:
        # Older Pallas without pipeline_mode: fall back to default buffering.
        return pl.BlockSpec((hp, 4 * hp), idx)


def _bilstm_layer_pallas(maxlen, lens, gx_f, gx_b, whh_f, whh_b,
                         *, time_block, bblk, vmem_limit):
    """Run one fused bidirectional LSTM layer.

    maxlen : (nBb,) int32, lens : (Bp, 1) int32,
    gx_*   : (Tp, Bp, 4Hp) bf16, whh_* : (Hp, 4Hp) bf16
    returns (y_fwd, y_bwd), each (Tp, Bp, Hp) bf16.
    """
    Tp, Bp, G = gx_f.shape
    Hp = G // 4
    TT = time_block
    nTb = Tp // TT
    Bblk = bblk
    nBb = Bp // Bblk

    kernel = functools.partial(_bilstm_kernel, tt=TT, hp=Hp, t_total=Tp)

    out_shape = (jax.ShapeDtypeStruct((Tp, Bp, Hp), jnp.bfloat16),
                 jax.ShapeDtypeStruct((Tp, Bp, Hp), jnp.bfloat16))

    return pl.pallas_call(
        kernel,
        out_shape=out_shape,
        grid_spec=pltpu.PrefetchScalarGridSpec(
            num_scalar_prefetch=1,                       # per-block max length
            grid=(nBb, nTb),
            in_specs=[
                # per-batch lengths (loaded once per batch block)
                pl.BlockSpec((Bblk, 1), lambda bb, tb, ml: (bb, 0)),
                # precomputed input gates, forward time order
                pl.BlockSpec((TT, Bblk, 4 * Hp),
                             lambda bb, tb, ml: (tb, bb, 0)),
                # precomputed input gates, reversed time order (backward dir)
                pl.BlockSpec((TT, Bblk, 4 * Hp),
                             lambda bb, tb, ml: (nTb - 1 - tb, bb, 0)),
                # recurrent weights: constant block index, single-buffered
                _weight_block_spec(Hp),
                _weight_block_spec(Hp),
            ],
            out_specs=[
                pl.BlockSpec((TT, Bblk, Hp), lambda bb, tb, ml: (tb, bb, 0)),
                pl.BlockSpec((TT, Bblk, Hp),
                             lambda bb, tb, ml: (nTb - 1 - tb, bb, 0)),
            ],
            scratch_shapes=[pltpu.VMEM((Bblk, Hp), jnp.float32)
                            for _ in range(4)],
        ),
        compiler_params=pltpu.CompilerParams(
            dimension_semantics=("parallel", "arbitrary"),
            vmem_limit_bytes=vmem_limit),
    )(maxlen, lens, gx_f, gx_b, whh_f, whh_b)


# ----------------------------------------------------------------------------
# Generation-aware block-size / VMEM-budget selection
# ----------------------------------------------------------------------------
def _choose_blocks(T, Bp, Hp):
    try:
        cap = int(pltpu.get_tpu_info().vmem_capacity_bytes)
    except Exception:
        cap = 64 << 20          # conservative fallback (v7x per-TensorCore VMEM)
    budget = int(cap * 0.70)

    # Batch block: split in two so the leading "parallel" grid axis can shard
    # over v7x's two TensorCores, but only when each block keeps the MXU
    # M-dim reasonably filled (>=128 rows).
    if Bp >= 256 and (Bp // 2) % 8 == 0:
        Bblk = Bp // 2
    else:
        Bblk = Bp

    def est(tt, bblk):
        gx_blk = tt * bblk * 4 * Hp * 2        # bf16, per direction
        y_blk = tt * bblk * Hp * 2             # bf16, per direction
        w_bytes = Hp * 4 * Hp * 2              # bf16, per direction, 1 buffer
        scratch = 4 * bblk * Hp * 4            # f32 carries
        return (2 * 2 * gx_blk) + (2 * 2 * y_blk) + 2 * w_bytes + scratch + (1 << 20)

    # Bigger time blocks amortize per-grid-step overhead; don't over-pad tiny T.
    tt_cap = max(8, _round_up(int(T), 8))
    TT = 8
    for cand in (64, 32, 16, 8):
        if cand > tt_cap:
            continue
        if est(cand, Bblk) <= budget:
            TT = cand
            break
    # TODO(synk): further split Bblk when even TT=8 exceeds the budget.

    need = est(TT, Bblk)
    vmem_limit = int(min(int(cap * 0.75), max(2 * need, 16 << 20)))
    vmem_limit = max(vmem_limit, min(need + (2 << 20), int(cap * 0.9)))
    return TT, Bblk, vmem_limit


# ----------------------------------------------------------------------------
# Weight / gate preparation (padding is exact: padded hidden units stay zero)
# ----------------------------------------------------------------------------
def _pad_gates(g, h, hp):
    """(..., 4*h) -> (..., 4*hp), zero-padding each of the 4 gate segments."""
    if hp == h:
        return g
    lead = g.shape[:-1]
    g = g.reshape(*lead, 4, h)
    g = jnp.pad(g, [(0, 0)] * len(lead) + [(0, 0), (0, hp - h)])
    return g.reshape(*lead, 4 * hp)


def _prep_recurrent_weight(w_hh, h, hp):
    """(h, 4h) f32 -> (hp, 4hp) bf16 with per-gate zero padding."""
    w = _pad_gates(w_hh, h, hp)                  # (h, 4hp)
    w = jnp.pad(w, ((0, hp - h), (0, 0)))        # (hp, 4hp)
    return w.astype(jnp.bfloat16)


# ----------------------------------------------------------------------------
# SentenceEncoder forward (embedding gather, fused bf16 projections, layers)
# ----------------------------------------------------------------------------
def sentence_encoder_forward(token_ids, seq_lens, params):
    """token_ids: (B, T) int32, seq_lens: (B,) int32 -> (B, T, hidden_size)."""
    emb = jnp.take(params["embedding"], token_ids, axis=0)       # (B, T, E)
    B, T, _ = emb.shape
    H = params["lstm_layers"][0]["fwd"]["w_hh"].shape[0]         # per-direction
    Hp = _round_up(H, 128)       # lane-dense gates / outputs
    Bp = _round_up(B, 8)         # full sublanes

    TT, Bblk, vmem_limit = _choose_blocks(T, Bp, Hp)
    Tp = _round_up(T, TT)
    nBb = Bp // Bblk

    lens = jnp.pad(seq_lens.astype(jnp.int32), (0, Bp - B))[:, None]   # (Bp, 1)
    maxlen = jnp.max(lens.reshape(nBb, Bblk), axis=1).astype(jnp.int32)  # (nBb,)

    # Layer-0 input: embeddings, time-major, bf16 for the MXU input GEMM.
    x0 = jnp.transpose(emb, (1, 0, 2)).astype(jnp.bfloat16)      # (T, B, E)
    x0 = jnp.pad(x0, ((0, Tp - T), (0, Bp - B), (0, 0)))         # (Tp, Bp, E)

    y_f = y_b = None
    for li, layer in enumerate(params["lstm_layers"]):
        fwd, bwd = layer["fwd"], layer["bwd"]
        b_all = jnp.concatenate([fwd["b"], bwd["b"]], axis=-1)   # (1, 8H) f32
        w_all = jnp.concatenate([fwd["w_ih"], bwd["w_ih"]], axis=-1)  # (Din, 8H)

        if li == 0:
            # One fused bf16 GEMM for both directions, f32 accumulation.
            gx_all = jnp.einsum("tbd,dg->tbg", x0, w_all.astype(jnp.bfloat16),
                                preferred_element_type=jnp.float32) + b_all
        else:
            # Fold the previous layer's padded bf16 outputs directly into the
            # input GEMM: concat([y_f[:,:,:H], y_b[:,:,:H]]) @ W_ih
            #            == y_f @ W_ih[:H] + y_b @ W_ih[H:]
            # (padded hidden columns of y are exactly zero; weight rows padded
            #  with zeros keep it exact).  No slice+concat HBM round trip.
            wf = jnp.pad(w_all[:H], ((0, Hp - H), (0, 0))).astype(jnp.bfloat16)
            wb = jnp.pad(w_all[H:], ((0, Hp - H), (0, 0))).astype(jnp.bfloat16)
            gx_all = (jnp.einsum("tbd,dg->tbg", y_f, wf,
                                 preferred_element_type=jnp.float32)
                      + jnp.einsum("tbd,dg->tbg", y_b, wb,
                                   preferred_element_type=jnp.float32)
                      + b_all)

        gx_f = _pad_gates(gx_all[..., :4 * H], H, Hp).astype(jnp.bfloat16)
        gx_b = _pad_gates(gx_all[..., 4 * H:], H, Hp).astype(jnp.bfloat16)
        whh_f = _prep_recurrent_weight(fwd["w_hh"], H, Hp)
        whh_b = _prep_recurrent_weight(bwd["w_hh"], H, Hp)

        y_f, y_b = _bilstm_layer_pallas(maxlen, lens, gx_f, gx_b, whh_f, whh_b,
                                        time_block=TT, bblk=Bblk,
                                        vmem_limit=vmem_limit)

    # Final (and only) concat of the two directions' real hidden columns.
    out = jnp.concatenate([y_f[:, :, :H], y_b[:, :, :H]], axis=-1)
    out = out[:T, :B, :].astype(jnp.float32)                     # (T, B, 2H)
    return jnp.transpose(out, (1, 0, 2))                         # (B, T, 2H)


# ----------------------------------------------------------------------------
# Pure-JAX f32 reference (lax.scan) for correctness checking
# ----------------------------------------------------------------------------
def _lstm_direction_ref(x_tbd, mask_tb1, w_ih, w_hh, b):
    B = x_tbd.shape[1]
    H = w_hh.shape[0]

    def step(carry, inp):
        h, c = carry
        x_t, m_t = inp
        gates = x_t @ w_ih + h @ w_hh + b
        i_g, f_g, g_g, o_g = jnp.split(gates, 4, axis=-1)
        i_g, f_g, o_g = jax.nn.sigmoid(i_g), jax.nn.sigmoid(f_g), jax.nn.sigmoid(o_g)
        g_g = jnp.tanh(g_g)
        c_new = f_g * c + i_g * g_g
        h_new = o_g * jnp.tanh(c_new)
        valid = m_t > 0.5
        c = jnp.where(valid, c_new, c)
        h = jnp.where(valid, h_new, h)
        y = jnp.where(valid, h_new, 0.0)
        return (h, c), y

    init = (jnp.zeros((B, H), jnp.float32), jnp.zeros((B, H), jnp.float32))
    _, ys = lax.scan(step, init, (x_tbd, mask_tb1))
    return ys


def sentence_encoder_ref(token_ids, seq_lens, params):
    emb = jnp.take(params["embedding"], token_ids, axis=0)
    x = jnp.transpose(emb, (1, 0, 2)).astype(jnp.float32)
    T = x.shape[0]
    mask = (jnp.arange(T)[:, None] < seq_lens[None, :]).astype(jnp.float32)[:, :, None]
    for layer in params["lstm_layers"]:
        fwd, bwd = layer["fwd"], layer["bwd"]
        y_f = _lstm_direction_ref(x, mask, fwd["w_ih"], fwd["w_hh"], fwd["b"])
        y_b = _lstm_direction_ref(x[::-1], mask[::-1],
                                  bwd["w_ih"], bwd["w_hh"], bwd["b"])[::-1]
        x = jnp.concatenate([y_f, y_b], axis=-1)
    return jnp.transpose(x, (1, 0, 2))


# ----------------------------------------------------------------------------
# Deterministic parameter initialization (matches module __init__ shapes)
# ----------------------------------------------------------------------------
def _xavier_normal(key, out_dim, in_dim):
    std = math.sqrt(2.0 / (in_dim + out_dim))
    # PyTorch weight shape is (out, in); we store the transpose for x @ W^T.
    w = std * jax.random.normal(key, (out_dim, in_dim), dtype=jnp.float32)
    return w.T  # (in, out)


def init_params(key, vocab_size, embed_size, hidden_size, num_layers):
    assert hidden_size % 2 == 0
    H = hidden_size // 2  # per-direction hidden size (bidirectional)
    keys = jax.random.split(key, 1 + num_layers * 4)
    embedding = 0.1 * jax.random.normal(keys[0], (vocab_size, embed_size), jnp.float32)

    layers = []
    k = 1
    for layer_idx in range(num_layers):
        din = embed_size if layer_idx == 0 else hidden_size
        layer = {}
        for dname in ("fwd", "bwd"):
            w_ih = _xavier_normal(keys[k], 4 * H, din); k += 1
            w_hh = _xavier_normal(keys[k], 4 * H, H); k += 1
            b = jnp.zeros((1, 4 * H), jnp.float32)  # biases init to 0.0
            layer[dname] = {"w_ih": w_ih, "w_hh": w_hh, "b": b}
        layers.append(layer)
    return {"embedding": embedding, "lstm_layers": layers}


if __name__ == "__main__":
    # Config (RNNConfig analogue): small shapes.
    vocab_size = 50
    word_embedding_size = 32
    hidden_size = 32          # per-direction = 16
    num_layers = 2
    B, T = 2, 8

    key = jax.random.PRNGKey(0)
    k_param, k_tok = jax.random.split(key)
    params = init_params(k_param, vocab_size, word_embedding_size,
                         hidden_size, num_layers)

    token_ids = jax.random.randint(k_tok, (B, T), 0, vocab_size, dtype=jnp.int32)
    seq_lens = jnp.array([T, 5], dtype=jnp.int32)  # padded (ragged) batch

    out = jax.jit(sentence_encoder_forward)(token_ids, seq_lens, params)
    out = jax.block_until_ready(out)

    ref = jax.block_until_ready(sentence_encoder_ref(token_ids, seq_lens, params))
    assert out.shape == (B, T, hidden_size), out.shape
    # bf16 MXU inputs / bf16 inter-layer activations with f32 accumulation:
    # loosen tolerance vs the f32 reference.
    max_err = float(jnp.max(jnp.abs(out - ref)))
    assert jnp.allclose(out, ref, atol=2e-2, rtol=2e-2), f"mismatch vs reference: {max_err}"

    print("KERNEL_OK")
</pallas_src>

<mosaic_0001>
module attributes {stable_mosaic.version = 11 : i64} {
  func.func @_bilstm_kernel(%arg0: i32, %arg1: i32, %arg2: memref<1xi32, #tpu.memory_space<smem>>, %arg3: memref<8x1xi32, #tpu.memory_space<vmem>>, %arg4: memref<8x8x512xbf16, #tpu.memory_space<vmem>>, %arg5: memref<8x8x512xbf16, #tpu.memory_space<vmem>>, %arg6: memref<128x512xbf16, #tpu.memory_space<vmem>>, %arg7: memref<128x512xbf16, #tpu.memory_space<vmem>>, %arg8: memref<8x8x128xbf16, #tpu.memory_space<vmem>>, %arg9: memref<8x8x128xbf16, #tpu.memory_space<vmem>>, %arg10: memref<8x128xf32, #tpu.memory_space<vmem>>, %arg11: memref<8x128xf32, #tpu.memory_space<vmem>>, %arg12: memref<8x128xf32, #tpu.memory_space<vmem>>, %arg13: memref<8x128xf32, #tpu.memory_space<vmem>>) attributes {dimension_semantics = [#tpu.dimension_semantics<parallel>, #tpu.dimension_semantics<arbitrary>], iteration_bounds = array<i64: 1, 1>, scalar_prefetch = 1 : i64, scratch_operands = 4 : i64, tpu.core_type = #tpu.core_type<tc>, window_params = [{transform_indices = @transform_0, window_bounds = array<i64: 8, 1>}, {transform_indices = @transform_1, window_bounds = array<i64: 8, 8, 512>}, {transform_indices = @transform_2, window_bounds = array<i64: 8, 8, 512>}, {pipeline_mode = #tpu.pipeline_mode<synchronous>, transform_indices = @transform_3, window_bounds = array<i64: 128, 512>}, {pipeline_mode = #tpu.pipeline_mode<synchronous>, transform_indices = @transform_4, window_bounds = array<i64: 128, 512>}, {transform_indices = @transform_5, window_bounds = array<i64: 8, 8, 128>}, {transform_indices = @transform_6, window_bounds = array<i64: 8, 8, 128>}]} {
    %c8_i32 = arith.constant 8 : i32
    %0 = arith.muli %arg1, %c8_i32 : i32
    %1 = arith.index_cast %arg0 : i32 to index
    %2 = memref.load %arg2[%1] : memref<1xi32, #tpu.memory_space<smem>>
    %c0_i32 = arith.constant 0 : i32
    %3 = arith.cmpi eq, %arg1, %c0_i32 : i32
    %4 = arith.extui %3 : i1 to i32
    %c0_i32_0 = arith.constant 0 : i32
    %5 = arith.cmpi ne, %4, %c0_i32_0 : i32
    scf.if %5 {
      %cst = arith.constant 0.000000e+00 : f32
      %20 = vector.broadcast %cst : f32 to vector<8x128xf32>
      %c0_8 = arith.constant 0 : index
      %c0_9 = arith.constant 0 : index
      %21 = vector.load %arg10[%c0_8, %c0_9] : memref<8x128xf32, #tpu.memory_space<vmem>>, vector<8x128xf32>
      tpu.vector_store %arg10[%c0_8, %c0_9], %20 {strides = array<i32>} : memref<8x128xf32, #tpu.memory_space<vmem>>, vector<8x128xf32>,
      %cst_10 = arith.constant 0.000000e+00 : f32
      %22 = vector.broadcast %cst_10 : f32 to vector<8x128xf32>
      %c0_11 = arith.constant 0 : index
      %c0_12 = arith.constant 0 : index
      %23 = vector.load %arg11[%c0_11, %c0_12] : memref<8x128xf32, #tpu.memory_space<vmem>>, vector<8x128xf32>
      tpu.vector_store %arg11[%c0_11, %c0_12], %22 {strides = array<i32>} : memref<8x128xf32, #tpu.memory_space<vmem>>, vector<8x128xf32>,
      %cst_13 = arith.constant 0.000000e+00 : f32
      %24 = vector.broadcast %cst_13 : f32 to vector<8x128xf32>
      %c0_14 = arith.constant 0 : index
      %c0_15 = arith.constant 0 : index
      %25 = vector.load %arg12[%c0_14, %c0_15] : memref<8x128xf32, #tpu.memory_space<vmem>>, vector<8x128xf32>
      tpu.vector_store %arg12[%c0_14, %c0_15], %24 {strides = array<i32>} : memref<8x128xf32, #tpu.memory_space<vmem>>, vector<8x128xf32>,
      %cst_16 = arith.constant 0.000000e+00 : f32
      %26 = vector.broadcast %cst_16 : f32 to vector<8x128xf32>
      %c0_17 = arith.constant 0 : index
      %c0_18 = arith.constant 0 : index
      %27 = vector.load %arg13[%c0_17, %c0_18] : memref<8x128xf32, #tpu.memory_space<vmem>>, vector<8x128xf32>
      tpu.vector_store %arg13[%c0_17, %c0_18], %26 {strides = array<i32>} : memref<8x128xf32, #tpu.memory_space<vmem>>, vector<8x128xf32>,
    } else {
    }
    %c0 = arith.constant 0 : index
    %c0_1 = arith.constant 0 : index
    %6 = vector.load %arg3[%c0, %c0_1] : memref<8x1xi32, #tpu.memory_space<vmem>>, vector<8x1xi32>
    %7 = arith.cmpi slt, %0, %2 : i32
    %8 = arith.extui %7 : i1 to i32
    %c0_i32_2 = arith.constant 0 : i32
    %9 = arith.cmpi ne, %8, %c0_i32_2 : i32
    scf.if %9 {
      %c0_8 = arith.constant 0 : index
      %c0_9 = arith.constant 0 : index
      %20 = vector.load %arg10[%c0_8, %c0_9] : memref<8x128xf32, #tpu.memory_space<vmem>>, vector<8x128xf32>
      %c0_10 = arith.constant 0 : index
      %c0_11 = arith.constant 0 : index
      %21 = vector.load %arg11[%c0_10, %c0_11] : memref<8x128xf32, #tpu.memory_space<vmem>>, vector<8x128xf32>
      %c0_i32_12 = arith.constant 0 : i32
      %22 = arith.addi %0, %c0_i32_12 : i32
      %23 = vector.broadcast %22 : i32 to vector<8x1xi32>
      %24 = arith.cmpi slt, %23, %6 : vector<8x1xi32>
      %c0_13 = arith.constant 0 : index
      %c0_14 = arith.constant 0 : index
      %c0_15 = arith.constant 0 : index
      %25 = vector.load %arg4[%c0_13, %c0_14, %c0_15] : memref<8x8x512xbf16, #tpu.memory_space<vmem>>, vector<1x8x512xbf16>
      %26 = vector.shape_cast %25 : vector<1x8x512xbf16> to vector<8x512xbf16>
      %27 = arith.extf %26 : vector<8x512xbf16> to vector<8x512xf32>
      %28 = arith.truncf %20 : vector<8x128xf32> to vector<8x128xbf16>
      %c0_16 = arith.constant 0 : index
      %c0_17 = arith.constant 0 : index
      %29 = vector.load %arg6[%c0_16, %c0_17] : memref<128x512xbf16, #tpu.memory_space<vmem>>, vector<128x512xbf16>
      %cst = arith.constant dense<0.000000e+00> : vector<8x512xf32>
      %30 = tpu.matmul %28, %29, %cst {dimension_numbers = #tpu.dot_dimension_numbers<[1], [0], [0], [1], [0, 0, 1, 1], [], []>} : vector<8x128xbf16>, vector<128x512xbf16>, vector<8x512xf32> -> vector<8x512xf32>
      %31 = arith.addf %27, %30 : vector<8x512xf32>
      %32 = vector.extract_strided_slice %31 {offsets = [0, 0], sizes = [8, 128], strides = [1, 1]} : vector<8x512xf32> to vector<8x128xf32>
      %33 = arith.negf %32 : vector<8x128xf32>
      %34 = math.exp %33 : vector<8x128xf32>
      %cst_18 = arith.constant 1.000000e+00 : f32
      %35 = vector.broadcast %cst_18 : f32 to vector<8x128xf32>
      %36 = arith.addf %35, %34 : vector<8x128xf32>
      %37 = arith.divf %35, %36 : vector<8x128xf32>
      %38 = vector.extract_strided_slice %31 {offsets = [0, 128], sizes = [8, 128], strides = [1, 1]} : vector<8x512xf32> to vector<8x128xf32>
      %39 = arith.negf %38 : vector<8x128xf32>
      %40 = math.exp %39 : vector<8x128xf32>
      %cst_19 = arith.constant 1.000000e+00 : f32
      %41 = vector.broadcast %cst_19 : f32 to vector<8x128xf32>
      %42 = arith.addf %41, %40 : vector<8x128xf32>
      %43 = arith.divf %41, %42 : vector<8x128xf32>
      %44 = vector.extract_strided_slice %31 {offsets = [0, 256], sizes = [8, 128], strides = [1, 1]} : vector<8x512xf32> to vector<8x128xf32>
      %45 = math.tanh %44 : vector<8x128xf32>
      %46 = vector.extract_strided_slice %31 {offsets = [0, 384], sizes = [8, 128], strides = [1, 1]} : vector<8x512xf32> to vector<8x128xf32>
      %47 = arith.negf %46 : vector<8x128xf32>
      %48 = math.exp %47 : vector<8x128xf32>
      %cst_20 = arith.constant 1.000000e+00 : f32
      %49 = vector.broadcast %cst_20 : f32 to vector<8x128xf32>
      %50 = arith.addf %49, %48 : vector<8x128xf32>
      %51 = arith.divf %49, %50 : vector<8x128xf32>
      %52 = arith.mulf %43, %21 : vector<8x128xf32>
      %53 = arith.mulf %37, %45 : vector<8x128xf32>
      %54 = arith.addf %52, %53 : vector<8x128xf32>
      %55 = math.tanh %54 : vector<8x128xf32>
      %56 = arith.mulf %51, %55 : vector<8x128xf32>
      %57 = vector.shape_cast %24 : vector<8x1xi1> to vector<8x1xi1>
      %58 = vector.broadcast %57 : vector<8x1xi1> to vector<8x128xi1>
      %59 = arith.select %58, %54, %21 : vector<8x128xi1>, vector<8x128xf32>
      %60 = vector.shape_cast %24 : vector<8x1xi1> to vector<8x1xi1>
      %61 = vector.broadcast %60 : vector<8x1xi1> to vector<8x128xi1>
      %62 = arith.select %61, %56, %20 : vector<8x128xi1>, vector<8x128xf32>
      %cst_21 = arith.constant 0.000000e+00 : f32
      %63 = vector.broadcast %cst_21 : f32 to vector<8x128xf32>
      %64 = vector.shape_cast %24 : vector<8x1xi1> to vector<8x1xi1>
      %65 = vector.broadcast %64 : vector<8x1xi1> to vector<8x128xi1>
      %66 = arith.select %65, %56, %63 : vector<8x128xi1>, vector<8x128xf32>
      %67 = arith.truncf %66 : vector<8x128xf32> to vector<8x128xbf16>
      %c0_22 = arith.constant 0 : index
      %c0_23 = arith.constant 0 : index
      %c0_24 = arith.constant 0 : index
      %68 = vector.load %arg8[%c0_22, %c0_23, %c0_24] : memref<8x8x128xbf16, #tpu.memory_space<vmem>>, vector<1x8x128xbf16>
      %69 = vector.shape_cast %68 : vector<1x8x128xbf16> to vector<8x128xbf16>
      %70 = vector.shape_cast %67 : vector<8x128xbf16> to vector<1x8x128xbf16>
      tpu.vector_store %arg8[%c0_22, %c0_23, %c0_24], %70 {strides = array<i32>} : memref<8x8x128xbf16, #tpu.memory_space<vmem>>, vector<1x8x128xbf16>,
      %c1_i32 = arith.constant 1 : i32
      %71 = arith.addi %0, %c1_i32 : i32
      %72 = vector.broadcast %71 : i32 to vector<8x1xi32>
      %73 = arith.cmpi slt, %72, %6 : vector<8x1xi32>
      %c1 = arith.constant 1 : index
      %c0_25 = arith.constant 0 : index
      %c0_26 = arith.constant 0 : index
      %74 = vector.load %arg4[%c1, %c0_25, %c0_26] : memref<8x8x512xbf16, #tpu.memory_space<vmem>>, vector<1x8x512xbf16>
      %75 = vector.shape_cast %74 : vector<1x8x512xbf16> to vector<8x512xbf16>
      %76 = arith.extf %75 : vector<8x512xbf16> to vector<8x512xf32>
      %77 = arith.truncf %62 : vector<8x128xf32> to vector<8x128xbf16>
      %c0_27 = arith.constant 0 : index
      %c0_28 = arith.constant 0 : index
      %78 = vector.load %arg6[%c0_27, %c0_28] : memref<128x512xbf16, #tpu.memory_space<vmem>>, vector<128x512xbf16>
      %cst_29 = arith.constant dense<0.000000e+00> : vector<8x512xf32>
      %79 = tpu.matmul %77, %78, %cst_29 {dimension_numbers = #tpu.dot_dimension_numbers<[1], [0], [0], [1], [0, 0, 1, 1], [], []>} : vector<8x128xbf16>, vector<128x512xbf16>, vector<8x512xf32> -> vector<8x512xf32>
      %80 = arith.addf %76, %79 : vector<8x512xf32>
      %81 = vector.extract_strided_slice %80 {offsets = [0, 0], sizes = [8, 128], strides = [1, 1]} : vector<8x512xf32> to vector<8x128xf32>
      %82 = arith.negf %81 : vector<8x128xf32>
      %83 = math.exp %82 : vector<8x128xf32>
      %cst_30 = arith.constant 1.000000e+00 : f32
      %84 = vector.broadcast %cst_30 : f32 to vector<8x128xf32>
      %85 = arith.addf %84, %83 : vector<8x128xf32>
      %86 = arith.divf %84, %85 : vector<8x128xf32>
      %87 = vector.extract_strided_slice %80 {offsets = [0, 128], sizes = [8, 128], strides = [1, 1]} : vector<8x512xf32> to vector<8x128xf32>
      %88 = arith.negf %87 : vector<8x128xf32>
      %89 = math.exp %88 : vector<8x128xf32>
      %cst_31 = arith.constant 1.000000e+00 : f32
      %90 = vector.broadcast %cst_31 : f32 to vector<8x128xf32>
      %91 = arith.addf %90, %89 : vector<8x128xf32>
      %92 = arith.divf %90, %91 : vector<8x128xf32>
      %93 = vector.extract_strided_slice %80 {offsets = [0, 256], sizes = [8, 128], strides = [1, 1]} : vector<8x512xf32> to vector<8x128xf32>
      %94 = math.tanh %93 : vector<8x128xf32>
      %95 = vector.extract_strided_slice %80 {offsets = [0, 384], sizes = [8, 128], strides = [1, 1]} : vector<8x512xf32> to vector<8x128xf32>
      %96 = arith.negf %95 : vector<8x128xf32>
      %97 = math.exp %96 : vector<8x128xf32>
      %cst_32 = arith.constant 1.000000e+00 : f32
      %98 = vector.broadcast %cst_32 : f32 to vector<8x128xf32>
      %99 = arith.addf %98, %97 : vector<8x128xf32>
      %100 = arith.divf %98, %99 : vector<8x128xf32>
      %101 = arith.mulf %92, %59 : vector<8x128xf32>
      %102 = arith.mulf %86, %94 : vector<8x128xf32>
      %103 = arith.addf %101, %102 : vector<8x128xf32>
      %104 = math.tanh %103 : vector<8x128xf32>
      %105 = arith.mulf %100, %104 : vector<8x128xf32>
      %106 = vector.shape_cast %73 : vector<8x1xi1> to vector<8x1xi1>
      %107 = vector.broadcast %106 : vector<8x1xi1> to vector<8x128xi1>
      %108 = arith.select %107, %103, %59 : vector<8x128xi1>, vector<8x128xf32>
      %109 = vector.shape_cast %73 : vector<8x1xi1> to vector<8x1xi1>
      %110 = vector.broadcast %109 : vector<8x1xi1> to vector<8x128xi1>
      %111 = arith.select %110, %105, %62 : vector<8x128xi1>, vector<8x128xf32>
      %cst_33 = arith.constant 0.000000e+00 : f32
      %112 = vector.broadcast %cst_33 : f32 to vector<8x128xf32>
      %113 = vector.shape_cast %73 : vector<8x1xi1> to vector<8x1xi1>
      %114 = vector.broadcast %113 : vector<8x1xi1> to vector<8x128xi1>
      %115 = arith.select %114, %105, %112 : vector<8x128xi1>, vector<8x128xf32>
      %116 = arith.truncf %115 : vector<8x128xf32> to vector<8x128xbf16>
      %c1_34 = arith.constant 1 : index
      %c0_35 = arith.constant 0 : index
      %c0_36 = arith.constant 0 : index
      %117 = vector.load %arg8[%c1_34, %c0_35, %c0_36] : memref<8x8x128xbf16, #tpu.memory_space<vmem>>, vector<1x8x128xbf16>
      %118 = vector.shape_cast %117 : vector<1x8x128xbf16> to vector<8x128xbf16>
      %119 = vector.shape_cast %116 : vector<8x128xbf16> to vector<1x8x128xbf16>
      tpu.vector_store %arg8[%c1_34, %c0_35, %c0_36], %119 {strides = array<i32>} : memref<8x8x128xbf16, #tpu.memory_space<vmem>>, vector<1x8x128xbf16>,
      %c2_i32 = arith.constant 2 : i32
      %120 = arith.addi %0, %c2_i32 : i32
      %121 = vector.broadcast %120 : i32 to vector<8x1xi32>
      %122 = arith.cmpi slt, %121, %6 : vector<8x1xi32>
      %c2 = arith.constant 2 : index
      %c0_37 = arith.constant 0 : index
      %c0_38 = arith.constant 0 : index
      %123 = vector.load %arg4[%c2, %c0_37, %c0_38] : memref<8x8x512xbf16, #tpu.memory_space<vmem>>, vector<1x8x512xbf16>
      %124 = vector.shape_cast %123 : vector<1x8x512xbf16> to vector<8x512xbf16>
      %125 = arith.extf %124 : vector<8x512xbf16> to vector<8x512xf32>
      %126 = arith.truncf %111 : vector<8x128xf32> to vector<8x128xbf16>
      %c0_39 = arith.constant 0 : index
      %c0_40 = arith.constant 0 : index
      %127 = vector.load %arg6[%c0_39, %c0_40] : memref<128x512xbf16, #tpu.memory_space<vmem>>, vector<128x512xbf16>
      %cst_41 = arith.constant dense<0.000000e+00> : vector<8x512xf32>
      %128 = tpu.matmul %126, %127, %cst_41 {dimension_numbers = #tpu.dot_dimension_numbers<[1], [0], [0], [1], [0, 0, 1, 1], [], []>} : vector<8x128xbf16>, vector<128x512xbf16>, vector<8x512xf32> -> vector<8x512xf32>
      %129 = arith.addf %125, %128 : vector<8x512xf32>
      %130 = vector.extract_strided_slice %129 {offsets = [0, 0], sizes = [8, 128], strides = [1, 1]} : vector<8x512xf32> to vector<8x128xf32>
      %131 = arith.negf %130 : vector<8x128xf32>
      %132 = math.exp %131 : vector<8x128xf32>
      %cst_42 = arith.constant 1.000000e+00 : f32
      %133 = vector.broadcast %cst_42 : f32 to vector<8x128xf32>
      %134 = arith.addf %133, %132 : vector<8x128xf32>
      %135 = arith.divf %133, %134 : vector<8x128xf32>
      %136 = vector.extract_strided_slice %129 {offsets = [0, 128], sizes = [8, 128], strides = [1, 1]} : vector<8x512xf32> to vector<8x128xf32>
      %137 = arith.negf %136 : vector<8x128xf32>
      %138 = math.exp %137 : vector<8x128xf32>
      %cst_43 = arith.constant 1.000000e+00 : f32
      %139 = vector.broadcast %cst_43 : f32 to vector<8x128xf32>
      %140 = arith.addf %139, %138 : vector<8x128xf32>
      %141 = arith.divf %139, %140 : vector<8x128xf32>
      %142 = vector.extract_strided_slice %129 {offsets = [0, 256], sizes = [8, 128], strides = [1, 1]} : vector<8x512xf32> to vector<8x128xf32>
      %143 = math.tanh %142 : vector<8x128xf32>
      %144 = vector.extract_strided_slice %129 {offsets = [0, 384], sizes = [8, 128], strides = [1, 1]} : vector<8x512xf32> to vector<8x128xf32>
      %145 = arith.negf %144 : vector<8x128xf32>
      %146 = math.exp %145 : vector<8x128xf32>
      %cst_44 = arith.constant 1.000000e+00 : f32
      %147 = vector.broadcast %cst_44 : f32 to vector<8x128xf32>
      %148 = arith.addf %147, %146 : vector<8x128xf32>
      %149 = arith.divf %147, %148 : vector<8x128xf32>
      %150 = arith.mulf %141, %108 : vector<8x128xf32>
      %151 = arith.mulf %135, %143 : vector<8x128xf32>
      %152 = arith.addf %150, %151 : vector<8x128xf32>
      %153 = math.tanh %152 : vector<8x128xf32>
      %154 = arith.mulf %149, %153 : vector<8x128xf32>
      %155 = vector.shape_cast %122 : vector<8x1xi1> to vector<8x1xi1>
      %156 = vector.broadcast %155 : vector<8x1xi1> to vector<8x128xi1>
      %157 = arith.select %156, %152, %108 : vector<8x128xi1>, vector<8x128xf32>
      %158 = vector.shape_cast %122 : vector<8x1xi1> to vector<8x1xi1>
      %159 = vector.broadcast %158 : vector<8x1xi1> to vector<8x128xi1>
      %160 = arith.select %159, %154, %111 : vector<8x128xi1>, vector<8x128xf32>
      %cst_45 = arith.constant 0.000000e+00 : f32
      %161 = vector.broadcast %cst_45 : f32 to vector<8x128xf32>
      %162 = vector.shape_cast %122 : vector<8x1xi1> to vector<8x1xi1>
      %163 = vector.broadcast %162 : vector<8x1xi1> to vector<8x128xi1>
      %164 = arith.select %163, %154, %161 : vector<8x128xi1>, vector<8x128xf32>
      %165 = arith.truncf %164 : vector<8x128xf32> to vector<8x128xbf16>
      %c2_46 = arith.constant 2 : index
      %c0_47 = arith.constant 0 : index
      %c0_48 = arith.constant 0 : index
      %166 = vector.load %arg8[%c2_46, %c0_47, %c0_48] : memref<8x8x128xbf16, #tpu.memory_space<vmem>>, vector<1x8x128xbf16>
      %167 = vector.shape_cast %166 : vector<1x8x128xbf16> to vector<8x128xbf16>
      %168 = vector.shape_cast %165 : vector<8x128xbf16> to vector<1x8x128xbf16>
      tpu.vector_store %arg8[%c2_46, %c0_47, %c0_48], %168 {strides = array<i32>} : memref<8x8x128xbf16, #tpu.memory_space<vmem>>, vector<1x8x128xbf16>,
      %c3_i32 = arith.constant 3 : i32
      %169 = arith.addi %0, %c3_i32 : i32
      %170 = vector.broadcast %169 : i32 to vector<8x1xi32>
      %171 = arith.cmpi slt, %170, %6 : vector<8x1xi32>
      %c3 = arith.constant 3 : index
      %c0_49 = arith.constant 0 : index
      %c0_50 = arith.constant 0 : index
      %172 = vector.load %arg4[%c3, %c0_49, %c0_50] : memref<8x8x512xbf16, #tpu.memory_space<vmem>>, vector<1x8x512xbf16>
      %173 = vector.shape_cast %172 : vector<1x8x512xbf16> to vector<8x512xbf16>
      %174 = arith.extf %173 : vector<8x512xbf16> to vector<8x512xf32>
      %175 = arith.truncf %160 : vector<8x128xf32> to vector<8x128xbf16>
      %c0_51 = arith.constant 0 : index
      %c0_52 = arith.constant 0 : index
      %176 = vector.load %arg6[%c0_51, %c0_52] : memref<128x512xbf16, #tpu.memory_space<vmem>>, vector<128x512xbf16>
      %cst_53 = arith.constant dense<0.000000e+00> : vector<8x512xf32>
      %177 = tpu.matmul %175, %176, %cst_53 {dimension_numbers = #tpu.dot_dimension_numbers<[1], [0], [0], [1], [0, 0, 1, 1], [], []>} : vector<8x128xbf16>, vector<128x512xbf16>, vector<8x512xf32> -> vector<8x512xf32>
      %178 = arith.addf %174, %177 : vector<8x512xf32>
      %179 = vector.extract_strided_slice %178 {offsets = [0, 0], sizes = [8, 128], strides = [1, 1]} : vector<8x512xf32> to vector<8x128xf32>
      %180 = arith.negf %179 : vector<8x128xf32>
      %181 = math.exp %180 : vector<8x128xf32>
      %cst_54 = arith.constant 1.000000e+00 : f32
      %182 = vector.broadcast %cst_54 : f32 to vector<8x128xf32>
      %183 = arith.addf %182, %181 : vector<8x128xf32>
      %184 = arith.divf %182, %183 : vector<8x128xf32>
      %185 = vector.extract_strided_slice %178 {offsets = [0, 128], sizes = [8, 128], strides = [1, 1]} : vector<8x512xf32> to vector<8x128xf32>
      %186 = arith.negf %185 : vector<8x128xf32>
      %187 = math.exp %186 : vector<8x128xf32>
      %cst_55 = arith.constant 1.000000e+00 : f32
      %188 = vector.broadcast %cst_55 : f32 to vector<8x128xf32>
      %189 = arith.addf %188, %187 : vector<8x128xf32>
      %190 = arith.divf %188, %189 : vector<8x128xf32>
      %191 = vector.extract_strided_slice %178 {offsets = [0, 256], sizes = [8, 128], strides = [1, 1]} : vector<8x512xf32> to vector<8x128xf32>
      %192 = math.tanh %191 : vector<8x128xf32>
      %193 = vector.extract_strided_slice %178 {offsets = [0, 384], sizes = [8, 128], strides = [1, 1]} : vector<8x512xf32> to vector<8x128xf32>
      %194 = arith.negf %193 : vector<8x128xf32>
      %195 = math.exp %194 : vector<8x128xf32>
      %cst_56 = arith.constant 1.000000e+00 : f32
      %196 = vector.broadcast %cst_56 : f32 to vector<8x128xf32>
      %197 = arith.addf %196, %195 : vector<8x128xf32>
      %198 = arith.divf %196, %197 : vector<8x128xf32>
      %199 = arith.mulf %190, %157 : vector<8x128xf32>
      %200 = arith.mulf %184, %192 : vector<8x128xf32>
      %201 = arith.addf %199, %200 : vector<8x128xf32>
      %202 = math.tanh %201 : vector<8x128xf32>
      %203 = arith.mulf %198, %202 : vector<8x128xf32>
      %204 = vector.shape_cast %171 : vector<8x1xi1> to vector<8x1xi1>
      %205 = vector.broadcast %204 : vector<8x1xi1> to vector<8x128xi1>
      %206 = arith.select %205, %201, %157 : vector<8x128xi1>, vector<8x128xf32>
      %207 = vector.shape_cast %171 : vector<8x1xi1> to vector<8x1xi1>
      %208 = vector.broadcast %207 : vector<8x1xi1> to vector<8x128xi1>
      %209 = arith.select %208, %203, %160 : vector<8x128xi1>, vector<8x128xf32>
      %cst_57 = arith.constant 0.000000e+00 : f32
      %210 = vector.broadcast %cst_57 : f32 to vector<8x128xf32>
      %211 = vector.shape_cast %171 : vector<8x1xi1> to vector<8x1xi1>
      %212 = vector.broadcast %211 : vector<8x1xi1> to vector<8x128xi1>
      %213 = arith.select %212, %203, %210 : vector<8x128xi1>, vector<8x128xf32>
      %214 = arith.truncf %213 : vector<8x128xf32> to vector<8x128xbf16>
      %c3_58 = arith.constant 3 : index
      %c0_59 = arith.constant 0 : index
      %c0_60 = arith.constant 0 : index
      %215 = vector.load %arg8[%c3_58, %c0_59, %c0_60] : memref<8x8x128xbf16, #tpu.memory_space<vmem>>, vector<1x8x128xbf16>
      %216 = vector.shape_cast %215 : vector<1x8x128xbf16> to vector<8x128xbf16>
      %217 = vector.shape_cast %214 : vector<8x128xbf16> to vector<1x8x128xbf16>
      tpu.vector_store %arg8[%c3_58, %c0_59, %c0_60], %217 {strides = array<i32>} : memref<8x8x128xbf16, #tpu.memory_space<vmem>>, vector<1x8x128xbf16>,
      %c4_i32 = arith.constant 4 : i32
      %218 = arith.addi %0, %c4_i32 : i32
      %219 = vector.broadcast %218 : i32 to vector<8x1xi32>
      %220 = arith.cmpi slt, %219, %6 : vector<8x1xi32>
      %c4 = arith.constant 4 : index
      %c0_61 = arith.constant 0 : index
      %c0_62 = arith.constant 0 : index
      %221 = vector.load %arg4[%c4, %c0_61, %c0_62] : memref<8x8x512xbf16, #tpu.memory_space<vmem>>, vector<1x8x512xbf16>
      %222 = vector.shape_cast %221 : vector<1x8x512xbf16> to vector<8x512xbf16>
      %223 = arith.extf %222 : vector<8x512xbf16> to vector<8x512xf32>
      %224 = arith.truncf %209 : vector<8x128xf32> to vector<8x128xbf16>
      %c0_63 = arith.constant 0 : index
      %c0_64 = arith.constant 0 : index
      %225 = vector.load %arg6[%c0_63, %c0_64] : memref<128x512xbf16, #tpu.memory_space<vmem>>, vector<128x512xbf16>
      %cst_65 = arith.constant dense<0.000000e+00> : vector<8x512xf32>
      %226 = tpu.matmul %224, %225, %cst_65 {dimension_numbers = #tpu.dot_dimension_numbers<[1], [0], [0], [1], [0, 0, 1, 1], [], []>} : vector<8x128xbf16>, vector<128x512xbf16>, vector<8x512xf32> -> vector<8x512xf32>
      %227 = arith.addf %223, %226 : vector<8x512xf32>
      %228 = vector.extract_strided_slice %227 {offsets = [0, 0], sizes = [8, 128], strides = [1, 1]} : vector<8x512xf32> to vector<8x128xf32>
      %229 = arith.negf %228 : vector<8x128xf32>
      %230 = math.exp %229 : vector<8x128xf32>
      %cst_66 = arith.constant 1.000000e+00 : f32
      %231 = vector.broadcast %cst_66 : f32 to vector<8x128xf32>
      %232 = arith.addf %231, %230 : vector<8x128xf32>
      %233 = arith.divf %231, %232 : vector<8x128xf32>
      %234 = vector.extract_strided_slice %227 {offsets = [0, 128], sizes = [8, 128], strides = [1, 1]} : vector<8x512xf32> to vector<8x128xf32>
      %235 = arith.negf %234 : vector<8x128xf32>
      %236 = math.exp %235 : vector<8x128xf32>
      %cst_67 = arith.constant 1.000000e+00 : f32
      %237 = vector.broadcast %cst_67 : f32 to vector<8x128xf32>
      %238 = arith.addf %237, %236 : vector<8x128xf32>
      %239 = arith.divf %237, %238 : vector<8x128xf32>
      %240 = vector.extract_strided_slice %227 {offsets = [0, 256], sizes = [8, 128], strides = [1, 1]} : vector<8x512xf32> to vector<8x128xf32>
      %241 = math.tanh %240 : vector<8x128xf32>
      %242 = vector.extract_strided_slice %227 {offsets = [0, 384], sizes = [8, 128], strides = [1, 1]} : vector<8x512xf32> to vector<8x128xf32>
      %243 = arith.negf %242 : vector<8x128xf32>
      %244 = math.exp %243 : vector<8x128xf32>
      %cst_68 = arith.constant 1.000000e+00 : f32
      %245 = vector.broadcast %cst_68 : f32 to vector<8x128xf32>
      %246 = arith.addf %245, %244 : vector<8x128xf32>
      %247 = arith.divf %245, %246 : vector<8x128xf32>
      %248 = arith.mulf %239, %206 : vector<8x128xf32>
      %249 = arith.mulf %233, %241 : vector<8x128xf32>
      %250 = arith.addf %248, %249 : vector<8x128xf32>
      %251 = math.tanh %250 : vector<8x128xf32>
      %252 = arith.mulf %247, %251 : vector<8x128xf32>
      %253 = vector.shape_cast %220 : vector<8x1xi1> to vector<8x1xi1>
      %254 = vector.broadcast %253 : vector<8x1xi1> to vector<8x128xi1>
      %255 = arith.select %254, %250, %206 : vector<8x128xi1>, vector<8x128xf32>
      %256 = vector.shape_cast %220 : vector<8x1xi1> to vector<8x1xi1>
      %257 = vector.broadcast %256 : vector<8x1xi1> to vector<8x128xi1>
      %258 = arith.select %257, %252, %209 : vector<8x128xi1>, vector<8x128xf32>
      %cst_69 = arith.constant 0.000000e+00 : f32
      %259 = vector.broadcast %cst_69 : f32 to vector<8x128xf32>
      %260 = vector.shape_cast %220 : vector<8x1xi1> to vector<8x1xi1>
      %261 = vector.broadcast %260 : vector<8x1xi1> to vector<8x128xi1>
      %262 = arith.select %261, %252, %259 : vector<8x128xi1>, vector<8x128xf32>
      %263 = arith.truncf %262 : vector<8x128xf32> to vector<8x128xbf16>
      %c4_70 = arith.constant 4 : index
      %c0_71 = arith.constant 0 : index
      %c0_72 = arith.constant 0 : index
      %264 = vector.load %arg8[%c4_70, %c0_71, %c0_72] : memref<8x8x128xbf16, #tpu.memory_space<vmem>>, vector<1x8x128xbf16>
      %265 = vector.shape_cast %264 : vector<1x8x128xbf16> to vector<8x128xbf16>
      %266 = vector.shape_cast %263 : vector<8x128xbf16> to vector<1x8x128xbf16>
      tpu.vector_store %arg8[%c4_70, %c0_71, %c0_72], %266 {strides = array<i32>} : memref<8x8x128xbf16, #tpu.memory_space<vmem>>, vector<1x8x128xbf16>,
      %c5_i32 = arith.constant 5 : i32
      %267 = arith.addi %0, %c5_i32 : i32
      %268 = vector.broadcast %267 : i32 to vector<8x1xi32>
      %269 = arith.cmpi slt, %268, %6 : vector<8x1xi32>
      %c5 = arith.constant 5 : index
      %c0_73 = arith.constant 0 : index
      %c0_74 = arith.constant 0 : index
      %270 = vector.load %arg4[%c5, %c0_73, %c0_74] : memref<8x8x512xbf16, #tpu.memory_space<vmem>>, vector<1x8x512xbf16>
      %271 = vector.shape_cast %270 : vector<1x8x512xbf16> to vector<8x512xbf16>
      %272 = arith.extf %271 : vector<8x512xbf16> to vector<8x512xf32>
      %273 = arith.truncf %258 : vector<8x128xf32> to vector<8x128xbf16>
      %c0_75 = arith.constant 0 : index
      %c0_76 = arith.constant 0 : index
      %274 = vector.load %arg6[%c0_75, %c0_76] : memref<128x512xbf16, #tpu.memory_space<vmem>>, vector<128x512xbf16>
      %cst_77 = arith.constant dense<0.000000e+00> : vector<8x512xf32>
      %275 = tpu.matmul %273, %274, %cst_77 {dimension_numbers = #tpu.dot_dimension_numbers<[1], [0], [0], [1], [0, 0, 1, 1], [], []>} : vector<8x128xbf16>, vector<128x512xbf16>, vector<8x512xf32> -> vector<8x512xf32>
      %276 = arith.addf %272, %275 : vector<8x512xf32>
      %277 = vector.extract_strided_slice %276 {offsets = [0, 0], sizes = [8, 128], strides = [1, 1]} : vector<8x512xf32> to vector<8x128xf32>
      %278 = arith.negf %277 : vector<8x128xf32>
      %279 = math.exp %278 : vector<8x128xf32>
      %cst_78 = arith.constant 1.000000e+00 : f32
      %280 = vector.broadcast %cst_78 : f32 to vector<8x128xf32>
      %281 = arith.addf %280, %279 : vector<8x128xf32>
      %282 = arith.divf %280, %281 : vector<8x128xf32>
      %283 = vector.extract_strided_slice %276 {offsets = [0, 128], sizes = [8, 128], strides = [1, 1]} : vector<8x512xf32> to vector<8x128xf32>
      %284 = arith.negf %283 : vector<8x128xf32>
      %285 = math.exp %284 : vector<8x128xf32>
      %cst_79 = arith.constant 1.000000e+00 : f32
      %286 = vector.broadcast %cst_79 : f32 to vector<8x128xf32>
      %287 = arith.addf %286, %285 : vector<8x128xf32>
      %288 = arith.divf %286, %287 : vector<8x128xf32>
      %289 = vector.extract_strided_slice %276 {offsets = [0, 256], sizes = [8, 128], strides = [1, 1]} : vector<8x512xf32> to vector<8x128xf32>
      %290 = math.tanh %289 : vector<8x128xf32>
      %291 = vector.extract_strided_slice %276 {offsets = [0, 384], sizes = [8, 128], strides = [1, 1]} : vector<8x512xf32> to vector<8x128xf32>
      %292 = arith.negf %291 : vector<8x128xf32>
      %293 = math.exp %292 : vector<8x128xf32>
      %cst_80 = arith.constant 1.000000e+00 : f32
      %294 = vector.broadcast %cst_80 : f32 to vector<8x128xf32>
      %295 = arith.addf %294, %293 : vector<8x128xf32>
      %296 = arith.divf %294, %295 : vector<8x128xf32>
      %297 = arith.mulf %288, %255 : vector<8x128xf32>
      %298 = arith.mulf %282, %290 : vector<8x128xf32>
      %299 = arith.addf %297, %298 : vector<8x128xf32>
      %300 = math.tanh %299 : vector<8x128xf32>
      %301 = arith.mulf %296, %300 : vector<8x128xf32>
      %302 = vector.shape_cast %269 : vector<8x1xi1> to vector<8x1xi1>
      %303 = vector.broadcast %302 : vector<8x1xi1> to vector<8x128xi1>
      %304 = arith.select %303, %299, %255 : vector<8x128xi1>, vector<8x128xf32>
      %305 = vector.shape_cast %269 : vector<8x1xi1> to vector<8x1xi1>
      %306 = vector.broadcast %305 : vector<8x1xi1> to vector<8x128xi1>
      %307 = arith.select %306, %301, %258 : vector<8x128xi1>, vector<8x128xf32>
      %cst_81 = arith.constant 0.000000e+00 : f32
      %308 = vector.broadcast %cst_81 : f32 to vector<8x128xf32>
      %309 = vector.shape_cast %269 : vector<8x1xi1> to vector<8x1xi1>
      %310 = vector.broadcast %309 : vector<8x1xi1> to vector<8x128xi1>
      %311 = arith.select %310, %301, %308 : vector<8x128xi1>, vector<8x128xf32>
      %312 = arith.truncf %311 : vector<8x128xf32> to vector<8x128xbf16>
      %c5_82 = arith.constant 5 : index
      %c0_83 = arith.constant 0 : index
      %c0_84 = arith.constant 0 : index
      %313 = vector.load %arg8[%c5_82, %c0_83, %c0_84] : memref<8x8x128xbf16, #tpu.memory_space<vmem>>, vector<1x8x128xbf16>
      %314 = vector.shape_cast %313 : vector<1x8x128xbf16> to vector<8x128xbf16>
      %315 = vector.shape_cast %312 : vector<8x128xbf16> to vector<1x8x128xbf16>
      tpu.vector_store %arg8[%c5_82, %c0_83, %c0_84], %315 {strides = array<i32>} : memref<8x8x128xbf16, #tpu.memory_space<vmem>>, vector<1x8x128xbf16>,
      %c6_i32 = arith.constant 6 : i32
      %316 = arith.addi %0, %c6_i32 : i32
      %317 = vector.broadcast %316 : i32 to vector<8x1xi32>
      %318 = arith.cmpi slt, %317, %6 : vector<8x1xi32>
      %c6 = arith.constant 6 : index
      %c0_85 = arith.constant 0 : index
      %c0_86 = arith.constant 0 : index
      %319 = vector.load %arg4[%c6, %c0_85, %c0_86] : memref<8x8x512xbf16, #tpu.memory_space<vmem>>, vector<1x8x512xbf16>
      %320 = vector.shape_cast %319 : vector<1x8x512xbf16> to vector<8x512xbf16>
      %321 = arith.extf %320 : vector<8x512xbf16> to vector<8x512xf32>
      %322 = arith.truncf %307 : vector<8x128xf32> to vector<8x128xbf16>
      %c0_87 = arith.constant 0 : index
      %c0_88 = arith.constant 0 : index
      %323 = vector.load %arg6[%c0_87, %c0_88] : memref<128x512xbf16, #tpu.memory_space<vmem>>, vector<128x512xbf16>
      %cst_89 = arith.constant dense<0.000000e+00> : vector<8x512xf32>
      %324 = tpu.matmul %322, %323, %cst_89 {dimension_numbers = #tpu.dot_dimension_numbers<[1], [0], [0], [1], [0, 0, 1, 1], [], []>} : vector<8x128xbf16>, vector<128x512xbf16>, vector<8x512xf32> -> vector<8x512xf32>
      %325 = arith.addf %321, %324 : vector<8x512xf32>
      %326 = vector.extract_strided_slice %325 {offsets = [0, 0], sizes = [8, 128], strides = [1, 1]} : vector<8x512xf32> to vector<8x128xf32>
      %327 = arith.negf %326 : vector<8x128xf32>
      %328 = math.exp %327 : vector<8x128xf32>
      %cst_90 = arith.constant 1.000000e+00 : f32
      %329 = vector.broadcast %cst_90 : f32 to vector<8x128xf32>
      %330 = arith.addf %329, %328 : vector<8x128xf32>
      %331 = arith.divf %329, %330 : vector<8x128xf32>
      %332 = vector.extract_strided_slice %325 {offsets = [0, 128], sizes = [8, 128], strides = [1, 1]} : vector<8x512xf32> to vector<8x128xf32>
      %333 = arith.negf %332 : vector<8x128xf32>
      %334 = math.exp %333 : vector<8x128xf32>
      %cst_91 = arith.constant 1.000000e+00 : f32
      %335 = vector.broadcast %cst_91 : f32 to vector<8x128xf32>
      %336 = arith.addf %335, %334 : vector<8x128xf32>
      %337 = arith.divf %335, %336 : vector<8x128xf32>
      %338 = vector.extract_strided_slice %325 {offsets = [0, 256], sizes = [8, 128], strides = [1, 1]} : vector<8x512xf32> to vector<8x128xf32>
      %339 = math.tanh %338 : vector<8x128xf32>
      %340 = vector.extract_strided_slice %325 {offsets = [0, 384], sizes = [8, 128], strides = [1, 1]} : vector<8x512xf32> to vector<8x128xf32>
      %341 = arith.negf %340 : vector<8x128xf32>
      %342 = math.exp %341 : vector<8x128xf32>
      %cst_92 = arith.constant 1.000000e+00 : f32
      %343 = vector.broadcast %cst_92 : f32 to vector<8x128xf32>
      %344 = arith.addf %343, %342 : vector<8x128xf32>
      %345 = arith.divf %343, %344 : vector<8x128xf32>
      %346 = arith.mulf %337, %304 : vector<8x128xf32>
      %347 = arith.mulf %331, %339 : vector<8x128xf32>
      %348 = arith.addf %346, %347 : vector<8x128xf32>
      %349 = math.tanh %348 : vector<8x128xf32>
      %350 = arith.mulf %345, %349 : vector<8x128xf32>
      %351 = vector.shape_cast %318 : vector<8x1xi1> to vector<8x1xi1>
      %352 = vector.broadcast %351 : vector<8x1xi1> to vector<8x128xi1>
      %353 = arith.select %352, %348, %304 : vector<8x128xi1>, vector<8x128xf32>
      %354 = vector.shape_cast %318 : vector<8x1xi1> to vector<8x1xi1>
      %355 = vector.broadcast %354 : vector<8x1xi1> to vector<8x128xi1>
      %356 = arith.select %355, %350, %307 : vector<8x128xi1>, vector<8x128xf32>
      %cst_93 = arith.constant 0.000000e+00 : f32
      %357 = vector.broadcast %cst_93 : f32 to vector<8x128xf32>
      %358 = vector.shape_cast %318 : vector<8x1xi1> to vector<8x1xi1>
      %359 = vector.broadcast %358 : vector<8x1xi1> to vector<8x128xi1>
      %360 = arith.select %359, %350, %357 : vector<8x128xi1>, vector<8x128xf32>
      %361 = arith.truncf %360 : vector<8x128xf32> to vector<8x128xbf16>
      %c6_94 = arith.constant 6 : index
      %c0_95 = arith.constant 0 : index
      %c0_96 = arith.constant 0 : index
      %362 = vector.load %arg8[%c6_94, %c0_95, %c0_96] : memref<8x8x128xbf16, #tpu.memory_space<vmem>>, vector<1x8x128xbf16>
      %363 = vector.shape_cast %362 : vector<1x8x128xbf16> to vector<8x128xbf16>
      %364 = vector.shape_cast %361 : vector<8x128xbf16> to vector<1x8x128xbf16>
      tpu.vector_store %arg8[%c6_94, %c0_95, %c0_96], %364 {strides = array<i32>} : memref<8x8x128xbf16, #tpu.memory_space<vmem>>, vector<1x8x128xbf16>,
      %c7_i32 = arith.constant 7 : i32
      %365 = arith.addi %0, %c7_i32 : i32
      %366 = vector.broadcast %365 : i32 to vector<8x1xi32>
      %367 = arith.cmpi slt, %366, %6 : vector<8x1xi32>
      %c7 = arith.constant 7 : index
      %c0_97 = arith.constant 0 : index
      %c0_98 = arith.constant 0 : index
      %368 = vector.load %arg4[%c7, %c0_97, %c0_98] : memref<8x8x512xbf16, #tpu.memory_space<vmem>>, vector<1x8x512xbf16>
      %369 = vector.shape_cast %368 : vector<1x8x512xbf16> to vector<8x512xbf16>
      %370 = arith.extf %369 : vector<8x512xbf16> to vector<8x512xf32>
      %371 = arith.truncf %356 : vector<8x128xf32> to vector<8x128xbf16>
      %c0_99 = arith.constant 0 : index
      %c0_100 = arith.constant 0 : index
      %372 = vector.load %arg6[%c0_99, %c0_100] : memref<128x512xbf16, #tpu.memory_space<vmem>>, vector<128x512xbf16>
      %cst_101 = arith.constant dense<0.000000e+00> : vector<8x512xf32>
      %373 = tpu.matmul %371, %372, %cst_101 {dimension_numbers = #tpu.dot_dimension_numbers<[1], [0], [0], [1], [0, 0, 1, 1], [], []>} : vector<8x128xbf16>, vector<128x512xbf16>, vector<8x512xf32> -> vector<8x512xf32>
      %374 = arith.addf %370, %373 : vector<8x512xf32>
      %375 = vector.extract_strided_slice %374 {offsets = [0, 0], sizes = [8, 128], strides = [1, 1]} : vector<8x512xf32> to vector<8x128xf32>
      %376 = arith.negf %375 : vector<8x128xf32>
      %377 = math.exp %376 : vector<8x128xf32>
      %cst_102 = arith.constant 1.000000e+00 : f32
      %378 = vector.broadcast %cst_102 : f32 to vector<8x128xf32>
      %379 = arith.addf %378, %377 : vector<8x128xf32>
      %380 = arith.divf %378, %379 : vector<8x128xf32>
      %381 = vector.extract_strided_slice %374 {offsets = [0, 128], sizes = [8, 128], strides = [1, 1]} : vector<8x512xf32> to vector<8x128xf32>
      %382 = arith.negf %381 : vector<8x128xf32>
      %383 = math.exp %382 : vector<8x128xf32>
      %cst_103 = arith.constant 1.000000e+00 : f32
      %384 = vector.broadcast %cst_103 : f32 to vector<8x128xf32>
      %385 = arith.addf %384, %383 : vector<8x128xf32>
      %386 = arith.divf %384, %385 : vector<8x128xf32>
      %387 = vector.extract_strided_slice %374 {offsets = [0, 256], sizes = [8, 128], strides = [1, 1]} : vector<8x512xf32> to vector<8x128xf32>
      %388 = math.tanh %387 : vector<8x128xf32>
      %389 = vector.extract_strided_slice %374 {offsets = [0, 384], sizes = [8, 128], strides = [1, 1]} : vector<8x512xf32> to vector<8x128xf32>
      %390 = arith.negf %389 : vector<8x128xf32>
      %391 = math.exp %390 : vector<8x128xf32>
      %cst_104 = arith.constant 1.000000e+00 : f32
      %392 = vector.broadcast %cst_104 : f32 to vector<8x128xf32>
      %393 = arith.addf %392, %391 : vector<8x128xf32>
      %394 = arith.divf %392, %393 : vector<8x128xf32>
      %395 = arith.mulf %386, %353 : vector<8x128xf32>
      %396 = arith.mulf %380, %388 : vector<8x128xf32>
      %397 = arith.addf %395, %396 : vector<8x128xf32>
      %398 = math.tanh %397 : vector<8x128xf32>
      %399 = arith.mulf %394, %398 : vector<8x128xf32>
      %400 = vector.shape_cast %367 : vector<8x1xi1> to vector<8x1xi1>
      %401 = vector.broadcast %400 : vector<8x1xi1> to vector<8x128xi1>
      %402 = arith.select %401, %397, %353 : vector<8x128xi1>, vector<8x128xf32>
      %403 = vector.shape_cast %367 : vector<8x1xi1> to vector<8x1xi1>
      %404 = vector.broadcast %403 : vector<8x1xi1> to vector<8x128xi1>
      %405 = arith.select %404, %399, %356 : vector<8x128xi1>, vector<8x128xf32>
      %cst_105 = arith.constant 0.000000e+00 : f32
      %406 = vector.broadcast %cst_105 : f32 to vector<8x128xf32>
      %407 = vector.shape_cast %367 : vector<8x1xi1> to vector<8x1xi1>
      %408 = vector.broadcast %407 : vector<8x1xi1> to vector<8x128xi1>
      %409 = arith.select %408, %399, %406 : vector<8x128xi1>, vector<8x128xf32>
      %410 = arith.truncf %409 : vector<8x128xf32> to vector<8x128xbf16>
      %c7_106 = arith.constant 7 : index
      %c0_107 = arith.constant 0 : index
      %c0_108 = arith.constant 0 : index
      %411 = vector.load %arg8[%c7_106, %c0_107, %c0_108] : memref<8x8x128xbf16, #tpu.memory_space<vmem>>, vector<1x8x128xbf16>
      %412 = vector.shape_cast %411 : vector<1x8x128xbf16> to vector<8x128xbf16>
      %413 = vector.shape_cast %410 : vector<8x128xbf16> to vector<1x8x128xbf16>
      tpu.vector_store %arg8[%c7_106, %c0_107, %c0_108], %413 {strides = array<i32>} : memref<8x8x128xbf16, #tpu.memory_space<vmem>>, vector<1x8x128xbf16>,
      %c0_109 = arith.constant 0 : index
      %c0_110 = arith.constant 0 : index
      %414 = vector.load %arg10[%c0_109, %c0_110] : memref<8x128xf32, #tpu.memory_space<vmem>>, vector<8x128xf32>
      tpu.vector_store %arg10[%c0_109, %c0_110], %405 {strides = array<i32>} : memref<8x128xf32, #tpu.memory_space<vmem>>, vector<8x128xf32>,
      %c0_111 = arith.constant 0 : index
      %c0_112 = arith.constant 0 : index
      %415 = vector.load %arg11[%c0_111, %c0_112] : memref<8x128xf32, #tpu.memory_space<vmem>>, vector<8x128xf32>
      tpu.vector_store %arg11[%c0_111, %c0_112], %402 {strides = array<i32>} : memref<8x128xf32, #tpu.memory_space<vmem>>, vector<8x128xf32>,
    } else {
    }
    %true = arith.constant true
    %10 = arith.xori %7, %true : i1
    %11 = arith.extui %10 : i1 to i32
    %c0_i32_3 = arith.constant 0 : i32
    %12 = arith.cmpi ne, %11, %c0_i32_3 : i32
    scf.if %12 {
      %cst = arith.constant 0.000000e+00 : bf16
      %20 = vector.broadcast %cst : bf16 to vector<8x8x128xbf16>
      %c0_8 = arith.constant 0 : index
      %c0_9 = arith.constant 0 : index
      %c0_10 = arith.constant 0 : index
      %21 = vector.load %arg8[%c0_8, %c0_9, %c0_10] : memref<8x8x128xbf16, #tpu.memory_space<vmem>>, vector<8x8x128xbf16>
      tpu.vector_store %arg8[%c0_8, %c0_9, %c0_10], %20 {strides = array<i32>} : memref<8x8x128xbf16, #tpu.memory_space<vmem>>, vector<8x8x128xbf16>,
    } else {
    }
    %c0_i32_4 = arith.constant 0 : i32
    %13 = arith.subi %c0_i32_4, %0 : i32
    %14 = arith.cmpi slt, %13, %2 : i32
    %15 = arith.extui %14 : i1 to i32
    %c0_i32_5 = arith.constant 0 : i32
    %16 = arith.cmpi ne, %15, %c0_i32_5 : i32
    scf.if %16 {
      %c0_8 = arith.constant 0 : index
      %c0_9 = arith.constant 0 : index
      %20 = vector.load %arg12[%c0_8, %c0_9] : memref<8x128xf32, #tpu.memory_space<vmem>>, vector<8x128xf32>
      %c0_10 = arith.constant 0 : index
      %c0_11 = arith.constant 0 : index
      %21 = vector.load %arg13[%c0_10, %c0_11] : memref<8x128xf32, #tpu.memory_space<vmem>>, vector<8x128xf32>
      %c0_i32_12 = arith.constant 0 : i32
      %22 = arith.addi %0, %c0_i32_12 : i32
      %c7_i32 = arith.constant 7 : i32
      %23 = arith.subi %c7_i32, %22 : i32
      %24 = vector.broadcast %23 : i32 to vector<8x1xi32>
      %25 = arith.cmpi slt, %24, %6 : vector<8x1xi32>
      %c7 = arith.constant 7 : index
      %c0_13 = arith.constant 0 : index
      %c0_14 = arith.constant 0 : index
      %26 = vector.load %arg5[%c7, %c0_13, %c0_14] : memref<8x8x512xbf16, #tpu.memory_space<vmem>>, vector<1x8x512xbf16>
      %27 = vector.shape_cast %26 : vector<1x8x512xbf16> to vector<8x512xbf16>
      %28 = arith.extf %27 : vector<8x512xbf16> to vector<8x512xf32>
      %29 = arith.truncf %20 : vector<8x128xf32> to vector<8x128xbf16>
      %c0_15 = arith.constant 0 : index
      %c0_16 = arith.constant 0 : index
      %30 = vector.load %arg7[%c0_15, %c0_16] : memref<128x512xbf16, #tpu.memory_space<vmem>>, vector<128x512xbf16>
      %cst = arith.constant dense<0.000000e+00> : vector<8x512xf32>
      %31 = tpu.matmul %29, %30, %cst {dimension_numbers = #tpu.dot_dimension_numbers<[1], [0], [0], [1], [0, 0, 1, 1], [], []>} : vector<8x128xbf16>, vector<128x512xbf16>, vector<8x512xf32> -> vector<8x512xf32>
      %32 = arith.addf %28, %31 : vector<8x512xf32>
      %33 = vector.extract_strided_slice %32 {offsets = [0, 0], sizes = [8, 128], strides = [1, 1]} : vector<8x512xf32> to vector<8x128xf32>
      %34 = arith.negf %33 : vector<8x128xf32>
      %35 = math.exp %34 : vector<8x128xf32>
      %cst_17 = arith.constant 1.000000e+00 : f32
      %36 = vector.broadcast %cst_17 : f32 to vector<8x128xf32>
      %37 = arith.addf %36, %35 : vector<8x128xf32>
      %38 = arith.divf %36, %37 : vector<8x128xf32>
      %39 = vector.extract_strided_slice %32 {offsets = [0, 128], sizes = [8, 128], strides = [1, 1]} : vector<8x512xf32> to vector<8x128xf32>
      %40 = arith.negf %39 : vector<8x128xf32>
      %41 = math.exp %40 : vector<8x128xf32>
      %cst_18 = arith.constant 1.000000e+00 : f32
      %42 = vector.broadcast %cst_18 : f32 to vector<8x128xf32>
      %43 = arith.addf %42, %41 : vector<8x128xf32>
      %44 = arith.divf %42, %43 : vector<8x128xf32>
      %45 = vector.extract_strided_slice %32 {offsets = [0, 256], sizes = [8, 128], strides = [1, 1]} : vector<8x512xf32> to vector<8x128xf32>
      %46 = math.tanh %45 : vector<8x128xf32>
      %47 = vector.extract_strided_slice %32 {offsets = [0, 384], sizes = [8, 128], strides = [1, 1]} : vector<8x512xf32> to vector<8x128xf32>
      %48 = arith.negf %47 : vector<8x128xf32>
      %49 = math.exp %48 : vector<8x128xf32>
      %cst_19 = arith.constant 1.000000e+00 : f32
      %50 = vector.broadcast %cst_19 : f32 to vector<8x128xf32>
      %51 = arith.addf %50, %49 : vector<8x128xf32>
      %52 = arith.divf %50, %51 : vector<8x128xf32>
      %53 = arith.mulf %44, %21 : vector<8x128xf32>
      %54 = arith.mulf %38, %46 : vector<8x128xf32>
      %55 = arith.addf %53, %54 : vector<8x128xf32>
      %56 = math.tanh %55 : vector<8x128xf32>
      %57 = arith.mulf %52, %56 : vector<8x128xf32>
      %58 = vector.shape_cast %25 : vector<8x1xi1> to vector<8x1xi1>
      %59 = vector.broadcast %58 : vector<8x1xi1> to vector<8x128xi1>
      %60 = arith.select %59, %55, %21 : vector<8x128xi1>, vector<8x128xf32>
      %61 = vector.shape_cast %25 : vector<8x1xi1> to vector<8x1xi1>
      %62 = vector.broadcast %61 : vector<8x1xi1> to vector<8x128xi1>
      %63 = arith.select %62, %57, %20 : vector<8x128xi1>, vector<8x128xf32>
      %cst_20 = arith.constant 0.000000e+00 : f32
      %64 = vector.broadcast %cst_20 : f32 to vector<8x128xf32>
      %65 = vector.shape_cast %25 : vector<8x1xi1> to vector<8x1xi1>
      %66 = vector.broadcast %65 : vector<8x1xi1> to vector<8x128xi1>
      %67 = arith.select %66, %57, %64 : vector<8x128xi1>, vector<8x128xf32>
      %68 = arith.truncf %67 : vector<8x128xf32> to vector<8x128xbf16>
      %c7_21 = arith.constant 7 : index
      %c0_22 = arith.constant 0 : index
      %c0_23 = arith.constant 0 : index
      %69 = vector.load %arg9[%c7_21, %c0_22, %c0_23] : memref<8x8x128xbf16, #tpu.memory_space<vmem>>, vector<1x8x128xbf16>
      %70 = vector.shape_cast %69 : vector<1x8x128xbf16> to vector<8x128xbf16>
      %71 = vector.shape_cast %68 : vector<8x128xbf16> to vector<1x8x128xbf16>
      tpu.vector_store %arg9[%c7_21, %c0_22, %c0_23], %71 {strides = array<i32>} : memref<8x8x128xbf16, #tpu.memory_space<vmem>>, vector<1x8x128xbf16>,
      %c1_i32 = arith.constant 1 : i32
      %72 = arith.addi %0, %c1_i32 : i32
      %c7_i32_24 = arith.constant 7 : i32
      %73 = arith.subi %c7_i32_24, %72 : i32
      %74 = vector.broadcast %73 : i32 to vector<8x1xi32>
      %75 = arith.cmpi slt, %74, %6 : vector<8x1xi32>
      %c6 = arith.constant 6 : index
      %c0_25 = arith.constant 0 : index
      %c0_26 = arith.constant 0 : index
      %76 = vector.load %arg5[%c6, %c0_25, %c0_26] : memref<8x8x512xbf16, #tpu.memory_space<vmem>>, vector<1x8x512xbf16>
      %77 = vector.shape_cast %76 : vector<1x8x512xbf16> to vector<8x512xbf16>
      %78 = arith.extf %77 : vector<8x512xbf16> to vector<8x512xf32>
      %79 = arith.truncf %63 : vector<8x128xf32> to vector<8x128xbf16>
      %c0_27 = arith.constant 0 : index
      %c0_28 = arith.constant 0 : index
      %80 = vector.load %arg7[%c0_27, %c0_28] : memref<128x512xbf16, #tpu.memory_space<vmem>>, vector<128x512xbf16>
      %cst_29 = arith.constant dense<0.000000e+00> : vector<8x512xf32>
      %81 = tpu.matmul %79, %80, %cst_29 {dimension_numbers = #tpu.dot_dimension_numbers<[1], [0], [0], [1], [0, 0, 1, 1], [], []>} : vector<8x128xbf16>, vector<128x512xbf16>, vector<8x512xf32> -> vector<8x512xf32>
      %82 = arith.addf %78, %81 : vector<8x512xf32>
      %83 = vector.extract_strided_slice %82 {offsets = [0, 0], sizes = [8, 128], strides = [1, 1]} : vector<8x512xf32> to vector<8x128xf32>
      %84 = arith.negf %83 : vector<8x128xf32>
      %85 = math.exp %84 : vector<8x128xf32>
      %cst_30 = arith.constant 1.000000e+00 : f32
      %86 = vector.broadcast %cst_30 : f32 to vector<8x128xf32>
      %87 = arith.addf %86, %85 : vector<8x128xf32>
      %88 = arith.divf %86, %87 : vector<8x128xf32>
      %89 = vector.extract_strided_slice %82 {offsets = [0, 128], sizes = [8, 128], strides = [1, 1]} : vector<8x512xf32> to vector<8x128xf32>
      %90 = arith.negf %89 : vector<8x128xf32>
      %91 = math.exp %90 : vector<8x128xf32>
      %cst_31 = arith.constant 1.000000e+00 : f32
      %92 = vector.broadcast %cst_31 : f32 to vector<8x128xf32>
      %93 = arith.addf %92, %91 : vector<8x128xf32>
      %94 = arith.divf %92, %93 : vector<8x128xf32>
      %95 = vector.extract_strided_slice %82 {offsets = [0, 256], sizes = [8, 128], strides = [1, 1]} : vector<8x512xf32> to vector<8x128xf32>
      %96 = math.tanh %95 : vector<8x128xf32>
      %97 = vector.extract_strided_slice %82 {offsets = [0, 384], sizes = [8, 128], strides = [1, 1]} : vector<8x512xf32> to vector<8x128xf32>
      %98 = arith.negf %97 : vector<8x128xf32>
      %99 = math.exp %98 : vector<8x128xf32>
      %cst_32 = arith.constant 1.000000e+00 : f32
      %100 = vector.broadcast %cst_32 : f32 to vector<8x128xf32>
      %101 = arith.addf %100, %99 : vector<8x128xf32>
      %102 = arith.divf %100, %101 : vector<8x128xf32>
      %103 = arith.mulf %94, %60 : vector<8x128xf32>
      %104 = arith.mulf %88, %96 : vector<8x128xf32>
      %105 = arith.addf %103, %104 : vector<8x128xf32>
      %106 = math.tanh %105 : vector<8x128xf32>
      %107 = arith.mulf %102, %106 : vector<8x128xf32>
      %108 = vector.shape_cast %75 : vector<8x1xi1> to vector<8x1xi1>
      %109 = vector.broadcast %108 : vector<8x1xi1> to vector<8x128xi1>
      %110 = arith.select %109, %105, %60 : vector<8x128xi1>, vector<8x128xf32>
      %111 = vector.shape_cast %75 : vector<8x1xi1> to vector<8x1xi1>
      %112 = vector.broadcast %111 : vector<8x1xi1> to vector<8x128xi1>
      %113 = arith.select %112, %107, %63 : vector<8x128xi1>, vector<8x128xf32>
      %cst_33 = arith.constant 0.000000e+00 : f32
      %114 = vector.broadcast %cst_33 : f32 to vector<8x128xf32>
      %115 = vector.shape_cast %75 : vector<8x1xi1> to vector<8x1xi1>
      %116 = vector.broadcast %115 : vector<8x1xi1> to vector<8x128xi1>
      %117 = arith.select %116, %107, %114 : vector<8x128xi1>, vector<8x128xf32>
      %118 = arith.truncf %117 : vector<8x128xf32> to vector<8x128xbf16>
      %c6_34 = arith.constant 6 : index
      %c0_35 = arith.constant 0 : index
      %c0_36 = arith.constant 0 : index
      %119 = vector.load %arg9[%c6_34, %c0_35, %c0_36] : memref<8x8x128xbf16, #tpu.memory_space<vmem>>, vector<1x8x128xbf16>
      %120 = vector.shape_cast %119 : vector<1x8x128xbf16> to vector<8x128xbf16>
      %121 = vector.shape_cast %118 : vector<8x128xbf16> to vector<1x8x128xbf16>
      tpu.vector_store %arg9[%c6_34, %c0_35, %c0_36], %121 {strides = array<i32>} : memref<8x8x128xbf16, #tpu.memory_space<vmem>>, vector<1x8x128xbf16>,
      %c2_i32 = arith.constant 2 : i32
      %122 = arith.addi %0, %c2_i32 : i32
      %c7_i32_37 = arith.constant 7 : i32
      %123 = arith.subi %c7_i32_37, %122 : i32
      %124 = vector.broadcast %123 : i32 to vector<8x1xi32>
      %125 = arith.cmpi slt, %124, %6 : vector<8x1xi32>
      %c5 = arith.constant 5 : index
      %c0_38 = arith.constant 0 : index
      %c0_39 = arith.constant 0 : index
      %126 = vector.load %arg5[%c5, %c0_38, %c0_39] : memref<8x8x512xbf16, #tpu.memory_space<vmem>>, vector<1x8x512xbf16>
      %127 = vector.shape_cast %126 : vector<1x8x512xbf16> to vector<8x512xbf16>
      %128 = arith.extf %127 : vector<8x512xbf16> to vector<8x512xf32>
      %129 = arith.truncf %113 : vector<8x128xf32> to vector<8x128xbf16>
      %c0_40 = arith.constant 0 : index
      %c0_41 = arith.constant 0 : index
      %130 = vector.load %arg7[%c0_40, %c0_41] : memref<128x512xbf16, #tpu.memory_space<vmem>>, vector<128x512xbf16>
      %cst_42 = arith.constant dense<0.000000e+00> : vector<8x512xf32>
      %131 = tpu.matmul %129, %130, %cst_42 {dimension_numbers = #tpu.dot_dimension_numbers<[1], [0], [0], [1], [0, 0, 1, 1], [], []>} : vector<8x128xbf16>, vector<128x512xbf16>, vector<8x512xf32> -> vector<8x512xf32>
      %132 = arith.addf %128, %131 : vector<8x512xf32>
      %133 = vector.extract_strided_slice %132 {offsets = [0, 0], sizes = [8, 128], strides = [1, 1]} : vector<8x512xf32> to vector<8x128xf32>
      %134 = arith.negf %133 : vector<8x128xf32>
      %135 = math.exp %134 : vector<8x128xf32>
      %cst_43 = arith.constant 1.000000e+00 : f32
      %136 = vector.broadcast %cst_43 : f32 to vector<8x128xf32>
      %137 = arith.addf %136, %135 : vector<8x128xf32>
      %138 = arith.divf %136, %137 : vector<8x128xf32>
      %139 = vector.extract_strided_slice %132 {offsets = [0, 128], sizes = [8, 128], strides = [1, 1]} : vector<8x512xf32> to vector<8x128xf32>
      %140 = arith.negf %139 : vector<8x128xf32>
      %141 = math.exp %140 : vector<8x128xf32>
      %cst_44 = arith.constant 1.000000e+00 : f32
      %142 = vector.broadcast %cst_44 : f32 to vector<8x128xf32>
      %143 = arith.addf %142, %141 : vector<8x128xf32>
      %144 = arith.divf %142, %143 : vector<8x128xf32>
      %145 = vector.extract_strided_slice %132 {offsets = [0, 256], sizes = [8, 128], strides = [1, 1]} : vector<8x512xf32> to vector<8x128xf32>
      %146 = math.tanh %145 : vector<8x128xf32>
      %147 = vector.extract_strided_slice %132 {offsets = [0, 384], sizes = [8, 128], strides = [1, 1]} : vector<8x512xf32> to vector<8x128xf32>
      %148 = arith.negf %147 : vector<8x128xf32>
      %149 = math.exp %148 : vector<8x128xf32>
      %cst_45 = arith.constant 1.000000e+00 : f32
      %150 = vector.broadcast %cst_45 : f32 to vector<8x128xf32>
      %151 = arith.addf %150, %149 : vector<8x128xf32>
      %152 = arith.divf %150, %151 : vector<8x128xf32>
      %153 = arith.mulf %144, %110 : vector<8x128xf32>
      %154 = arith.mulf %138, %146 : vector<8x128xf32>
      %155 = arith.addf %153, %154 : vector<8x128xf32>
      %156 = math.tanh %155 : vector<8x128xf32>
      %157 = arith.mulf %152, %156 : vector<8x128xf32>
      %158 = vector.shape_cast %125 : vector<8x1xi1> to vector<8x1xi1>
      %159 = vector.broadcast %158 : vector<8x1xi1> to vector<8x128xi1>
      %160 = arith.select %159, %155, %110 : vector<8x128xi1>, vector<8x128xf32>
      %161 = vector.shape_cast %125 : vector<8x1xi1> to vector<8x1xi1>
      %162 = vector.broadcast %161 : vector<8x1xi1> to vector<8x128xi1>
      %163 = arith.select %162, %157, %113 : vector<8x128xi1>, vector<8x128xf32>
      %cst_46 = arith.constant 0.000000e+00 : f32
      %164 = vector.broadcast %cst_46 : f32 to vector<8x128xf32>
      %165 = vector.shape_cast %125 : vector<8x1xi1> to vector<8x1xi1>
      %166 = vector.broadcast %165 : vector<8x1xi1> to vector<8x128xi1>
      %167 = arith.select %166, %157, %164 : vector<8x128xi1>, vector<8x128xf32>
      %168 = arith.truncf %167 : vector<8x128xf32> to vector<8x128xbf16>
      %c5_47 = arith.constant 5 : index
      %c0_48 = arith.constant 0 : index
      %c0_49 = arith.constant 0 : index
      %169 = vector.load %arg9[%c5_47, %c0_48, %c0_49] : memref<8x8x128xbf16, #tpu.memory_space<vmem>>, vector<1x8x128xbf16>
      %170 = vector.shape_cast %169 : vector<1x8x128xbf16> to vector<8x128xbf16>
      %171 = vector.shape_cast %168 : vector<8x128xbf16> to vector<1x8x128xbf16>
      tpu.vector_store %arg9[%c5_47, %c0_48, %c0_49], %171 {strides = array<i32>} : memref<8x8x128xbf16, #tpu.memory_space<vmem>>, vector<1x8x128xbf16>,
      %c3_i32 = arith.constant 3 : i32
      %172 = arith.addi %0, %c3_i32 : i32
      %c7_i32_50 = arith.constant 7 : i32
      %173 = arith.subi %c7_i32_50, %172 : i32
      %174 = vector.broadcast %173 : i32 to vector<8x1xi32>
      %175 = arith.cmpi slt, %174, %6 : vector<8x1xi32>
      %c4 = arith.constant 4 : index
      %c0_51 = arith.constant 0 : index
      %c0_52 = arith.constant 0 : index
      %176 = vector.load %arg5[%c4, %c0_51, %c0_52] : memref<8x8x512xbf16, #tpu.memory_space<vmem>>, vector<1x8x512xbf16>
      %177 = vector.shape_cast %176 : vector<1x8x512xbf16> to vector<8x512xbf16>
      %178 = arith.extf %177 : vector<8x512xbf16> to vector<8x512xf32>
      %179 = arith.truncf %163 : vector<8x128xf32> to vector<8x128xbf16>
      %c0_53 = arith.constant 0 : index
      %c0_54 = arith.constant 0 : index
      %180 = vector.load %arg7[%c0_53, %c0_54] : memref<128x512xbf16, #tpu.memory_space<vmem>>, vector<128x512xbf16>
      %cst_55 = arith.constant dense<0.000000e+00> : vector<8x512xf32>
      %181 = tpu.matmul %179, %180, %cst_55 {dimension_numbers = #tpu.dot_dimension_numbers<[1], [0], [0], [1], [0, 0, 1, 1], [], []>} : vector<8x128xbf16>, vector<128x512xbf16>, vector<8x512xf32> -> vector<8x512xf32>
      %182 = arith.addf %178, %181 : vector<8x512xf32>
      %183 = vector.extract_strided_slice %182 {offsets = [0, 0], sizes = [8, 128], strides = [1, 1]} : vector<8x512xf32> to vector<8x128xf32>
      %184 = arith.negf %183 : vector<8x128xf32>
      %185 = math.exp %184 : vector<8x128xf32>
      %cst_56 = arith.constant 1.000000e+00 : f32
      %186 = vector.broadcast %cst_56 : f32 to vector<8x128xf32>
      %187 = arith.addf %186, %185 : vector<8x128xf32>
      %188 = arith.divf %186, %187 : vector<8x128xf32>
      %189 = vector.extract_strided_slice %182 {offsets = [0, 128], sizes = [8, 128], strides = [1, 1]} : vector<8x512xf32> to vector<8x128xf32>
      %190 = arith.negf %189 : vector<8x128xf32>
      %191 = math.exp %190 : vector<8x128xf32>
      %cst_57 = arith.constant 1.000000e+00 : f32
      %192 = vector.broadcast %cst_57 : f32 to vector<8x128xf32>
      %193 = arith.addf %192, %191 : vector<8x128xf32>
      %194 = arith.divf %192, %193 : vector<8x128xf32>
      %195 = vector.extract_strided_slice %182 {offsets = [0, 256], sizes = [8, 128], strides = [1, 1]} : vector<8x512xf32> to vector<8x128xf32>
      %196 = math.tanh %195 : vector<8x128xf32>
      %197 = vector.extract_strided_slice %182 {offsets = [0, 384], sizes = [8, 128], strides = [1, 1]} : vector<8x512xf32> to vector<8x128xf32>
      %198 = arith.negf %197 : vector<8x128xf32>
      %199 = math.exp %198 : vector<8x128xf32>
      %cst_58 = arith.constant 1.000000e+00 : f32
      %200 = vector.broadcast %cst_58 : f32 to vector<8x128xf32>
      %201 = arith.addf %200, %199 : vector<8x128xf32>
      %202 = arith.divf %200, %201 : vector<8x128xf32>
      %203 = arith.mulf %194, %160 : vector<8x128xf32>
      %204 = arith.mulf %188, %196 : vector<8x128xf32>
      %205 = arith.addf %203, %204 : vector<8x128xf32>
      %206 = math.tanh %205 : vector<8x128xf32>
      %207 = arith.mulf %202, %206 : vector<8x128xf32>
      %208 = vector.shape_cast %175 : vector<8x1xi1> to vector<8x1xi1>
      %209 = vector.broadcast %208 : vector<8x1xi1> to vector<8x128xi1>
      %210 = arith.select %209, %205, %160 : vector<8x128xi1>, vector<8x128xf32>
      %211 = vector.shape_cast %175 : vector<8x1xi1> to vector<8x1xi1>
      %212 = vector.broadcast %211 : vector<8x1xi1> to vector<8x128xi1>
      %213 = arith.select %212, %207, %163 : vector<8x128xi1>, vector<8x128xf32>
      %cst_59 = arith.constant 0.000000e+00 : f32
      %214 = vector.broadcast %cst_59 : f32 to vector<8x128xf32>
      %215 = vector.shape_cast %175 : vector<8x1xi1> to vector<8x1xi1>
      %216 = vector.broadcast %215 : vector<8x1xi1> to vector<8x128xi1>
      %217 = arith.select %216, %207, %214 : vector<8x128xi1>, vector<8x128xf32>
      %218 = arith.truncf %217 : vector<8x128xf32> to vector<8x128xbf16>
      %c4_60 = arith.constant 4 : index
      %c0_61 = arith.constant 0 : index
      %c0_62 = arith.constant 0 : index
      %219 = vector.load %arg9[%c4_60, %c0_61, %c0_62] : memref<8x8x128xbf16, #tpu.memory_space<vmem>>, vector<1x8x128xbf16>
      %220 = vector.shape_cast %219 : vector<1x8x128xbf16> to vector<8x128xbf16>
      %221 = vector.shape_cast %218 : vector<8x128xbf16> to vector<1x8x128xbf16>
      tpu.vector_store %arg9[%c4_60, %c0_61, %c0_62], %221 {strides = array<i32>} : memref<8x8x128xbf16, #tpu.memory_space<vmem>>, vector<1x8x128xbf16>,
      %c4_i32 = arith.constant 4 : i32
      %222 = arith.addi %0, %c4_i32 : i32
      %c7_i32_63 = arith.constant 7 : i32
      %223 = arith.subi %c7_i32_63, %222 : i32
      %224 = vector.broadcast %223 : i32 to vector<8x1xi32>
      %225 = arith.cmpi slt, %224, %6 : vector<8x1xi32>
      %c3 = arith.constant 3 : index
      %c0_64 = arith.constant 0 : index
      %c0_65 = arith.constant 0 : index
      %226 = vector.load %arg5[%c3, %c0_64, %c0_65] : memref<8x8x512xbf16, #tpu.memory_space<vmem>>, vector<1x8x512xbf16>
      %227 = vector.shape_cast %226 : vector<1x8x512xbf16> to vector<8x512xbf16>
      %228 = arith.extf %227 : vector<8x512xbf16> to vector<8x512xf32>
      %229 = arith.truncf %213 : vector<8x128xf32> to vector<8x128xbf16>
      %c0_66 = arith.constant 0 : index
      %c0_67 = arith.constant 0 : index
      %230 = vector.load %arg7[%c0_66, %c0_67] : memref<128x512xbf16, #tpu.memory_space<vmem>>, vector<128x512xbf16>
      %cst_68 = arith.constant dense<0.000000e+00> : vector<8x512xf32>
      %231 = tpu.matmul %229, %230, %cst_68 {dimension_numbers = #tpu.dot_dimension_numbers<[1], [0], [0], [1], [0, 0, 1, 1], [], []>} : vector<8x128xbf16>, vector<128x512xbf16>, vector<8x512xf32> -> vector<8x512xf32>
      %232 = arith.addf %228, %231 : vector<8x512xf32>
      %233 = vector.extract_strided_slice %232 {offsets = [0, 0], sizes = [8, 128], strides = [1, 1]} : vector<8x512xf32> to vector<8x128xf32>
      %234 = arith.negf %233 : vector<8x128xf32>
      %235 = math.exp %234 : vector<8x128xf32>
      %cst_69 = arith.constant 1.000000e+00 : f32
      %236 = vector.broadcast %cst_69 : f32 to vector<8x128xf32>
      %237 = arith.addf %236, %235 : vector<8x128xf32>
      %238 = arith.divf %236, %237 : vector<8x128xf32>
      %239 = vector.extract_strided_slice %232 {offsets = [0, 128], sizes = [8, 128], strides = [1, 1]} : vector<8x512xf32> to vector<8x128xf32>
      %240 = arith.negf %239 : vector<8x128xf32>
      %241 = math.exp %240 : vector<8x128xf32>
      %cst_70 = arith.constant 1.000000e+00 : f32
      %242 = vector.broadcast %cst_70 : f32 to vector<8x128xf32>
      %243 = arith.addf %242, %241 : vector<8x128xf32>
      %244 = arith.divf %242, %243 : vector<8x128xf32>
      %245 = vector.extract_strided_slice %232 {offsets = [0, 256], sizes = [8, 128], strides = [1, 1]} : vector<8x512xf32> to vector<8x128xf32>
      %246 = math.tanh %245 : vector<8x128xf32>
      %247 = vector.extract_strided_slice %232 {offsets = [0, 384], sizes = [8, 128], strides = [1, 1]} : vector<8x512xf32> to vector<8x128xf32>
      %248 = arith.negf %247 : vector<8x128xf32>
      %249 = math.exp %248 : vector<8x128xf32>
      %cst_71 = arith.constant 1.000000e+00 : f32
      %250 = vector.broadcast %cst_71 : f32 to vector<8x128xf32>
      %251 = arith.addf %250, %249 : vector<8x128xf32>
      %252 = arith.divf %250, %251 : vector<8x128xf32>
      %253 = arith.mulf %244, %210 : vector<8x128xf32>
      %254 = arith.mulf %238, %246 : vector<8x128xf32>
      %255 = arith.addf %253, %254 : vector<8x128xf32>
      %256 = math.tanh %255 : vector<8x128xf32>
      %257 = arith.mulf %252, %256 : vector<8x128xf32>
      %258 = vector.shape_cast %225 : vector<8x1xi1> to vector<8x1xi1>
      %259 = vector.broadcast %258 : vector<8x1xi1> to vector<8x128xi1>
      %260 = arith.select %259, %255, %210 : vector<8x128xi1>, vector<8x128xf32>
      %261 = vector.shape_cast %225 : vector<8x1xi1> to vector<8x1xi1>
      %262 = vector.broadcast %261 : vector<8x1xi1> to vector<8x128xi1>
      %263 = arith.select %262, %257, %213 : vector<8x128xi1>, vector<8x128xf32>
      %cst_72 = arith.constant 0.000000e+00 : f32
      %264 = vector.broadcast %cst_72 : f32 to vector<8x128xf32>
      %265 = vector.shape_cast %225 : vector<8x1xi1> to vector<8x1xi1>
      %266 = vector.broadcast %265 : vector<8x1xi1> to vector<8x128xi1>
      %267 = arith.select %266, %257, %264 : vector<8x128xi1>, vector<8x128xf32>
      %268 = arith.truncf %267 : vector<8x128xf32> to vector<8x128xbf16>
      %c3_73 = arith.constant 3 : index
      %c0_74 = arith.constant 0 : index
      %c0_75 = arith.constant 0 : index
      %269 = vector.load %arg9[%c3_73, %c0_74, %c0_75] : memref<8x8x128xbf16, #tpu.memory_space<vmem>>, vector<1x8x128xbf16>
      %270 = vector.shape_cast %269 : vector<1x8x128xbf16> to vector<8x128xbf16>
      %271 = vector.shape_cast %268 : vector<8x128xbf16> to vector<1x8x128xbf16>
      tpu.vector_store %arg9[%c3_73, %c0_74, %c0_75], %271 {strides = array<i32>} : memref<8x8x128xbf16, #tpu.memory_space<vmem>>, vector<1x8x128xbf16>,
      %c5_i32 = arith.constant 5 : i32
      %272 = arith.addi %0, %c5_i32 : i32
      %c7_i32_76 = arith.constant 7 : i32
      %273 = arith.subi %c7_i32_76, %272 : i32
      %274 = vector.broadcast %273 : i32 to vector<8x1xi32>
      %275 = arith.cmpi slt, %274, %6 : vector<8x1xi32>
      %c2 = arith.constant 2 : index
      %c0_77 = arith.constant 0 : index
      %c0_78 = arith.constant 0 : index
      %276 = vector.load %arg5[%c2, %c0_77, %c0_78] : memref<8x8x512xbf16, #tpu.memory_space<vmem>>, vector<1x8x512xbf16>
      %277 = vector.shape_cast %276 : vector<1x8x512xbf16> to vector<8x512xbf16>
      %278 = arith.extf %277 : vector<8x512xbf16> to vector<8x512xf32>
      %279 = arith.truncf %263 : vector<8x128xf32> to vector<8x128xbf16>
      %c0_79 = arith.constant 0 : index
      %c0_80 = arith.constant 0 : index
      %280 = vector.load %arg7[%c0_79, %c0_80] : memref<128x512xbf16, #tpu.memory_space<vmem>>, vector<128x512xbf16>
      %cst_81 = arith.constant dense<0.000000e+00> : vector<8x512xf32>
      %281 = tpu.matmul %279, %280, %cst_81 {dimension_numbers = #tpu.dot_dimension_numbers<[1], [0], [0], [1], [0, 0, 1, 1], [], []>} : vector<8x128xbf16>, vector<128x512xbf16>, vector<8x512xf32> -> vector<8x512xf32>
      %282 = arith.addf %278, %281 : vector<8x512xf32>
      %283 = vector.extract_strided_slice %282 {offsets = [0, 0], sizes = [8, 128], strides = [1, 1]} : vector<8x512xf32> to vector<8x128xf32>
      %284 = arith.negf %283 : vector<8x128xf32>
      %285 = math.exp %284 : vector<8x128xf32>
      %cst_82 = arith.constant 1.000000e+00 : f32
      %286 = vector.broadcast %cst_82 : f32 to vector<8x128xf32>
      %287 = arith.addf %286, %285 : vector<8x128xf32>
      %288 = arith.divf %286, %287 : vector<8x128xf32>
      %289 = vector.extract_strided_slice %282 {offsets = [0, 128], sizes = [8, 128], strides = [1, 1]} : vector<8x512xf32> to vector<8x128xf32>
      %290 = arith.negf %289 : vector<8x128xf32>
      %291 = math.exp %290 : vector<8x128xf32>
      %cst_83 = arith.constant 1.000000e+00 : f32
      %292 = vector.broadcast %cst_83 : f32 to vector<8x128xf32>
      %293 = arith.addf %292, %291 : vector<8x128xf32>
      %294 = arith.divf %292, %293 : vector<8x128xf32>
      %295 = vector.extract_strided_slice %282 {offsets = [0, 256], sizes = [8, 128], strides = [1, 1]} : vector<8x512xf32> to vector<8x128xf32>
      %296 = math.tanh %295 : vector<8x128xf32>
      %297 = vector.extract_strided_slice %282 {offsets = [0, 384], sizes = [8, 128], strides = [1, 1]} : vector<8x512xf32> to vector<8x128xf32>
      %298 = arith.negf %297 : vector<8x128xf32>
      %299 = math.exp %298 : vector<8x128xf32>
      %cst_84 = arith.constant 1.000000e+00 : f32
      %300 = vector.broadcast %cst_84 : f32 to vector<8x128xf32>
      %301 = arith.addf %300, %299 : vector<8x128xf32>
      %302 = arith.divf %300, %301 : vector<8x128xf32>
      %303 = arith.mulf %294, %260 : vector<8x128xf32>
      %304 = arith.mulf %288, %296 : vector<8x128xf32>
      %305 = arith.addf %303, %304 : vector<8x128xf32>
      %306 = math.tanh %305 : vector<8x128xf32>
      %307 = arith.mulf %302, %306 : vector<8x128xf32>
      %308 = vector.shape_cast %275 : vector<8x1xi1> to vector<8x1xi1>
      %309 = vector.broadcast %308 : vector<8x1xi1> to vector<8x128xi1>
      %310 = arith.select %309, %305, %260 : vector<8x128xi1>, vector<8x128xf32>
      %311 = vector.shape_cast %275 : vector<8x1xi1> to vector<8x1xi1>
      %312 = vector.broadcast %311 : vector<8x1xi1> to vector<8x128xi1>
      %313 = arith.select %312, %307, %263 : vector<8x128xi1>, vector<8x128xf32>
      %cst_85 = arith.constant 0.000000e+00 : f32
      %314 = vector.broadcast %cst_85 : f32 to vector<8x128xf32>
      %315 = vector.shape_cast %275 : vector<8x1xi1> to vector<8x1xi1>
      %316 = vector.broadcast %315 : vector<8x1xi1> to vector<8x128xi1>
      %317 = arith.select %316, %307, %314 : vector<8x128xi1>, vector<8x128xf32>
      %318 = arith.truncf %317 : vector<8x128xf32> to vector<8x128xbf16>
      %c2_86 = arith.constant 2 : index
      %c0_87 = arith.constant 0 : index
      %c0_88 = arith.constant 0 : index
      %319 = vector.load %arg9[%c2_86, %c0_87, %c0_88] : memref<8x8x128xbf16, #tpu.memory_space<vmem>>, vector<1x8x128xbf16>
      %320 = vector.shape_cast %319 : vector<1x8x128xbf16> to vector<8x128xbf16>
      %321 = vector.shape_cast %318 : vector<8x128xbf16> to vector<1x8x128xbf16>
      tpu.vector_store %arg9[%c2_86, %c0_87, %c0_88], %321 {strides = array<i32>} : memref<8x8x128xbf16, #tpu.memory_space<vmem>>, vector<1x8x128xbf16>,
      %c6_i32 = arith.constant 6 : i32
      %322 = arith.addi %0, %c6_i32 : i32
      %c7_i32_89 = arith.constant 7 : i32
      %323 = arith.subi %c7_i32_89, %322 : i32
      %324 = vector.broadcast %323 : i32 to vector<8x1xi32>
      %325 = arith.cmpi slt, %324, %6 : vector<8x1xi32>
      %c1 = arith.constant 1 : index
      %c0_90 = arith.constant 0 : index
      %c0_91 = arith.constant 0 : index
      %326 = vector.load %arg5[%c1, %c0_90, %c0_91] : memref<8x8x512xbf16, #tpu.memory_space<vmem>>, vector<1x8x512xbf16>
      %327 = vector.shape_cast %326 : vector<1x8x512xbf16> to vector<8x512xbf16>
      %328 = arith.extf %327 : vector<8x512xbf16> to vector<8x512xf32>
      %329 = arith.truncf %313 : vector<8x128xf32> to vector<8x128xbf16>
      %c0_92 = arith.constant 0 : index
      %c0_93 = arith.constant 0 : index
      %330 = vector.load %arg7[%c0_92, %c0_93] : memref<128x512xbf16, #tpu.memory_space<vmem>>, vector<128x512xbf16>
      %cst_94 = arith.constant dense<0.000000e+00> : vector<8x512xf32>
      %331 = tpu.matmul %329, %330, %cst_94 {dimension_numbers = #tpu.dot_dimension_numbers<[1], [0], [0], [1], [0, 0, 1, 1], [], []>} : vector<8x128xbf16>, vector<128x512xbf16>, vector<8x512xf32> -> vector<8x512xf32>
      %332 = arith.addf %328, %331 : vector<8x512xf32>
      %333 = vector.extract_strided_slice %332 {offsets = [0, 0], sizes = [8, 128], strides = [1, 1]} : vector<8x512xf32> to vector<8x128xf32>
      %334 = arith.negf %333 : vector<8x128xf32>
      %335 = math.exp %334 : vector<8x128xf32>
      %cst_95 = arith.constant 1.000000e+00 : f32
      %336 = vector.broadcast %cst_95 : f32 to vector<8x128xf32>
      %337 = arith.addf %336, %335 : vector<8x128xf32>
      %338 = arith.divf %336, %337 : vector<8x128xf32>
      %339 = vector.extract_strided_slice %332 {offsets = [0, 128], sizes = [8, 128], strides = [1, 1]} : vector<8x512xf32> to vector<8x128xf32>
      %340 = arith.negf %339 : vector<8x128xf32>
      %341 = math.exp %340 : vector<8x128xf32>
      %cst_96 = arith.constant 1.000000e+00 : f32
      %342 = vector.broadcast %cst_96 : f32 to vector<8x128xf32>
      %343 = arith.addf %342, %341 : vector<8x128xf32>
      %344 = arith.divf %342, %343 : vector<8x128xf32>
      %345 = vector.extract_strided_slice %332 {offsets = [0, 256], sizes = [8, 128], strides = [1, 1]} : vector<8x512xf32> to vector<8x128xf32>
      %346 = math.tanh %345 : vector<8x128xf32>
      %347 = vector.extract_strided_slice %332 {offsets = [0, 384], sizes = [8, 128], strides = [1, 1]} : vector<8x512xf32> to vector<8x128xf32>
      %348 = arith.negf %347 : vector<8x128xf32>
      %349 = math.exp %348 : vector<8x128xf32>
      %cst_97 = arith.constant 1.000000e+00 : f32
      %350 = vector.broadcast %cst_97 : f32 to vector<8x128xf32>
      %351 = arith.addf %350, %349 : vector<8x128xf32>
      %352 = arith.divf %350, %351 : vector<8x128xf32>
      %353 = arith.mulf %344, %310 : vector<8x128xf32>
      %354 = arith.mulf %338, %346 : vector<8x128xf32>
      %355 = arith.addf %353, %354 : vector<8x128xf32>
      %356 = math.tanh %355 : vector<8x128xf32>
      %357 = arith.mulf %352, %356 : vector<8x128xf32>
      %358 = vector.shape_cast %325 : vector<8x1xi1> to vector<8x1xi1>
      %359 = vector.broadcast %358 : vector<8x1xi1> to vector<8x128xi1>
      %360 = arith.select %359, %355, %310 : vector<8x128xi1>, vector<8x128xf32>
      %361 = vector.shape_cast %325 : vector<8x1xi1> to vector<8x1xi1>
      %362 = vector.broadcast %361 : vector<8x1xi1> to vector<8x128xi1>
      %363 = arith.select %362, %357, %313 : vector<8x128xi1>, vector<8x128xf32>
      %cst_98 = arith.constant 0.000000e+00 : f32
      %364 = vector.broadcast %cst_98 : f32 to vector<8x128xf32>
      %365 = vector.shape_cast %325 : vector<8x1xi1> to vector<8x1xi1>
      %366 = vector.broadcast %365 : vector<8x1xi1> to vector<8x128xi1>
      %367 = arith.select %366, %357, %364 : vector<8x128xi1>, vector<8x128xf32>
      %368 = arith.truncf %367 : vector<8x128xf32> to vector<8x128xbf16>
      %c1_99 = arith.constant 1 : index
      %c0_100 = arith.constant 0 : index
      %c0_101 = arith.constant 0 : index
      %369 = vector.load %arg9[%c1_99, %c0_100, %c0_101] : memref<8x8x128xbf16, #tpu.memory_space<vmem>>, vector<1x8x128xbf16>
      %370 = vector.shape_cast %369 : vector<1x8x128xbf16> to vector<8x128xbf16>
      %371 = vector.shape_cast %368 : vector<8x128xbf16> to vector<1x8x128xbf16>
      tpu.vector_store %arg9[%c1_99, %c0_100, %c0_101], %371 {strides = array<i32>} : memref<8x8x128xbf16, #tpu.memory_space<vmem>>, vector<1x8x128xbf16>,
      %c7_i32_102 = arith.constant 7 : i32
      %372 = arith.addi %0, %c7_i32_102 : i32
      %c7_i32_103 = arith.constant 7 : i32
      %373 = arith.subi %c7_i32_103, %372 : i32
      %374 = vector.broadcast %373 : i32 to vector<8x1xi32>
      %375 = arith.cmpi slt, %374, %6 : vector<8x1xi32>
      %c0_104 = arith.constant 0 : index
      %c0_105 = arith.constant 0 : index
      %c0_106 = arith.constant 0 : index
      %376 = vector.load %arg5[%c0_104, %c0_105, %c0_106] : memref<8x8x512xbf16, #tpu.memory_space<vmem>>, vector<1x8x512xbf16>
      %377 = vector.shape_cast %376 : vector<1x8x512xbf16> to vector<8x512xbf16>
      %378 = arith.extf %377 : vector<8x512xbf16> to vector<8x512xf32>
      %379 = arith.truncf %363 : vector<8x128xf32> to vector<8x128xbf16>
      %c0_107 = arith.constant 0 : index
      %c0_108 = arith.constant 0 : index
      %380 = vector.load %arg7[%c0_107, %c0_108] : memref<128x512xbf16, #tpu.memory_space<vmem>>, vector<128x512xbf16>
      %cst_109 = arith.constant dense<0.000000e+00> : vector<8x512xf32>
      %381 = tpu.matmul %379, %380, %cst_109 {dimension_numbers = #tpu.dot_dimension_numbers<[1], [0], [0], [1], [0, 0, 1, 1], [], []>} : vector<8x128xbf16>, vector<128x512xbf16>, vector<8x512xf32> -> vector<8x512xf32>
      %382 = arith.addf %378, %381 : vector<8x512xf32>
      %383 = vector.extract_strided_slice %382 {offsets = [0, 0], sizes = [8, 128], strides = [1, 1]} : vector<8x512xf32> to vector<8x128xf32>
      %384 = arith.negf %383 : vector<8x128xf32>
      %385 = math.exp %384 : vector<8x128xf32>
      %cst_110 = arith.constant 1.000000e+00 : f32
      %386 = vector.broadcast %cst_110 : f32 to vector<8x128xf32>
      %387 = arith.addf %386, %385 : vector<8x128xf32>
      %388 = arith.divf %386, %387 : vector<8x128xf32>
      %389 = vector.extract_strided_slice %382 {offsets = [0, 128], sizes = [8, 128], strides = [1, 1]} : vector<8x512xf32> to vector<8x128xf32>
      %390 = arith.negf %389 : vector<8x128xf32>
      %391 = math.exp %390 : vector<8x128xf32>
      %cst_111 = arith.constant 1.000000e+00 : f32
      %392 = vector.broadcast %cst_111 : f32 to vector<8x128xf32>
      %393 = arith.addf %392, %391 : vector<8x128xf32>
      %394 = arith.divf %392, %393 : vector<8x128xf32>
      %395 = vector.extract_strided_slice %382 {offsets = [0, 256], sizes = [8, 128], strides = [1, 1]} : vector<8x512xf32> to vector<8x128xf32>
      %396 = math.tanh %395 : vector<8x128xf32>
      %397 = vector.extract_strided_slice %382 {offsets = [0, 384], sizes = [8, 128], strides = [1, 1]} : vector<8x512xf32> to vector<8x128xf32>
      %398 = arith.negf %397 : vector<8x128xf32>
      %399 = math.exp %398 : vector<8x128xf32>
      %cst_112 = arith.constant 1.000000e+00 : f32
      %400 = vector.broadcast %cst_112 : f32 to vector<8x128xf32>
      %401 = arith.addf %400, %399 : vector<8x128xf32>
      %402 = arith.divf %400, %401 : vector<8x128xf32>
      %403 = arith.mulf %394, %360 : vector<8x128xf32>
      %404 = arith.mulf %388, %396 : vector<8x128xf32>
      %405 = arith.addf %403, %404 : vector<8x128xf32>
      %406 = math.tanh %405 : vector<8x128xf32>
      %407 = arith.mulf %402, %406 : vector<8x128xf32>
      %408 = vector.shape_cast %375 : vector<8x1xi1> to vector<8x1xi1>
      %409 = vector.broadcast %408 : vector<8x1xi1> to vector<8x128xi1>
      %410 = arith.select %409, %405, %360 : vector<8x128xi1>, vector<8x128xf32>
      %411 = vector.shape_cast %375 : vector<8x1xi1> to vector<8x1xi1>
      %412 = vector.broadcast %411 : vector<8x1xi1> to vector<8x128xi1>
      %413 = arith.select %412, %407, %363 : vector<8x128xi1>, vector<8x128xf32>
      %cst_113 = arith.constant 0.000000e+00 : f32
      %414 = vector.broadcast %cst_113 : f32 to vector<8x128xf32>
      %415 = vector.shape_cast %375 : vector<8x1xi1> to vector<8x1xi1>
      %416 = vector.broadcast %415 : vector<8x1xi1> to vector<8x128xi1>
      %417 = arith.select %416, %407, %414 : vector<8x128xi1>, vector<8x128xf32>
      %418 = arith.truncf %417 : vector<8x128xf32> to vector<8x128xbf16>
      %c0_114 = arith.constant 0 : index
      %c0_115 = arith.constant 0 : index
      %c0_116 = arith.constant 0 : index
      %419 = vector.load %arg9[%c0_114, %c0_115, %c0_116] : memref<8x8x128xbf16, #tpu.memory_space<vmem>>, vector<1x8x128xbf16>
      %420 = vector.shape_cast %419 : vector<1x8x128xbf16> to vector<8x128xbf16>
      %421 = vector.shape_cast %418 : vector<8x128xbf16> to vector<1x8x128xbf16>
      tpu.vector_store %arg9[%c0_114, %c0_115, %c0_116], %421 {strides = array<i32>} : memref<8x8x128xbf16, #tpu.memory_space<vmem>>, vector<1x8x128xbf16>,
      %c0_117 = arith.constant 0 : index
      %c0_118 = arith.constant 0 : index
      %422 = vector.load %arg12[%c0_117, %c0_118] : memref<8x128xf32, #tpu.memory_space<vmem>>, vector<8x128xf32>
      tpu.vector_store %arg12[%c0_117, %c0_118], %413 {strides = array<i32>} : memref<8x128xf32, #tpu.memory_space<vmem>>, vector<8x128xf32>,
      %c0_119 = arith.constant 0 : index
      %c0_120 = arith.constant 0 : index
      %423 = vector.load %arg13[%c0_119, %c0_120] : memref<8x128xf32, #tpu.memory_space<vmem>>, vector<8x128xf32>
      tpu.vector_store %arg13[%c0_119, %c0_120], %410 {strides = array<i32>} : memref<8x128xf32, #tpu.memory_space<vmem>>, vector<8x128xf32>,
    } else {
    }
    %true_6 = arith.constant true
    %17 = arith.xori %14, %true_6 : i1
    %18 = arith.extui %17 : i1 to i32
    %c0_i32_7 = arith.constant 0 : i32
    %19 = arith.cmpi ne, %18, %c0_i32_7 : i32
    scf.if %19 {
      %cst = arith.constant 0.000000e+00 : bf16
      %20 = vector.broadcast %cst : bf16 to vector<8x8x128xbf16>
      %c0_8 = arith.constant 0 : index
      %c0_9 = arith.constant 0 : index
      %c0_10 = arith.constant 0 : index
      %21 = vector.load %arg9[%c0_8, %c0_9, %c0_10] : memref<8x8x128xbf16, #tpu.memory_space<vmem>>, vector<8x8x128xbf16>
      tpu.vector_store %arg9[%c0_8, %c0_9, %c0_10], %20 {strides = array<i32>} : memref<8x8x128xbf16, #tpu.memory_space<vmem>>, vector<8x8x128xbf16>,
    } else {
    }
    return
  }
  func.func @transform_0(%arg0: i32, %arg1: i32, %arg2: memref<1xi32, #tpu.memory_space<smem>>) -> (i32, i32) {
    %c0_i32 = arith.constant 0 : i32
    %c0_i32_0 = arith.constant 0 : i32
    return %arg0, %c0_i32 : i32, i32
  }
  func.func @transform_1(%arg0: i32, %arg1: i32, %arg2: memref<1xi32, #tpu.memory_space<smem>>) -> (i32, i32, i32) {
    %c0_i32 = arith.constant 0 : i32
    %c0_i32_0 = arith.constant 0 : i32
    return %arg1, %arg0, %c0_i32 : i32, i32, i32
  }
  func.func @transform_2(%arg0: i32, %arg1: i32, %arg2: memref<1xi32, #tpu.memory_space<smem>>) -> (i32, i32, i32) {
    %c0_i32 = arith.constant 0 : i32
    %0 = arith.subi %c0_i32, %arg1 : i32
    %c0_i32_0 = arith.constant 0 : i32
    %c0_i32_1 = arith.constant 0 : i32
    return %0, %arg0, %c0_i32_0 : i32, i32, i32
  }
  func.func @transform_3(%arg0: i32, %arg1: i32, %arg2: memref<1xi32, #tpu.memory_space<smem>>) -> (i32, i32) {
    %c0_i32 = arith.constant 0 : i32
    %c0_i32_0 = arith.constant 0 : i32
    %c0_i32_1 = arith.constant 0 : i32
    return %c0_i32, %c0_i32_0 : i32, i32
  }
  func.func @transform_4(%arg0: i32, %arg1: i32, %arg2: memref<1xi32, #tpu.memory_space<smem>>) -> (i32, i32) {
    %c0_i32 = arith.constant 0 : i32
    %c0_i32_0 = arith.constant 0 : i32
    %c0_i32_1 = arith.constant 0 : i32
    return %c0_i32, %c0_i32_0 : i32, i32
  }
  func.func @transform_5(%arg0: i32, %arg1: i32, %arg2: memref<1xi32, #tpu.memory_space<smem>>) -> (i32, i32, i32) {
    %c0_i32 = arith.constant 0 : i32
    %c0_i32_0 = arith.constant 0 : i32
    return %arg1, %arg0, %c0_i32 : i32, i32, i32
  }
  func.func @transform_6(%arg0: i32, %arg1: i32, %arg2: memref<1xi32, #tpu.memory_space<smem>>) -> (i32, i32, i32) {
    %c0_i32 = arith.constant 0 : i32
    %0 = arith.subi %c0_i32, %arg1 : i32
    %c0_i32_0 = arith.constant 0 : i32
    %c0_i32_1 = arith.constant 0 : i32
    return %0, %arg0, %c0_i32_0 : i32, i32, i32
  }
}

</mosaic_0001>

<llo_original>
// kernel: sentence_encoder_forward.2
$region0: #{sentence_encoder_forward.2}
  #allocation0 [shape = 'u32[]', space=smem, size = 0x4, offset = 0x4, fixed_abs, tag = 'smem constant byte address 0x4 - core index']
  #allocation1 [shape = 'u32[144,128]{1,0:T(1,128)}', space=vmem, size = 0x12000, scoped, tag = 'internal scratch']
  #allocation2 [shape = 'f32[8,128]{1,0:T(8,128)}', space=vmem, size = 0x1000, scoped, tag = 'scratch operand']
  #allocation3 [shape = 'f32[8,128]{1,0:T(8,128)}', space=vmem, size = 0x1000, scoped, tag = 'scratch operand']
  #allocation4 [shape = 'f32[8,128]{1,0:T(8,128)}', space=vmem, size = 0x1000, scoped, tag = 'scratch operand']
  #allocation5 [shape = 'f32[8,128]{1,0:T(8,128)}', space=vmem, size = 0x1000, scoped, tag = 'scratch operand']
  #allocation6 [shape = 's32[1]{0}', space=sflag, size = 0x4, scoped, tag = 'scoped memory for sentence_encoder_forward.2']
  #allocation7 [shape = 's32[1]{0:T(128)S(6)}', space=smem, size = 0x200, scoped, tag = 'prefetched SMEM operand 0']
  %s0 = inlined_call_operand.<no memory space> [shape: s32[1], index: 0, kind: input, shape index: {}]
  %s1 = inlined_call_operand.vmem [shape: s32[8,1], index: 1, kind: input, shape index: {}]
  %s2 = inlined_call_operand.vmem [shape: bf16[8,8,512], index: 2, kind: input, shape index: {}]
  %s3 = inlined_call_operand.vmem [shape: bf16[8,8,512], index: 3, kind: input, shape index: {}]
  %s4 = inlined_call_operand.vmem [shape: bf16[128,512], index: 4, kind: input, shape index: {}]
  %s5 = inlined_call_operand.vmem [shape: bf16[128,512], index: 5, kind: input, shape index: {}]
  %s6 = inlined_call_operand.vmem [shape: bf16[8,8,128], index: 6, kind: output, shape index: {0}]
  %s7 = inlined_call_operand.vmem [shape: bf16[8,8,128], index: 7, kind: output, shape index: {1}]
  %8 = xla_tuple %s6, %s7
  %s9 = sld [smem:[#allocation0]]
  $region58: #{sentence_encoder_forward.2} parent=0
    _
  %s11 = ssub.s32 1, %s9
  %s12 = scalar_select 0, %s11, %s9
  %13 = sst [smem:[#allocation7]] %s0
  // Predicated region
  $region2: #{sentence_encoder_forward.2} parent=0 // pred_check
    _
  $region3: #{sentence_encoder_forward.2} parent=0 // pred_check_branch
    %15 = sbr.rel (0) target = $region5
  $region4: #{sentence_encoder_forward.2} parent=0 // pred_region
    _
  $region5: #{sentence_encoder_forward.2} parent=0 // pred_fallthru
    _
  // Predicated region
  $region6: #{sentence_encoder_forward.2} parent=0 // pred_check
    _
  $region7: #{sentence_encoder_forward.2} parent=0 // pred_check_branch
    %17 = sbr.rel (0) target = $region9
  $region8: #{sentence_encoder_forward.2} parent=0 // pred_region
    _
  $region9: #{sentence_encoder_forward.2} parent=0 // pred_fallthru
    _
  // Predicated region
  $region10: #{sentence_encoder_forward.2} parent=0 // pred_check
    _
  $region11: #{sentence_encoder_forward.2} parent=0 // pred_check_branch
    %19 = sbr.rel (0) target = $region13
  $region12: #{sentence_encoder_forward.2} parent=0 // pred_region
    %s20 = ssub.s32 0, 0
    %s21 = smul.u32 8, %s20
    %p22 = scmp.lt.s32.totalorder %s21, 7
    %s23 = scalar_select %p22, %s21, 7
    %s24 = smul.addr %s23, 4
    %s25 = smul.addr %s24, 4
    %s26 = scalar_lea.vmem %s3, %s25
    %s27 = ssub.s32 0, 0
    %s28 = smul.u32 8, %s27
  $region13: #{sentence_encoder_forward.2} parent=0 // pred_fallthru
    _
  // Predicated region
  $region14: #{sentence_encoder_forward.2} parent=0 // pred_check
    _
  $region15: #{sentence_encoder_forward.2} parent=0 // pred_check_branch
    %30 = sbr.rel (0) target = $region17
  $region16: #{sentence_encoder_forward.2} parent=0 // pred_region
    _
  $region17: #{sentence_encoder_forward.2} parent=0 // pred_fallthru
    _
  // Predicated region
  $region18: #{sentence_encoder_forward.2} parent=0 // pred_check
    _
  $region19: #{sentence_encoder_forward.2} parent=0 // pred_check_branch
    %32 = sbr.rel (0) target = $region21
  $region20: #{sentence_encoder_forward.2} parent=0 // pred_region
    _
  $region21: #{sentence_encoder_forward.2} parent=0 // pred_fallthru
    _
  %s33 = ssub.s32 0, 0
  %s34 = smul.u32 8, %s33
  %p35 = scmp.lt.s32.totalorder %s34, 7
  %s36 = scalar_select %p35, %s34, 7
  %s37 = smul.addr %s36, 4
  %s38 = smul.addr %s37, 4
  %s39 = scalar_lea.vmem %s3, %s38
  %s40 = ssub.s32 0, 0
  %s41 = smul.u32 8, %s40
  %p42 = scmp.lt.s32.totalorder %s41, 7
  %s43 = scalar_select %p42, %s41, 7
  %s44 = smul.addr %s43, 4
  %s45 = scalar_lea.vmem %s7, %s44
  %s46 = ssub.s32 0, 0
  %s47 = smul.u32 8, %s46
  %p48 = scmp.lt.s32.totalorder %s47, 7
  %s49 = scalar_select %p48, %s47, 7
  %s50 = smul.addr %s49, 4
  %s51 = smul.addr %s50, 4
  %s52 = scalar_lea.vmem %s3, %s51
  %s53 = ssub.s32 0, 0
  %s54 = smul.u32 8, %s53
  %s55 = ssub.s32 0, 0
  %s56 = smul.u32 8, %s55
  %p57 = scmp.lt.s32.totalorder %s56, 7
  %s58 = scalar_select %p57, %s56, 7
  %s59 = smul.addr %s58, 4
  %s60 = scalar_lea.vmem %s7, %s59
  %s61 = ssub.s32 0, 0
  %s62 = smul.u32 8, %s61
  %s64 = smul.u32 0, 8
  %s65 = sld [smem:[#allocation7]]
  %p66 = scmp.eq.s32.totalorder 0, 0
  // Predicated region
  $region22: #{sentence_encoder_forward.2} parent=0 // pred_check
    %p67 = pneg %p66
  $region23: #{sentence_encoder_forward.2} parent=0 // pred_check_branch
    %69 = sbr.rel (%p67) target = $region25
  $region24: #{sentence_encoder_forward.2} parent=0 // pred_region
    %70 = vst [vmem:[#allocation2] sm:$0xff] 0.0
    %71 = vst [vmem:[#allocation3] sm:$0xff] 0.0
    %72 = vst [vmem:[#allocation4] sm:$0xff] 0.0
    %73 = vst [vmem:[#allocation5] sm:$0xff] 0.0
  $region25: #{sentence_encoder_forward.2} parent=0 // pred_fallthru
    _
  %v74 = vld [vmem:[%s1] sm:$0xff]
  %p75 = scmp.lt.s32.totalorder %s64, %s65
  // Predicated region
  $region26: #{sentence_encoder_forward.2} parent=0 // pred_check
    %p76 = pneg %p75
  $region27: #{sentence_encoder_forward.2} parent=0 // pred_check_branch
    %78 = sbr.rel (%p76) target = $region29
  $region28: #{sentence_encoder_forward.2} parent=0 // pred_region
    %v79 = vld [vmem:[#allocation2] sm:$0xff]
    %v80 = vld [vmem:[#allocation3] sm:$0xff]
    %v81 = vstv %s64
    %vm82 = vcmp.lt.s32.totalorder %v81, %v74
    %v83 = vld [vmem:[%s2] sm:$0xff]
    %v84 = vld [vmem:[%s2 + $0x8] sm:$0xff]
    %v85 = vunpack.c.l.bf16 %v83
    %v86 = vunpack.c.h.bf16 %v83
    %v87 = vunpack.c.l.bf16 %v84
    %v88 = vunpack.c.h.bf16 %v84
    %v89 = vpack.c.bf16 %v79, %v79
    %v90 = vld [vmem:[%s4] sm:$0xff]
    %v91 = vld [vmem:[%s4 + $0x8] sm:$0xff]
    %v92 = vld [vmem:[%s4 + $0x10] sm:$0xff]
    %v93 = vld [vmem:[%s4 + $0x18] sm:$0xff]
    %v94 = vld [vmem:[%s4 + $0x20] sm:$0xff]
    %v95 = vld [vmem:[%s4 + $0x28] sm:$0xff]
    %v96 = vld [vmem:[%s4 + $0x30] sm:$0xff]
    %v97 = vld [vmem:[%s4 + $0x38] sm:$0xff]
    %v98 = vld [vmem:[%s4 + $0x40] sm:$0xff]
    %v99 = vld [vmem:[%s4 + $0x48] sm:$0xff]
    %v100 = vld [vmem:[%s4 + $0x50] sm:$0xff]
    %v101 = vld [vmem:[%s4 + $0x58] sm:$0xff]
    %v102 = vld [vmem:[%s4 + $0x60] sm:$0xff]
    %v103 = vld [vmem:[%s4 + $0x68] sm:$0xff]
    %v104 = vld [vmem:[%s4 + $0x70] sm:$0xff]
    %v105 = vld [vmem:[%s4 + $0x78] sm:$0xff]
    %v106 = vld [vmem:[%s4 + $0x80] sm:$0xff]
    %v107 = vld [vmem:[%s4 + $0x88] sm:$0xff]
    %v108 = vld [vmem:[%s4 + $0x90] sm:$0xff]
    %v109 = vld [vmem:[%s4 + $0x98] sm:$0xff]
    %v110 = vld [vmem:[%s4 + $0xa0] sm:$0xff]
    %v111 = vld [vmem:[%s4 + $0xa8] sm:$0xff]
    %v112 = vld [vmem:[%s4 + $0xb0] sm:$0xff]
    %v113 = vld [vmem:[%s4 + $0xb8] sm:$0xff]
    %v114 = vld [vmem:[%s4 + $0xc0] sm:$0xff]
    %v115 = vld [vmem:[%s4 + $0xc8] sm:$0xff]
    %v116 = vld [vmem:[%s4 + $0xd0] sm:$0xff]
    %v117 = vld [vmem:[%s4 + $0xd8] sm:$0xff]
    %v118 = vld [vmem:[%s4 + $0xe0] sm:$0xff]
    %v119 = vld [vmem:[%s4 + $0xe8] sm:$0xff]
    %v120 = vld [vmem:[%s4 + $0xf0] sm:$0xff]
    %v121 = vld [vmem:[%s4 + $0xf8] sm:$0xff]
    %v154 = vunpack.c.l.b16 %v90
    %v155 = vunpack.c.h.b16 %v90
    %v156 = vunpack.c.l.b16 %v91
    %v157 = vunpack.c.h.b16 %v91
    %v158 = vunpack.c.l.b16 %v92
    %v159 = vunpack.c.h.b16 %v92
    %v160 = vunpack.c.l.b16 %v93
    %v161 = vunpack.c.h.b16 %v93
    %v162 = vunpack.c.l.b16 %v94
    %v163 = vunpack.c.h.b16 %v94
    %v164 = vunpack.c.l.b16 %v95
    %v165 = vunpack.c.h.b16 %v95
    %v166 = vunpack.c.l.b16 %v96
    %v167 = vunpack.c.h.b16 %v96
    %v168 = vunpack.c.l.b16 %v97
    %v169 = vunpack.c.h.b16 %v97
    %v170 = vunpack.c.l.b16 %v98
    %v171 = vunpack.c.h.b16 %v98
    %v172 = vunpack.c.l.b16 %v99
    %v173 = vunpack.c.h.b16 %v99
    %v174 = vunpack.c.l.b16 %v100
    %v175 = vunpack.c.h.b16 %v100
    %v176 = vunpack.c.l.b16 %v101
    %v177 = vunpack.c.h.b16 %v101
    %v178 = vunpack.c.l.b16 %v102
    %v179 = vunpack.c.h.b16 %v102
    %v180 = vunpack.c.l.b16 %v103
    %v181 = vunpack.c.h.b16 %v103
    %v182 = vunpack.c.l.b16 %v104
    %v183 = vunpack.c.h.b16 %v104
    %v184 = vunpack.c.l.b16 %v105
    %v185 = vunpack.c.h.b16 %v105
    %v186 = vunpack.c.l.b16 %v106
    %v187 = vunpack.c.h.b16 %v106
    %v188 = vunpack.c.l.b16 %v107
    %v189 = vunpack.c.h.b16 %v107
    %v190 = vunpack.c.l.b16 %v108
    %v191 = vunpack.c.h.b16 %v108
    %v192 = vunpack.c.l.b16 %v109
    %v193 = vunpack.c.h.b16 %v109
    %v194 = vunpack.c.l.b16 %v110
    %v195 = vunpack.c.h.b16 %v110
    %v196 = vunpack.c.l.b16 %v111
    %v197 = vunpack.c.h.b16 %v111
    %v198 = vunpack.c.l.b16 %v112
    %v199 = vunpack.c.h.b16 %v112
    %v200 = vunpack.c.l.b16 %v113
    %v201 = vunpack.c.h.b16 %v113
    %v202 = vunpack.c.l.b16 %v114
    %v203 = vunpack.c.h.b16 %v114
    %v204 = vunpack.c.l.b16 %v115
    %v205 = vunpack.c.h.b16 %v115
    %v206 = vunpack.c.l.b16 %v116
    %v207 = vunpack.c.h.b16 %v116
    %v208 = vunpack.c.l.b16 %v117
    %v209 = vunpack.c.h.b16 %v117
    %v210 = vunpack.c.l.b16 %v118
    %v211 = vunpack.c.h.b16 %v118
    %v212 = vunpack.c.l.b16 %v119
    %v213 = vunpack.c.h.b16 %v119
    %v214 = vunpack.c.l.b16 %v120
    %v215 = vunpack.c.h.b16 %v120
    %v216 = vunpack.c.l.b16 %v121
    %v217 = vunpack.c.h.b16 %v121
    %v218 = vpack.c.b16 %v158, %v154
    %v219 = vpack.c.b16 %v159, %v155
    %v220 = vpack.c.b16 %v160, %v156
    %v221 = vpack.c.b16 %v161, %v157
    %v222 = vpack.c.b16 %v166, %v162
    %v223 = vpack.c.b16 %v167, %v163
    %v224 = vpack.c.b16 %v168, %v164
    %v225 = vpack.c.b16 %v169, %v165
    %v226 = vpack.c.b16 %v174, %v170
    %v227 = vpack.c.b16 %v175, %v171
    %v228 = vpack.c.b16 %v176, %v172
    %v229 = vpack.c.b16 %v177, %v173
    %v230 = vpack.c.b16 %v182, %v178
    %v231 = vpack.c.b16 %v183, %v179
    %v232 = vpack.c.b16 %v184, %v180
    %v233 = vpack.c.b16 %v185, %v181
    %v234 = vpack.c.b16 %v190, %v186
    %v235 = vpack.c.b16 %v191, %v187
    %v236 = vpack.c.b16 %v192, %v188
    %v237 = vpack.c.b16 %v193, %v189
    %v238 = vpack.c.b16 %v198, %v194
    %v239 = vpack.c.b16 %v199, %v195
    %v240 = vpack.c.b16 %v200, %v196
    %v241 = vpack.c.b16 %v201, %v197
    %v242 = vpack.c.b16 %v206, %v202
    %v243 = vpack.c.b16 %v207, %v203
    %v244 = vpack.c.b16 %v208, %v204
    %v245 = vpack.c.b16 %v209, %v205
    %v246 = vpack.c.b16 %v214, %v210
    %v247 = vpack.c.b16 %v215, %v211
    %v248 = vpack.c.b16 %v216, %v212
    %v249 = vpack.c.b16 %v217, %v213
    %282 = vmatprep.subr.bf16.mxu0 %v219
    %283 = vmatpush1.bf16.msra.mxu0 %v218
    %284 = vmatprep.subr.bf16.mxu0 %v223
    %285 = vmatpush1.bf16.msra.mxu0 %v222
    %286 = vmatprep.subr.bf16.mxu0 %v227
    %287 = vmatpush1.bf16.msra.mxu0 %v226
    %288 = vmatprep.subr.bf16.mxu0 %v231
    %289 = vmatpush1.bf16.msra.mxu0 %v230
    %290 = vmatprep.subr.bf16.mxu0 %v235
    %291 = vmatpush1.bf16.msra.mxu0 %v234
    %292 = vmatprep.subr.bf16.mxu0 %v239
    %293 = vmatpush1.bf16.msra.mxu0 %v238
    %294 = vmatprep.subr.bf16.mxu0 %v243
    %295 = vmatpush1.bf16.msra.mxu0 %v242
    %296 = vmatprep.subr.bf16.mxu0 %v247
    %297 = vmatpush1.bf16.msra.mxu0 %v246
    %298 = vmatprep.subr.bf16.mxu0 0
    %299 = vmatpush1.bf16.msra.mxu0 0
    %300 = vmatprep.subr.bf16.mxu0 0
    %301 = vmatpush1.bf16.msra.mxu0 0
    %302 = vmatprep.subr.bf16.mxu0 0
    %303 = vmatpush1.bf16.msra.mxu0 0
    %304 = vmatprep.subr.bf16.mxu0 0
    %305 = vmatpush1.bf16.msra.mxu0 0
    %306 = vmatprep.subr.bf16.mxu0 0
    %307 = vmatpush1.bf16.msra.mxu0 0
    %308 = vmatprep.subr.bf16.mxu0 0
    %309 = vmatpush1.bf16.msra.mxu0 0
    %310 = vmatprep.subr.bf16.mxu0 0
    %311 = vmatpush1.bf16.msra.mxu0 0
    %312 = vmatprep.subr.bf16.mxu0 0
    %313 = vmatpush1.bf16.msra.mxu0 0
    %314 = vmatprep.mubr.bf16.mxu0 0
    %315 = vmatmul.mubr.bf16.gmra.mrb[0].mxu0 %v89
    %v316 = vpop.f32.mrb[0].mxu0
    %v317 = vadd.f32 0.0, %v316
    %v318 = vpop.f32.mrb[0].mxu0
    %v319 = vadd.f32 0.0, %v318
    %v320 = vpop.f32.mrb[0].mxu0
    %v321 = vpop.f32.mrb[0].mxu0
    %322 = vdwg.mxu0
    %323 = vmatprep.subr.bf16.mxu0 %v221
    %324 = vmatpush1.bf16.msra.mxu0 %v220
    %325 = vmatprep.subr.bf16.mxu0 %v225
    %326 = vmatpush1.bf16.msra.mxu0 %v224
    %327 = vmatprep.subr.bf16.mxu0 %v229
    %328 = vmatpush1.bf16.msra.mxu0 %v228
    %329 = vmatprep.subr.bf16.mxu0 %v233
    %330 = vmatpush1.bf16.msra.mxu0 %v232
    %331 = vmatprep.subr.bf16.mxu0 %v237
    %332 = vmatpush1.bf16.msra.mxu0 %v236
    %333 = vmatprep.subr.bf16.mxu0 %v241
    %334 = vmatpush1.bf16.msra.mxu0 %v240
    %335 = vmatprep.subr.bf16.mxu0 %v245
    %336 = vmatpush1.bf16.msra.mxu0 %v244
    %337 = vmatprep.subr.bf16.mxu0 %v249
    %338 = vmatpush1.bf16.msra.mxu0 %v248
    %339 = vmatprep.subr.bf16.mxu0 0
    %340 = vmatpush1.bf16.msra.mxu0 0
    %341 = vmatprep.subr.bf16.mxu0 0
    %342 = vmatpush1.bf16.msra.mxu0 0
    %343 = vmatprep.subr.bf16.mxu0 0
    %344 = vmatpush1.bf16.msra.mxu0 0
    %345 = vmatprep.subr.bf16.mxu0 0
    %346 = vmatpush1.bf16.msra.mxu0 0
    %347 = vmatprep.subr.bf16.mxu0 0
    %348 = vmatpush1.bf16.msra.mxu0 0
    %349 = vmatprep.subr.bf16.mxu0 0
    %350 = vmatpush1.bf16.msra.mxu0 0
    %351 = vmatprep.subr.bf16.mxu0 0
    %352 = vmatpush1.bf16.msra.mxu0 0
    %353 = vmatprep.subr.bf16.mxu0 0
    %354 = vmatpush1.bf16.msra.mxu0 0
    %355 = vmatprep.mubr.bf16.mxu0 0
    %356 = vmatmul.mubr.bf16.gmra.mrb[0].mxu0 %v89
    %v357 = vpop.f32.mrb[0].mxu0
    %v358 = vadd.f32 0.0, %v357
    %v359 = vpop.f32.mrb[0].mxu0
    %v360 = vadd.f32 0.0, %v359
    %v361 = vpop.f32.mrb[0].mxu0
    %v362 = vpop.f32.mrb[0].mxu0
    %363 = vdwg.mxu0
    %v364 = vadd.f32 %v85, %v317
    %v365 = vadd.f32 %v86, %v319
    %v366 = vadd.f32 %v87, %v358
    %v367 = vadd.f32 %v88, %v360
    %v368 = vxor.u32 %v364, 2147483648
    %v369 = vmul.f32 %v368, 1.442695
    %v370 = vpow.pop %v369
    %v371 = vadd.f32 %v370, 1.0
    %v372 = vrcp.pop %v371
    %v373 = vmul.f32 1.0, %v372
    %v374 = vxor.u32 %v365, 2147483648
    %v375 = vmul.f32 %v374, 1.442695
    %v376 = vpow.pop %v375
    %v377 = vadd.f32 %v376, 1.0
    %v378 = vrcp.pop %v377
    %v379 = vmul.f32 1.0, %v378
    %v380 = vtanh.pop %v366
    %v381 = vxor.u32 %v367, 2147483648
    %v382 = vmul.f32 %v381, 1.442695
    %v383 = vpow.pop %v382
    %v384 = vadd.f32 %v383, 1.0
    %v385 = vrcp.pop %v384
    %v386 = vmul.f32 1.0, %v385
    %v387 = vmul.f32 %v379, %v80
    %v388 = vmul.f32 %v373, %v380
    %v389 = vadd.f32 %v387, %v388
    %v390 = vtanh.pop %v389
    %v391 = vmul.f32 %v386, %v390
    %v392 = vsel %vm82, 1, 0
    %393 = vset.pattern.permute.xlu0 0
    %394 = vperm.xlu0 %393, %v392
    %v395 = vpop.permute.xlu0 %394
    %vm396 = vcmp.eq.s32.totalorder %v395, 1
    %v397 = vsel %vm396, %v389, %v80
    %v398 = vsel %vm396, %v391, %v79
    %v399 = vsel %vm396, %v391, 0.0
    %v400 = vpack.c.bf16 %v399, %v399
    %401 = vst [vmem:[%s6] sm:$0xf] %v400
    %s402 = sadd.s32 %s64, 1
    %v403 = vstv %s402
    %vm404 = vcmp.lt.s32.totalorder %v403, %v74
    %s405 = scalar_lea.vmem %s2, 16
    %v406 = vld [vmem:[%s405] sm:$0xff]
    %v407 = vld [vmem:[%s405 + $0x8] sm:$0xff]
    %v408 = vunpack.c.l.bf16 %v406
    %v409 = vunpack.c.h.bf16 %v406
    %v410 = vunpack.c.l.bf16 %v407
    %v411 = vunpack.c.h.bf16 %v407
    %v412 = vpack.c.bf16 %v398, %v398
    %v413 = vld [vmem:[%s4] sm:$0xff]
    %v414 = vld [vmem:[%s4 + $0x8] sm:$0xff]
    %v415 = vld [vmem:[%s4 + $0x10] sm:$0xff]
    %v416 = vld [vmem:[%s4 + $0x18] sm:$0xff]
    %v417 = vld [vmem:[%s4 + $0x20] sm:$0xff]
    %v418 = vld [vmem:[%s4 + $0x28] sm:$0xff]
    %v419 = vld [vmem:[%s4 + $0x30] sm:$0xff]
    %v420 = vld [vmem:[%s4 + $0x38] sm:$0xff]
    %v421 = vld [vmem:[%s4 + $0x40] sm:$0xff]
    %v422 = vld [vmem:[%s4 + $0x48] sm:$0xff]
    %v423 = vld [vmem:[%s4 + $0x50] sm:$0xff]
    %v424 = vld [vmem:[%s4 + $0x58] sm:$0xff]
    %v425 = vld [vmem:[%s4 + $0x60] sm:$0xff]
    %v426 = vld [vmem:[%s4 + $0x68] sm:$0xff]
    %v427 = vld [vmem:[%s4 + $0x70] sm:$0xff]
    %v428 = vld [vmem:[%s4 + $0x78] sm:$0xff]
    %v429 = vld [vmem:[%s4 + $0x80] sm:$0xff]
    %v430 = vld [vmem:[%s4 + $0x88] sm:$0xff]
    %v431 = vld [vmem:[%s4 + $0x90] sm:$0xff]
    %v432 = vld [vmem:[%s4 + $0x98] sm:$0xff]
    %v433 = vld [vmem:[%s4 + $0xa0] sm:$0xff]
    %v434 = vld [vmem:[%s4 + $0xa8] sm:$0xff]
    %v435 = vld [vmem:[%s4 + $0xb0] sm:$0xff]
    %v436 = vld [vmem:[%s4 + $0xb8] sm:$0xff]
    %v437 = vld [vmem:[%s4 + $0xc0] sm:$0xff]
    %v438 = vld [vmem:[%s4 + $0xc8] sm:$0xff]
    %v439 = vld [vmem:[%s4 + $0xd0] sm:$0xff]
    %v440 = vld [vmem:[%s4 + $0xd8] sm:$0xff]
    %v441 = vld [vmem:[%s4 + $0xe0] sm:$0xff]
    %v442 = vld [vmem:[%s4 + $0xe8] sm:$0xff]
    %v443 = vld [vmem:[%s4 + $0xf0] sm:$0xff]
    %v444 = vld [vmem:[%s4 + $0xf8] sm:$0xff]
    %v477 = vunpack.c.l.b16 %v413
    %v478 = vunpack.c.h.b16 %v413
    %v479 = vunpack.c.l.b16 %v414
    %v480 = vunpack.c.h.b16 %v414
    %v481 = vunpack.c.l.b16 %v415
    %v482 = vunpack.c.h.b16 %v415
    %v483 = vunpack.c.l.b16 %v416
    %v484 = vunpack.c.h.b16 %v416
    %v485 = vunpack.c.l.b16 %v417
    %v486 = vunpack.c.h.b16 %v417
    %v487 = vunpack.c.l.b16 %v418
    %v488 = vunpack.c.h.b16 %v418
    %v489 = vunpack.c.l.b16 %v419
    %v490 = vunpack.c.h.b16 %v419
    %v491 = vunpack.c.l.b16 %v420
    %v492 = vunpack.c.h.b16 %v420
    %v493 = vunpack.c.l.b16 %v421
    %v494 = vunpack.c.h.b16 %v421
    %v495 = vunpack.c.l.b16 %v422
    %v496 = vunpack.c.h.b16 %v422
    %v497 = vunpack.c.l.b16 %v423
    %v498 = vunpack.c.h.b16 %v423
    %v499 = vunpack.c.l.b16 %v424
    %v500 = vunpack.c.h.b16 %v424
    %v501 = vunpack.c.l.b16 %v425
    %v502 = vunpack.c.h.b16 %v425
    %v503 = vunpack.c.l.b16 %v426
    %v504 = vunpack.c.h.b16 %v426
    %v505 = vunpack.c.l.b16 %v427
    %v506 = vunpack.c.h.b16 %v427
    %v507 = vunpack.c.l.b16 %v428
    %v508 = vunpack.c.h.b16 %v428
    %v509 = vunpack.c.l.b16 %v429
    %v510 = vunpack.c.h.b16 %v429
    %v511 = vunpack.c.l.b16 %v430
    %v512 = vunpack.c.h.b16 %v430
    %v513 = vunpack.c.l.b16 %v431
    %v514 = vunpack.c.h.b16 %v431
    %v515 = vunpack.c.l.b16 %v432
    %v516 = vunpack.c.h.b16 %v432
    %v517 = vunpack.c.l.b16 %v433
    %v518 = vunpack.c.h.b16 %v433
    %v519 = vunpack.c.l.b16 %v434
    %v520 = vunpack.c.h.b16 %v434
    %v521 = vunpack.c.l.b16 %v435
    %v522 = vunpack.c.h.b16 %v435
    %v523 = vunpack.c.l.b16 %v436
    %v524 = vunpack.c.h.b16 %v436
    %v525 = vunpack.c.l.b16 %v437
    %v526 = vunpack.c.h.b16 %v437
    %v527 = vunpack.c.l.b16 %v438
    %v528 = vunpack.c.h.b16 %v438
    %v529 = vunpack.c.l.b16 %v439
    %v530 = vunpack.c.h.b16 %v439
    %v531 = vunpack.c.l.b16 %v440
    %v532 = vunpack.c.h.b16 %v440
    %v533 = vunpack.c.l.b16 %v441
    %v534 = vunpack.c.h.b16 %v441
    %v535 = vunpack.c.l.b16 %v442
    %v536 = vunpack.c.h.b16 %v442
    %v537 = vunpack.c.l.b16 %v443
    %v538 = vunpack.c.h.b16 %v443
    %v539 = vunpack.c.l.b16 %v444
    %v540 = vunpack.c.h.b16 %v444
    %v541 = vpack.c.b16 %v481, %v477
    %v542 = vpack.c.b16 %v482, %v478
    %v543 = vpack.c.b16 %v483, %v479
    %v544 = vpack.c.b16 %v484, %v480
    %v545 = vpack.c.b16 %v489, %v485
    %v546 = vpack.c.b16 %v490, %v486
    %v547 = vpack.c.b16 %v491, %v487
    %v548 = vpack.c.b16 %v492, %v488
    %v549 = vpack.c.b16 %v497, %v493
    %v550 = vpack.c.b16 %v498, %v494
    %v551 = vpack.c.b16 %v499, %v495
    %v552 = vpack.c.b16 %v500, %v496
    %v553 = vpack.c.b16 %v505, %v501
    %v554 = vpack.c.b16 %v506, %v502
    %v555 = vpack.c.b16 %v507, %v503
    %v556 = vpack.c.b16 %v508, %v504
    %v557 = vpack.c.b16 %v513, %v509
    %v558 = vpack.c.b16 %v514, %v510
    %v559 = vpack.c.b16 %v515, %v511
    %v560 = vpack.c.b16 %v516, %v512
    %v561 = vpack.c.b16 %v521, %v517
    %v562 = vpack.c.b16 %v522, %v518
    %v563 = vpack.c.b16 %v523, %v519
    %v564 = vpack.c.b16 %v524, %v520
    %v565 = vpack.c.b16 %v529, %v525
    %v566 = vpack.c.b16 %v530, %v526
    %v567 = vpack.c.b16 %v531, %v527
    %v568 = vpack.c.b16 %v532, %v528
    %v569 = vpack.c.b16 %v537, %v533
    %v570 = vpack.c.b16 %v538, %v534
    %v571 = vpack.c.b16 %v539, %v535
    %v572 = vpack.c.b16 %v540, %v536
    %605 = vmatprep.subr.bf16.mxu0 %v542
    %606 = vmatpush1.bf16.msra.mxu0 %v541
    %607 = vmatprep.subr.bf16.mxu0 %v546
    %608 = vmatpush1.bf16.msra.mxu0 %v545
    %609 = vmatprep.subr.bf16.mxu0 %v550
    %610 = vmatpush1.bf16.msra.mxu0 %v549
    %611 = vmatprep.subr.bf16.mxu0 %v554
    %612 = vmatpush1.bf16.msra.mxu0 %v553
    %613 = vmatprep.subr.bf16.mxu0 %v558
    %614 = vmatpush1.bf16.msra.mxu0 %v557
    %615 = vmatprep.subr.bf16.mxu0 %v562
    %616 = vmatpush1.bf16.msra.mxu0 %v561
    %617 = vmatprep.subr.bf16.mxu0 %v566
    %618 = vmatpush1.bf16.msra.mxu0 %v565
    %619 = vmatprep.subr.bf16.mxu0 %v570
    %620 = vmatpush1.bf16.msra.mxu0 %v569
    %621 = vmatprep.subr.bf16.mxu0 0
    %622 = vmatpush1.bf16.msra.mxu0 0
    %623 = vmatprep.subr.bf16.mxu0 0
    %624 = vmatpush1.bf16.msra.mxu0 0
    %625 = vmatprep.subr.bf16.mxu0 0
    %626 = vmatpush1.bf16.msra.mxu0 0
    %627 = vmatprep.subr.bf16.mxu0 0
    %628 = vmatpush1.bf16.msra.mxu0 0
    %629 = vmatprep.subr.bf16.mxu0 0
    %630 = vmatpush1.bf16.msra.mxu0 0
    %631 = vmatprep.subr.bf16.mxu0 0
    %632 = vmatpush1.bf16.msra.mxu0 0
    %633 = vmatprep.subr.bf16.mxu0 0
    %634 = vmatpush1.bf16.msra.mxu0 0
    %635 = vmatprep.subr.bf16.mxu0 0
    %636 = vmatpush1.bf16.msra.mxu0 0
    %637 = vmatprep.mubr.bf16.mxu0 0
    %638 = vmatmul.mubr.bf16.gmra.mrb[0].mxu0 %v412
    %v639 = vpop.f32.mrb[0].mxu0
    %v640 = vadd.f32 0.0, %v639
    %v641 = vpop.f32.mrb[0].mxu0
    %v642 = vadd.f32 0.0, %v641
    %v643 = vpop.f32.mrb[0].mxu0
    %v644 = vpop.f32.mrb[0].mxu0
    %645 = vdwg.mxu0
    %646 = vmatprep.subr.bf16.mxu0 %v544
    %647 = vmatpush1.bf16.msra.mxu0 %v543
    %648 = vmatprep.subr.bf16.mxu0 %v548
    %649 = vmatpush1.bf16.msra.mxu0 %v547
    %650 = vmatprep.subr.bf16.mxu0 %v552
    %651 = vmatpush1.bf16.msra.mxu0 %v551
    %652 = vmatprep.subr.bf16.mxu0 %v556
    %653 = vmatpush1.bf16.msra.mxu0 %v555
    %654 = vmatprep.subr.bf16.mxu0 %v560
    %655 = vmatpush1.bf16.msra.mxu0 %v559
    %656 = vmatprep.subr.bf16.mxu0 %v564
    %657 = vmatpush1.bf16.msra.mxu0 %v563
    %658 = vmatprep.subr.bf16.mxu0 %v568
    %659 = vmatpush1.bf16.msra.mxu0 %v567
    %660 = vmatprep.subr.bf16.mxu0 %v572
    %661 = vmatpush1.bf16.msra.mxu0 %v571
    %662 = vmatprep.subr.bf16.mxu0 0
    %663 = vmatpush1.bf16.msra.mxu0 0
    %664 = vmatprep.subr.bf16.mxu0 0
    %665 = vmatpush1.bf16.msra.mxu0 0
    %666 = vmatprep.subr.bf16.mxu0 0
    %667 = vmatpush1.bf16.msra.mxu0 0
    %668 = vmatprep.subr.bf16.mxu0 0
    %669 = vmatpush1.bf16.msra.mxu0 0
    %670 = vmatprep.subr.bf16.mxu0 0
    %671 = vmatpush1.bf16.msra.mxu0 0
    %672 = vmatprep.subr.bf16.mxu0 0
    %673 = vmatpush1.bf16.msra.mxu0 0
    %674 = vmatprep.subr.bf16.mxu0 0
    %675 = vmatpush1.bf16.msra.mxu0 0
    %676 = vmatprep.subr.bf16.mxu0 0
    %677 = vmatpush1.bf16.msra.mxu0 0
    %678 = vmatprep.mubr.bf16.mxu0 0
    %679 = vmatmul.mubr.bf16.gmra.mrb[0].mxu0 %v412
    %v680 = vpop.f32.mrb[0].mxu0
    %v681 = vadd.f32 0.0, %v680
    %v682 = vpop.f32.mrb[0].mxu0
    %v683 = vadd.f32 0.0, %v682
    %v684 = vpop.f32.mrb[0].mxu0
    %v685 = vpop.f32.mrb[0].mxu0
    %686 = vdwg.mxu0
    %v687 = vadd.f32 %v408, %v640
    %v688 = vadd.f32 %v409, %v642
    %v689 = vadd.f32 %v410, %v681
    %v690 = vadd.f32 %v411, %v683
    %v691 = vxor.u32 %v687, 2147483648
    %v692 = vmul.f32 %v691, 1.442695
    %v693 = vpow.pop %v692
    %v694 = vadd.f32 %v693, 1.0
    %v695 = vrcp.pop %v694
    %v696 = vmul.f32 1.0, %v695
    %v697 = vxor.u32 %v688, 2147483648
    %v698 = vmul.f32 %v697, 1.442695
    %v699 = vpow.pop %v698
    %v700 = vadd.f32 %v699, 1.0
    %v701 = vrcp.pop %v700
    %v702 = vmul.f32 1.0, %v701
    %v703 = vtanh.pop %v689
    %v704 = vxor.u32 %v690, 2147483648
    %v705 = vmul.f32 %v704, 1.442695
    %v706 = vpow.pop %v705
    %v707 = vadd.f32 %v706, 1.0
    %v708 = vrcp.pop %v707
    %v709 = vmul.f32 1.0, %v708
    %v710 = vmul.f32 %v702, %v397
    %v711 = vmul.f32 %v696, %v703
    %v712 = vadd.f32 %v710, %v711
    %v713 = vtanh.pop %v712
    %v714 = vmul.f32 %v709, %v713
    %v715 = vsel %vm404, 1, 0
    %716 = vset.pattern.permute.xlu0 0
    %717 = vperm.xlu0 %716, %v715
    %v718 = vpop.permute.xlu0 %717
    %vm719 = vcmp.eq.s32.totalorder %v718, 1
    %v720 = vsel %vm719, %v712, %v397
    %v721 = vsel %vm719, %v714, %v398
    %v722 = vsel %vm719, %v714, 0.0
    %v723 = vpack.c.bf16 %v722, %v722
    %s724 = scalar_lea.vmem %s6, 4
    %725 = vst [vmem:[%s724] sm:$0xf] %v723
    %s726 = sadd.s32 %s64, 2
    %v727 = vstv %s726
    %vm728 = vcmp.lt.s32.totalorder %v727, %v74
    %s729 = scalar_lea.vmem %s2, 32
    %v730 = vld [vmem:[%s729] sm:$0xff]
    %v731 = vld [vmem:[%s729 + $0x8] sm:$0xff]
    %v732 = vunpack.c.l.bf16 %v730
    %v733 = vunpack.c.h.bf16 %v730
    %v734 = vunpack.c.l.bf16 %v731
    %v735 = vunpack.c.h.bf16 %v731
    %v736 = vpack.c.bf16 %v721, %v721
    %v737 = vld [vmem:[%s4] sm:$0xff]
    %v738 = vld [vmem:[%s4 + $0x8] sm:$0xff]
    %v739 = vld [vmem:[%s4 + $0x10] sm:$0xff]
    %v740 = vld [vmem:[%s4 + $0x18] sm:$0xff]
    %v741 = vld [vmem:[%s4 + $0x20] sm:$0xff]
    %v742 = vld [vmem:[%s4 + $0x28] sm:$0xff]
    %v743 = vld [vmem:[%s4 + $0x30] sm:$0xff]
    %v744 = vld [vmem:[%s4 + $0x38] sm:$0xff]
    %v745 = vld [vmem:[%s4 + $0x40] sm:$0xff]
    %v746 = vld [vmem:[%s4 + $0x48] sm:$0xff]
    %v747 = vld [vmem:[%s4 + $0x50] sm:$0xff]
    %v748 = vld [vmem:[%s4 + $0x58] sm:$0xff]
    %v749 = vld [vmem:[%s4 + $0x60] sm:$0xff]
    %v750 = vld [vmem:[%s4 + $0x68] sm:$0xff]
    %v751 = vld [vmem:[%s4 + $0x70] sm:$0xff]
    %v752 = vld [vmem:[%s4 + $0x78] sm:$0xff]
    %v753 = vld [vmem:[%s4 + $0x80] sm:$0xff]
    %v754 = vld [vmem:[%s4 + $0x88] sm:$0xff]
    %v755 = vld [vmem:[%s4 + $0x90] sm:$0xff]
    %v756 = vld [vmem:[%s4 + $0x98] sm:$0xff]
    %v757 = vld [vmem:[%s4 + $0xa0] sm:$0xff]
    %v758 = vld [vmem:[%s4 + $0xa8] sm:$0xff]
    %v759 = vld [vmem:[%s4 + $0xb0] sm:$0xff]
    %v760 = vld [vmem:[%s4 + $0xb8] sm:$0xff]
    %v761 = vld [vmem:[%s4 + $0xc0] sm:$0xff]
    %v762 = vld [vmem:[%s4 + $0xc8] sm:$0xff]
    %v763 = vld [vmem:[%s4 + $0xd0] sm:$0xff]
    %v764 = vld [vmem:[%s4 + $0xd8] sm:$0xff]
    %v765 = vld [vmem:[%s4 + $0xe0] sm:$0xff]
    %v766 = vld [vmem:[%s4 + $0xe8] sm:$0xff]
    %v767 = vld [vmem:[%s4 + $0xf0] sm:$0xff]
    %v768 = vld [vmem:[%s4 + $0xf8] sm:$0xff]
    %v801 = vunpack.c.l.b16 %v737
    %v802 = vunpack.c.h.b16 %v737
    %v803 = vunpack.c.l.b16 %v738
    %v804 = vunpack.c.h.b16 %v738
    %v805 = vunpack.c.l.b16 %v739
    %v806 = vunpack.c.h.b16 %v739
    %v807 = vunpack.c.l.b16 %v740
    %v808 = vunpack.c.h.b16 %v740
    %v809 = vunpack.c.l.b16 %v741
    %v810 = vunpack.c.h.b16 %v741
    %v811 = vunpack.c.l.b16 %v742
    %v812 = vunpack.c.h.b16 %v742
    %v813 = vunpack.c.l.b16 %v743
    %v814 = vunpack.c.h.b16 %v743
    %v815 = vunpack.c.l.b16 %v744
    %v816 = vunpack.c.h.b16 %v744
    %v817 = vunpack.c.l.b16 %v745
    %v818 = vunpack.c.h.b16 %v745
    %v819 = vunpack.c.l.b16 %v746
    %v820 = vunpack.c.h.b16 %v746
    %v821 = vunpack.c.l.b16 %v747
    %v822 = vunpack.c.h.b16 %v747
    %v823 = vunpack.c.l.b16 %v748
    %v824 = vunpack.c.h.b16 %v748
    %v825 = vunpack.c.l.b16 %v749
    %v826 = vunpack.c.h.b16 %v749
    %v827 = vunpack.c.l.b16 %v750
    %v828 = vunpack.c.h.b16 %v750
    %v829 = vunpack.c.l.b16 %v751
    %v830 = vunpack.c.h.b16 %v751
    %v831 = vunpack.c.l.b16 %v752
    %v832 = vunpack.c.h.b16 %v752
    %v833 = vunpack.c.l.b16 %v753
    %v834 = vunpack.c.h.b16 %v753
    %v835 = vunpack.c.l.b16 %v754
    %v836 = vunpack.c.h.b16 %v754
    %v837 = vunpack.c.l.b16 %v755
    %v838 = vunpack.c.h.b16 %v755
    %v839 = vunpack.c.l.b16 %v756
    %v840 = vunpack.c.h.b16 %v756
    %v841 = vunpack.c.l.b16 %v757
    %v842 = vunpack.c.h.b16 %v757
    %v843 = vunpack.c.l.b16 %v758
    %v844 = vunpack.c.h.b16 %v758
    %v845 = vunpack.c.l.b16 %v759
    %v846 = vunpack.c.h.b16 %v759
    %v847 = vunpack.c.l.b16 %v760
    %v848 = vunpack.c.h.b16 %v760
    %v849 = vunpack.c.l.b16 %v761
    %v850 = vunpack.c.h.b16 %v761
    %v851 = vunpack.c.l.b16 %v762
    %v852 = vunpack.c.h.b16 %v762
    %v853 = vunpack.c.l.b16 %v763
    %v854 = vunpack.c.h.b16 %v763
    %v855 = vunpack.c.l.b16 %v764
    %v856 = vunpack.c.h.b16 %v764
    %v857 = vunpack.c.l.b16 %v765
    %v858 = vunpack.c.h.b16 %v765
    %v859 = vunpack.c.l.b16 %v766
    %v860 = vunpack.c.h.b16 %v766
    %v861 = vunpack.c.l.b16 %v767
    %v862 = vunpack.c.h.b16 %v767
    %v863 = vunpack.c.l.b16 %v768
    %v864 = vunpack.c.h.b16 %v768
    %v865 = vpack.c.b16 %v805, %v801
    %v866 = vpack.c.b16 %v806, %v802
    %v867 = vpack.c.b16 %v807, %v803
    %v868 = vpack.c.b16 %v808, %v804
    %v869 = vpack.c.b16 %v813, %v809
    %v870 = vpack.c.b16 %v814, %v810
    %v871 = vpack.c.b16 %v815, %v811
    %v872 = vpack.c.b16 %v816, %v812
    %v873 = vpack.c.b16 %v821, %v817
    %v874 = vpack.c.b16 %v822, %v818
    %v875 = vpack.c.b16 %v823, %v819
    %v876 = vpack.c.b16 %v824, %v820
    %v877 = vpack.c.b16 %v829, %v825
    %v878 = vpack.c.b16 %v830, %v826
    %v879 = vpack.c.b16 %v831, %v827
    %v880 = vpack.c.b16 %v832, %v828
    %v881 = vpack.c.b16 %v837, %v833
    %v882 = vpack.c.b16 %v838, %v834
    %v883 = vpack.c.b16 %v839, %v835
    %v884 = vpack.c.b16 %v840, %v836
    %v885 = vpack.c.b16 %v845, %v841
    %v886 = vpack.c.b16 %v846, %v842
    %v887 = vpack.c.b16 %v847, %v843
    %v888 = vpack.c.b16 %v848, %v844
    %v889 = vpack.c.b16 %v853, %v849
    %v890 = vpack.c.b16 %v854, %v850
    %v891 = vpack.c.b16 %v855, %v851
    %v892 = vpack.c.b16 %v856, %v852
    %v893 = vpack.c.b16 %v861, %v857
    %v894 = vpack.c.b16 %v862, %v858
    %v895 = vpack.c.b16 %v863, %v859
    %v896 = vpack.c.b16 %v864, %v860
    %929 = vmatprep.subr.bf16.mxu0 %v866
    %930 = vmatpush1.bf16.msra.mxu0 %v865
    %931 = vmatprep.subr.bf16.mxu0 %v870
    %932 = vmatpush1.bf16.msra.mxu0 %v869
    %933 = vmatprep.subr.bf16.mxu0 %v874
    %934 = vmatpush1.bf16.msra.mxu0 %v873
    %935 = vmatprep.subr.bf16.mxu0 %v878
    %936 = vmatpush1.bf16.msra.mxu0 %v877
    %937 = vmatprep.subr.bf16.mxu0 %v882
    %938 = vmatpush1.bf16.msra.mxu0 %v881
    %939 = vmatprep.subr.bf16.mxu0 %v886
    %940 = vmatpush1.bf16.msra.mxu0 %v885
    %941 = vmatprep.subr.bf16.mxu0 %v890
    %942 = vmatpush1.bf16.msra.mxu0 %v889
    %943 = vmatprep.subr.bf16.mxu0 %v894
    %944 = vmatpush1.bf16.msra.mxu0 %v893
    %945 = vmatprep.subr.bf16.mxu0 0
    %946 = vmatpush1.bf16.msra.mxu0 0
    %947 = vmatprep.subr.bf16.mxu0 0
    %948 = vmatpush1.bf16.msra.mxu0 0
    %949 = vmatprep.subr.bf16.mxu0 0
    %950 = vmatpush1.bf16.msra.mxu0 0
    %951 = vmatprep.subr.bf16.mxu0 0
    %952 = vmatpush1.bf16.msra.mxu0 0
    %953 = vmatprep.subr.bf16.mxu0 0
    %954 = vmatpush1.bf16.msra.mxu0 0
    %955 = vmatprep.subr.bf16.mxu0 0
    %956 = vmatpush1.bf16.msra.mxu0 0
    %957 = vmatprep.subr.bf16.mxu0 0
    %958 = vmatpush1.bf16.msra.mxu0 0
    %959 = vmatprep.subr.bf16.mxu0 0
    %960 = vmatpush1.bf16.msra.mxu0 0
    %961 = vmatprep.mubr.bf16.mxu0 0
    %962 = vmatmul.mubr.bf16.gmra.mrb[0].mxu0 %v736
    %v963 = vpop.f32.mrb[0].mxu0
    %v964 = vadd.f32 0.0, %v963
    %v965 = vpop.f32.mrb[0].mxu0
    %v966 = vadd.f32 0.0, %v965
    %v967 = vpop.f32.mrb[0].mxu0
    %v968 = vpop.f32.mrb[0].mxu0
    %969 = vdwg.mxu0
    %970 = vmatprep.subr.bf16.mxu0 %v868
    %971 = vmatpush1.bf16.msra.mxu0 %v867
    %972 = vmatprep.subr.bf16.mxu0 %v872
    %973 = vmatpush1.bf16.msra.mxu0 %v871
    %974 = vmatprep.subr.bf16.mxu0 %v876
    %975 = vmatpush1.bf16.msra.mxu0 %v875
    %976 = vmatprep.subr.bf16.mxu0 %v880
    %977 = vmatpush1.bf16.msra.mxu0 %v879
    %978 = vmatprep.subr.bf16.mxu0 %v884
    %979 = vmatpush1.bf16.msra.mxu0 %v883
    %980 = vmatprep.subr.bf16.mxu0 %v888
    %981 = vmatpush1.bf16.msra.mxu0 %v887
    %982 = vmatprep.subr.bf16.mxu0 %v892
    %983 = vmatpush1.bf16.msra.mxu0 %v891
    %984 = vmatprep.subr.bf16.mxu0 %v896
    %985 = vmatpush1.bf16.msra.mxu0 %v895
    %986 = vmatprep.subr.bf16.mxu0 0
    %987 = vmatpush1.bf16.msra.mxu0 0
    %988 = vmatprep.subr.bf16.mxu0 0
    %989 = vmatpush1.bf16.msra.mxu0 0
    %990 = vmatprep.subr.bf16.mxu0 0
    %991 = vmatpush1.bf16.msra.mxu0 0
    %992 = vmatprep.subr.bf16.mxu0 0
    %993 = vmatpush1.bf16.msra.mxu0 0
    %994 = vmatprep.subr.bf16.mxu0 0
    %995 = vmatpush1.bf16.msra.mxu0 0
    %996 = vmatprep.subr.bf16.mxu0 0
    %997 = vmatpush1.bf16.msra.mxu0 0
    %998 = vmatprep.subr.bf16.mxu0 0
    %999 = vmatpush1.bf16.msra.mxu0 0
    %1000 = vmatprep.subr.bf16.mxu0 0
    %1001 = vmatpush1.bf16.msra.mxu0 0
    %1002 = vmatprep.mubr.bf16.mxu0 0
    %1003 = vmatmul.mubr.bf16.gmra.mrb[0].mxu0 %v736
    %v1004 = vpop.f32.mrb[0].mxu0
    %v1005 = vadd.f32 0.0, %v1004
    %v1006 = vpop.f32.mrb[0].mxu0
    %v1007 = vadd.f32 0.0, %v1006
    %v1008 = vpop.f32.mrb[0].mxu0
    %v1009 = vpop.f32.mrb[0].mxu0
    %1010 = vdwg.mxu0
    %v1011 = vadd.f32 %v732, %v964
    %v1012 = vadd.f32 %v733, %v966
    %v1013 = vadd.f32 %v734, %v1005
    %v1014 = vadd.f32 %v735, %v1007
    %v1015 = vxor.u32 %v1011, 2147483648
    %v1016 = vmul.f32 %v1015, 1.442695
    %v1017 = vpow.pop %v1016
    %v1018 = vadd.f32 %v1017, 1.0
    %v1019 = vrcp.pop %v1018
    %v1020 = vmul.f32 1.0, %v1019
    %v1021 = vxor.u32 %v1012, 2147483648
    %v1022 = vmul.f32 %v1021, 1.442695
    %v1023 = vpow.pop %v1022
    %v1024 = vadd.f32 %v1023, 1.0
    %v1025 = vrcp.pop %v1024
    %v1026 = vmul.f32 1.0, %v1025
    %v1027 = vtanh.pop %v1013
    %v1028 = vxor.u32 %v1014, 2147483648
    %v1029 = vmul.f32 %v1028, 1.442695
    %v1030 = vpow.pop %v1029
    %v1031 = vadd.f32 %v1030, 1.0
    %v1032 = vrcp.pop %v1031
    %v1033 = vmul.f32 1.0, %v1032
    %v1034 = vmul.f32 %v1026, %v720
    %v1035 = vmul.f32 %v1020, %v1027
    %v1036 = vadd.f32 %v1034, %v1035
    %v1037 = vtanh.pop %v1036
    %v1038 = vmul.f32 %v1033, %v1037
    %v1039 = vsel %vm728, 1, 0
    %1040 = vset.pattern.permute.xlu0 0
    %1041 = vperm.xlu0 %1040, %v1039
    %v1042 = vpop.permute.xlu0 %1041
    %vm1043 = vcmp.eq.s32.totalorder %v1042, 1
    %v1044 = vsel %vm1043, %v1036, %v720
    %v1045 = vsel %vm1043, %v1038, %v721
    %v1046 = vsel %vm1043, %v1038, 0.0
    %v1047 = vpack.c.bf16 %v1046, %v1046
    %s1048 = scalar_lea.vmem %s6, 8
    %1049 = vst [vmem:[%s1048] sm:$0xf] %v1047
    %s1050 = sadd.s32 %s64, 3
    %v1051 = vstv %s1050
    %vm1052 = vcmp.lt.s32.totalorder %v1051, %v74
    %s1053 = scalar_lea.vmem %s2, 48
    %v1054 = vld [vmem:[%s1053] sm:$0xff]
    %v1055 = vld [vmem:[%s1053 + $0x8] sm:$0xff]
    %v1056 = vunpack.c.l.bf16 %v1054
    %v1057 = vunpack.c.h.bf16 %v1054
    %v1058 = vunpack.c.l.bf16 %v1055
    %v1059 = vunpack.c.h.bf16 %v1055
    %v1060 = vpack.c.bf16 %v1045, %v1045
    %v1061 = vld [vmem:[%s4] sm:$0xff]
    %v1062 = vld [vmem:[%s4 + $0x8] sm:$0xff]
    %v1063 = vld [vmem:[%s4 + $0x10] sm:$0xff]
    %v1064 = vld [vmem:[%s4 + $0x18] sm:$0xff]
    %v1065 = vld [vmem:[%s4 + $0x20] sm:$0xff]
    %v1066 = vld [vmem:[%s4 + $0x28] sm:$0xff]
    %v1067 = vld [vmem:[%s4 + $0x30] sm:$0xff]
    %v1068 = vld [vmem:[%s4 + $0x38] sm:$0xff]
    %v1069 = vld [vmem:[%s4 + $0x40] sm:$0xff]
    %v1070 = vld [vmem:[%s4 + $0x48] sm:$0xff]
    %v1071 = vld [vmem:[%s4 + $0x50] sm:$0xff]
    %v1072 = vld [vmem:[%s4 + $0x58] sm:$0xff]
    %v1073 = vld [vmem:[%s4 + $0x60] sm:$0xff]
    %v1074 = vld [vmem:[%s4 + $0x68] sm:$0xff]
    %v1075 = vld [vmem:[%s4 + $0x70] sm:$0xff]
    %v1076 = vld [vmem:[%s4 + $0x78] sm:$0xff]
    %v1077 = vld [vmem:[%s4 + $0x80] sm:$0xff]
    %v1078 = vld [vmem:[%s4 + $0x88] sm:$0xff]
    %v1079 = vld [vmem:[%s4 + $0x90] sm:$0xff]
    %v1080 = vld [vmem:[%s4 + $0x98] sm:$0xff]
    %v1081 = vld [vmem:[%s4 + $0xa0] sm:$0xff]
    %v1082 = vld [vmem:[%s4 + $0xa8] sm:$0xff]
    %v1083 = vld [vmem:[%s4 + $0xb0] sm:$0xff]
    %v1084 = vld [vmem:[%s4 + $0xb8] sm:$0xff]
    %v1085 = vld [vmem:[%s4 + $0xc0] sm:$0xff]
    %v1086 = vld [vmem:[%s4 + $0xc8] sm:$0xff]
    %v1087 = vld [vmem:[%s4 + $0xd0] sm:$0xff]
    %v1088 = vld [vmem:[%s4 + $0xd8] sm:$0xff]
    %v1089 = vld [vmem:[%s4 + $0xe0] sm:$0xff]
    %v1090 = vld [vmem:[%s4 + $0xe8] sm:$0xff]
    %v1091 = vld [vmem:[%s4 + $0xf0] sm:$0xff]
    %v1092 = vld [vmem:[%s4 + $0xf8] sm:$0xff]
    %v1125 = vunpack.c.l.b16 %v1061
    %v1126 = vunpack.c.h.b16 %v1061
    %v1127 = vunpack.c.l.b16 %v1062
    %v1128 = vunpack.c.h.b16 %v1062
    %v1129 = vunpack.c.l.b16 %v1063
    %v1130 = vunpack.c.h.b16 %v1063
    %v1131 = vunpack.c.l.b16 %v1064
    %v1132 = vunpack.c.h.b16 %v1064
    %v1133 = vunpack.c.l.b16 %v1065
    %v1134 = vunpack.c.h.b16 %v1065
    %v1135 = vunpack.c.l.b16 %v1066
    %v1136 = vunpack.c.h.b16 %v1066
    %v1137 = vunpack.c.l.b16 %v1067
    %v1138 = vunpack.c.h.b16 %v1067
    %v1139 = vunpack.c.l.b16 %v1068
    %v1140 = vunpack.c.h.b16 %v1068
    %v1141 = vunpack.c.l.b16 %v1069
    %v1142 = vunpack.c.h.b16 %v1069
    %v1143 = vunpack.c.l.b16 %v1070
    %v1144 = vunpack.c.h.b16 %v1070
    %v1145 = vunpack.c.l.b16 %v1071
    %v1146 = vunpack.c.h.b16 %v1071
    %v1147 = vunpack.c.l.b16 %v1072
    %v1148 = vunpack.c.h.b16 %v1072
    %v1149 = vunpack.c.l.b16 %v1073
    %v1150 = vunpack.c.h.b16 %v1073
    %v1151 = vunpack.c.l.b16 %v1074
    %v1152 = vunpack.c.h.b16 %v1074
    %v1153 = vunpack.c.l.b16 %v1075
    %v1154 = vunpack.c.h.b16 %v1075
    %v1155 = vunpack.c.l.b16 %v1076
    %v1156 = vunpack.c.h.b16 %v1076
    %v1157 = vunpack.c.l.b16 %v1077
    %v1158 = vunpack.c.h.b16 %v1077
    %v1159 = vunpack.c.l.b16 %v1078
    %v1160 = vunpack.c.h.b16 %v1078
    %v1161 = vunpack.c.l.b16 %v1079
    %v1162 = vunpack.c.h.b16 %v1079
    %v1163 = vunpack.c.l.b16 %v1080
    %v1164 = vunpack.c.h.b16 %v1080
    %v1165 = vunpack.c.l.b16 %v1081
    %v1166 = vunpack.c.h.b16 %v1081
    %v1167 = vunpack.c.l.b16 %v1082
    %v1168 = vunpack.c.h.b16 %v1082
    %v1169 = vunpack.c.l.b16 %v1083
    %v1170 = vunpack.c.h.b16 %v1083
    %v1171 = vunpack.c.l.b16 %v1084
    %v1172 = vunpack.c.h.b16 %v1084
    %v1173 = vunpack.c.l.b16 %v1085
    %v1174 = vunpack.c.h.b16 %v1085
    %v1175 = vunpack.c.l.b16 %v1086
    %v1176 = vunpack.c.h.b16 %v1086
    %v1177 = vunpack.c.l.b16 %v1087
    %v1178 = vunpack.c.h.b16 %v1087
    %v1179 = vunpack.c.l.b16 %v1088
    %v1180 = vunpack.c.h.b16 %v1088
    %v1181 = vunpack.c.l.b16 %v1089
    %v1182 = vunpack.c.h.b16 %v1089
    %v1183 = vunpack.c.l.b16 %v1090
    %v1184 = vunpack.c.h.b16 %v1090
    %v1185 = vunpack.c.l.b16 %v1091
    %v1186 = vunpack.c.h.b16 %v1091
    %v1187 = vunpack.c.l.b16 %v1092
    %v1188 = vunpack.c.h.b16 %v1092
    %v1189 = vpack.c.b16 %v1129, %v1125
    %v1190 = vpack.c.b16 %v1130, %v1126
    %v1191 = vpack.c.b16 %v1131, %v1127
    %v1192 = vpack.c.b16 %v1132, %v1128
    %v1193 = vpack.c.b16 %v1137, %v1133
    %v1194 = vpack.c.b16 %v1138, %v1134
    %v1195 = vpack.c.b16 %v1139, %v1135
    %v1196 = vpack.c.b16 %v1140, %v1136
    %v1197 = vpack.c.b16 %v1145, %v1141
    %v1198 = vpack.c.b16 %v1146, %v1142
    %v1199 = vpack.c.b16 %v1147, %v1143
    %v1200 = vpack.c.b16 %v1148, %v1144
    %v1201 = vpack.c.b16 %v1153, %v1149
    %v1202 = vpack.c.b16 %v1154, %v1150
    %v1203 = vpack.c.b16 %v1155, %v1151
    %v1204 = vpack.c.b16 %v1156, %v1152
    %v1205 = vpack.c.b16 %v1161, %v1157
    %v1206 = vpack.c.b16 %v1162, %v1158
    %v1207 = vpack.c.b16 %v1163, %v1159
    %v1208 = vpack.c.b16 %v1164, %v1160
    %v1209 = vpack.c.b16 %v1169, %v1165
    %v1210 = vpack.c.b16 %v1170, %v1166
    %v1211 = vpack.c.b16 %v1171, %v1167
    %v1212 = vpack.c.b16 %v1172, %v1168
    %v1213 = vpack.c.b16 %v1177, %v1173
    %v1214 = vpack.c.b16 %v1178, %v1174
    %v1215 = vpack.c.b16 %v1179, %v1175
    %v1216 = vpack.c.b16 %v1180, %v1176
    %v1217 = vpack.c.b16 %v1185, %v1181
    %v1218 = vpack.c.b16 %v1186, %v1182
    %v1219 = vpack.c.b16 %v1187, %v1183
    %v1220 = vpack.c.b16 %v1188, %v1184
    %1253 = vmatprep.subr.bf16.mxu0 %v1190
    %1254 = vmatpush1.bf16.msra.mxu0 %v1189
    %1255 = vmatprep.subr.bf16.mxu0 %v1194
    %1256 = vmatpush1.bf16.msra.mxu0 %v1193
    %1257 = vmatprep.subr.bf16.mxu0 %v1198
    %1258 = vmatpush1.bf16.msra.mxu0 %v1197
    %1259 = vmatprep.subr.bf16.mxu0 %v1202
    %1260 = vmatpush1.bf16.msra.mxu0 %v1201
    %1261 = vmatprep.subr.bf16.mxu0 %v1206
    %1262 = vmatpush1.bf16.msra.mxu0 %v1205
    %1263 = vmatprep.subr.bf16.mxu0 %v1210
    %1264 = vmatpush1.bf16.msra.mxu0 %v1209
    %1265 = vmatprep.subr.bf16.mxu0 %v1214
    %1266 = vmatpush1.bf16.msra.mxu0 %v1213
    %1267 = vmatprep.subr.bf16.mxu0 %v1218
    %1268 = vmatpush1.bf16.msra.mxu0 %v1217
    %1269 = vmatprep.subr.bf16.mxu0 0
    %1270 = vmatpush1.bf16.msra.mxu0 0
    %1271 = vmatprep.subr.bf16.mxu0 0
    %1272 = vmatpush1.bf16.msra.mxu0 0
    %1273 = vmatprep.subr.bf16.mxu0 0
    %1274 = vmatpush1.bf16.msra.mxu0 0
    %1275 = vmatprep.subr.bf16.mxu0 0
    %1276 = vmatpush1.bf16.msra.mxu0 0
    %1277 = vmatprep.subr.bf16.mxu0 0
    %1278 = vmatpush1.bf16.msra.mxu0 0
    %1279 = vmatprep.subr.bf16.mxu0 0
    %1280 = vmatpush1.bf16.msra.mxu0 0
    %1281 = vmatprep.subr.bf16.mxu0 0
    %1282 = vmatpush1.bf16.msra.mxu0 0
    %1283 = vmatprep.subr.bf16.mxu0 0
    %1284 = vmatpush1.bf16.msra.mxu0 0
    %1285 = vmatprep.mubr.bf16.mxu0 0
    %1286 = vmatmul.mubr.bf16.gmra.mrb[0].mxu0 %v1060
    %v1287 = vpop.f32.mrb[0].mxu0
    %v1288 = vadd.f32 0.0, %v1287
    %v1289 = vpop.f32.mrb[0].mxu0
    %v1290 = vadd.f32 0.0, %v1289
    %v1291 = vpop.f32.mrb[0].mxu0
    %v1292 = vpop.f32.mrb[0].mxu0
    %1293 = vdwg.mxu0
    %1294 = vmatprep.subr.bf16.mxu0 %v1192
    %1295 = vmatpush1.bf16.msra.mxu0 %v1191
    %1296 = vmatprep.subr.bf16.mxu0 %v1196
    %1297 = vmatpush1.bf16.msra.mxu0 %v1195
    %1298 = vmatprep.subr.bf16.mxu0 %v1200
    %1299 = vmatpush1.bf16.msra.mxu0 %v1199
    %1300 = vmatprep.subr.bf16.mxu0 %v1204
    %1301 = vmatpush1.bf16.msra.mxu0 %v1203
    %1302 = vmatprep.subr.bf16.mxu0 %v1208
    %1303 = vmatpush1.bf16.msra.mxu0 %v1207
    %1304 = vmatprep.subr.bf16.mxu0 %v1212
    %1305 = vmatpush1.bf16.msra.mxu0 %v1211
    %1306 = vmatprep.subr.bf16.mxu0 %v1216
    %1307 = vmatpush1.bf16.msra.mxu0 %v1215
    %1308 = vmatprep.subr.bf16.mxu0 %v1220
    %1309 = vmatpush1.bf16.msra.mxu0 %v1219
    %1310 = vmatprep.subr.bf16.mxu0 0
    %1311 = vmatpush1.bf16.msra.mxu0 0
    %1312 = vmatprep.subr.bf16.mxu0 0
    %1313 = vmatpush1.bf16.msra.mxu0 0
    %1314 = vmatprep.subr.bf16.mxu0 0
    %1315 = vmatpush1.bf16.msra.mxu0 0
    %1316 = vmatprep.subr.bf16.mxu0 0
    %1317 = vmatpush1.bf16.msra.mxu0 0
    %1318 = vmatprep.subr.bf16.mxu0 0
    %1319 = vmatpush1.bf16.msra.mxu0 0
    %1320 = vmatprep.subr.bf16.mxu0 0
    %1321 = vmatpush1.bf16.msra.mxu0 0
    %1322 = vmatprep.subr.bf16.mxu0 0
    %1323 = vmatpush1.bf16.msra.mxu0 0
    %1324 = vmatprep.subr.bf16.mxu0 0
    %1325 = vmatpush1.bf16.msra.mxu0 0
    %1326 = vmatprep.mubr.bf16.mxu0 0
    %1327 = vmatmul.mubr.bf16.gmra.mrb[0].mxu0 %v1060
    %v1328 = vpop.f32.mrb[0].mxu0
    %v1329 = vadd.f32 0.0, %v1328
    %v1330 = vpop.f32.mrb[0].mxu0
    %v1331 = vadd.f32 0.0, %v1330
    %v1332 = vpop.f32.mrb[0].mxu0
    %v1333 = vpop.f32.mrb[0].mxu0
    %1334 = vdwg.mxu0
    %v1335 = vadd.f32 %v1056, %v1288
    %v1336 = vadd.f32 %v1057, %v1290
    %v1337 = vadd.f32 %v1058, %v1329
    %v1338 = vadd.f32 %v1059, %v1331
    %v1339 = vxor.u32 %v1335, 2147483648
    %v1340 = vmul.f32 %v1339, 1.442695
    %v1341 = vpow.pop %v1340
    %v1342 = vadd.f32 %v1341, 1.0
    %v1343 = vrcp.pop %v1342
    %v1344 = vmul.f32 1.0, %v1343
    %v1345 = vxor.u32 %v1336, 2147483648
    %v1346 = vmul.f32 %v1345, 1.442695
    %v1347 = vpow.pop %v1346
    %v1348 = vadd.f32 %v1347, 1.0
    %v1349 = vrcp.pop %v1348
    %v1350 = vmul.f32 1.0, %v1349
    %v1351 = vtanh.pop %v1337
    %v1352 = vxor.u32 %v1338, 2147483648
    %v1353 = vmul.f32 %v1352, 1.442695
    %v1354 = vpow.pop %v1353
    %v1355 = vadd.f32 %v1354, 1.0
    %v1356 = vrcp.pop %v1355
    %v1357 = vmul.f32 1.0, %v1356
    %v1358 = vmul.f32 %v1350, %v1044
    %v1359 = vmul.f32 %v1344, %v1351
    %v1360 = vadd.f32 %v1358, %v1359
    %v1361 = vtanh.pop %v1360
    %v1362 = vmul.f32 %v1357, %v1361
    %v1363 = vsel %vm1052, 1, 0
    %1364 = vset.pattern.permute.xlu0 0
    %1365 = vperm.xlu0 %1364, %v1363
    %v1366 = vpop.permute.xlu0 %1365
    %vm1367 = vcmp.eq.s32.totalorder %v1366, 1
    %v1368 = vsel %vm1367, %v1360, %v1044
    %v1369 = vsel %vm1367, %v1362, %v1045
    %v1370 = vsel %vm1367, %v1362, 0.0
    %v1371 = vpack.c.bf16 %v1370, %v1370
    %s1372 = scalar_lea.vmem %s6, 12
    %1373 = vst [vmem:[%s1372] sm:$0xf] %v1371
    %s1374 = sadd.s32 %s64, 4
    %v1375 = vstv %s1374
    %vm1376 = vcmp.lt.s32.totalorder %v1375, %v74
    %s1377 = scalar_lea.vmem %s2, 64
    %v1378 = vld [vmem:[%s1377] sm:$0xff]
    %v1379 = vld [vmem:[%s1377 + $0x8] sm:$0xff]
    %v1380 = vunpack.c.l.bf16 %v1378
    %v1381 = vunpack.c.h.bf16 %v1378
    %v1382 = vunpack.c.l.bf16 %v1379
    %v1383 = vunpack.c.h.bf16 %v1379
    %v1384 = vpack.c.bf16 %v1369, %v1369
    %v1385 = vld [vmem:[%s4] sm:$0xff]
    %v1386 = vld [vmem:[%s4 + $0x8] sm:$0xff]
    %v1387 = vld [vmem:[%s4 + $0x10] sm:$0xff]
    %v1388 = vld [vmem:[%s4 + $0x18] sm:$0xff]
    %v1389 = vld [vmem:[%s4 + $0x20] sm:$0xff]
    %v1390 = vld [vmem:[%s4 + $0x28] sm:$0xff]
    %v1391 = vld [vmem:[%s4 + $0x30] sm:$0xff]
    %v1392 = vld [vmem:[%s4 + $0x38] sm:$0xff]
    %v1393 = vld [vmem:[%s4 + $0x40] sm:$0xff]
    %v1394 = vld [vmem:[%s4 + $0x48] sm:$0xff]
    %v1395 = vld [vmem:[%s4 + $0x50] sm:$0xff]
    %v1396 = vld [vmem:[%s4 + $0x58] sm:$0xff]
    %v1397 = vld [vmem:[%s4 + $0x60] sm:$0xff]
    %v1398 = vld [vmem:[%s4 + $0x68] sm:$0xff]
    %v1399 = vld [vmem:[%s4 + $0x70] sm:$0xff]
    %v1400 = vld [vmem:[%s4 + $0x78] sm:$0xff]
    %v1401 = vld [vmem:[%s4 + $0x80] sm:$0xff]
    %v1402 = vld [vmem:[%s4 + $0x88] sm:$0xff]
    %v1403 = vld [vmem:[%s4 + $0x90] sm:$0xff]
    %v1404 = vld [vmem:[%s4 + $0x98] sm:$0xff]
    %v1405 = vld [vmem:[%s4 + $0xa0] sm:$0xff]
    %v1406 = vld [vmem:[%s4 + $0xa8] sm:$0xff]
    %v1407 = vld [vmem:[%s4 + $0xb0] sm:$0xff]
    %v1408 = vld [vmem:[%s4 + $0xb8] sm:$0xff]
    %v1409 = vld [vmem:[%s4 + $0xc0] sm:$0xff]
    %v1410 = vld [vmem:[%s4 + $0xc8] sm:$0xff]
    %v1411 = vld [vmem:[%s4 + $0xd0] sm:$0xff]
    %v1412 = vld [vmem:[%s4 + $0xd8] sm:$0xff]
    %v1413 = vld [vmem:[%s4 + $0xe0] sm:$0xff]
    %v1414 = vld [vmem:[%s4 + $0xe8] sm:$0xff]
    %v1415 = vld [vmem:[%s4 + $0xf0] sm:$0xff]
    %v1416 = vld [vmem:[%s4 + $0xf8] sm:$0xff]
    %v1449 = vunpack.c.l.b16 %v1385
    %v1450 = vunpack.c.h.b16 %v1385
    %v1451 = vunpack.c.l.b16 %v1386
    %v1452 = vunpack.c.h.b16 %v1386
    %v1453 = vunpack.c.l.b16 %v1387
    %v1454 = vunpack.c.h.b16 %v1387
    %v1455 = vunpack.c.l.b16 %v1388
    %v1456 = vunpack.c.h.b16 %v1388
    %v1457 = vunpack.c.l.b16 %v1389
    %v1458 = vunpack.c.h.b16 %v1389
    %v1459 = vunpack.c.l.b16 %v1390
    %v1460 = vunpack.c.h.b16 %v1390
    %v1461 = vunpack.c.l.b16 %v1391
    %v1462 = vunpack.c.h.b16 %v1391
    %v1463 = vunpack.c.l.b16 %v1392
    %v1464 = vunpack.c.h.b16 %v1392
    %v1465 = vunpack.c.l.b16 %v1393
    %v1466 = vunpack.c.h.b16 %v1393
    %v1467 = vunpack.c.l.b16 %v1394
    %v1468 = vunpack.c.h.b16 %v1394
    %v1469 = vunpack.c.l.b16 %v1395
    %v1470 = vunpack.c.h.b16 %v1395
    %v1471 = vunpack.c.l.b16 %v1396
    %v1472 = vunpack.c.h.b16 %v1396
    %v1473 = vunpack.c.l.b16 %v1397
    %v1474 = vunpack.c.h.b16 %v1397
    %v1475 = vunpack.c.l.b16 %v1398
    %v1476 = vunpack.c.h.b16 %v1398
    %v1477 = vunpack.c.l.b16 %v1399
    %v1478 = vunpack.c.h.b16 %v1399
    %v1479 = vunpack.c.l.b16 %v1400
    %v1480 = vunpack.c.h.b16 %v1400
    %v1481 = vunpack.c.l.b16 %v1401
    %v1482 = vunpack.c.h.b16 %v1401
    %v1483 = vunpack.c.l.b16 %v1402
    %v1484 = vunpack.c.h.b16 %v1402
    %v1485 = vunpack.c.l.b16 %v1403
    %v1486 = vunpack.c.h.b16 %v1403
    %v1487 = vunpack.c.l.b16 %v1404
    %v1488 = vunpack.c.h.b16 %v1404
    %v1489 = vunpack.c.l.b16 %v1405
    %v1490 = vunpack.c.h.b16 %v1405
    %v1491 = vunpack.c.l.b16 %v1406
    %v1492 = vunpack.c.h.b16 %v1406
    %v1493 = vunpack.c.l.b16 %v1407
    %v1494 = vunpack.c.h.b16 %v1407
    %v1495 = vunpack.c.l.b16 %v1408
    %v1496 = vunpack.c.h.b16 %v1408
    %v1497 = vunpack.c.l.b16 %v1409
    %v1498 = vunpack.c.h.b16 %v1409
    %v1499 = vunpack.c.l.b16 %v1410
    %v1500 = vunpack.c.h.b16 %v1410
    %v1501 = vunpack.c.l.b16 %v1411
    %v1502 = vunpack.c.h.b16 %v1411
    %v1503 = vunpack.c.l.b16 %v1412
    %v1504 = vunpack.c.h.b16 %v1412
    %v1505 = vunpack.c.l.b16 %v1413
    %v1506 = vunpack.c.h.b16 %v1413
    %v1507 = vunpack.c.l.b16 %v1414
    %v1508 = vunpack.c.h.b16 %v1414
    %v1509 = vunpack.c.l.b16 %v1415
    %v1510 = vunpack.c.h.b16 %v1415
    %v1511 = vunpack.c.l.b16 %v1416
    %v1512 = vunpack.c.h.b16 %v1416
    %v1513 = vpack.c.b16 %v1453, %v1449
    %v1514 = vpack.c.b16 %v1454, %v1450
    %v1515 = vpack.c.b16 %v1455, %v1451
    %v1516 = vpack.c.b16 %v1456, %v1452
    %v1517 = vpack.c.b16 %v1461, %v1457
    %v1518 = vpack.c.b16 %v1462, %v1458
    %v1519 = vpack.c.b16 %v1463, %v1459
    %v1520 = vpack.c.b16 %v1464, %v1460
    %v1521 = vpack.c.b16 %v1469, %v1465
    %v1522 = vpack.c.b16 %v1470, %v1466
    %v1523 = vpack.c.b16 %v1471, %v1467
    %v1524 = vpack.c.b16 %v1472, %v1468
    %v1525 = vpack.c.b16 %v1477, %v1473
    %v1526 = vpack.c.b16 %v1478, %v1474
    %v1527 = vpack.c.b16 %v1479, %v1475
    %v1528 = vpack.c.b16 %v1480, %v1476
    %v1529 = vpack.c.b16 %v1485, %v1481
    %v1530 = vpack.c.b16 %v1486, %v1482
    %v1531 = vpack.c.b16 %v1487, %v1483
    %v1532 = vpack.c.b16 %v1488, %v1484
    %v1533 = vpack.c.b16 %v1493, %v1489
    %v1534 = vpack.c.b16 %v1494, %v1490
    %v1535 = vpack.c.b16 %v1495, %v1491
    %v1536 = vpack.c.b16 %v1496, %v1492
    %v1537 = vpack.c.b16 %v1501, %v1497
    %v1538 = vpack.c.b16 %v1502, %v1498
    %v1539 = vpack.c.b16 %v1503, %v1499
    %v1540 = vpack.c.b16 %v1504, %v1500
    %v1541 = vpack.c.b16 %v1509, %v1505
    %v1542 = vpack.c.b16 %v1510, %v1506
    %v1543 = vpack.c.b16 %v1511, %v1507
    %v1544 = vpack.c.b16 %v1512, %v1508
    %1577 = vmatprep.subr.bf16.mxu0 %v1514
    %1578 = vmatpush1.bf16.msra.mxu0 %v1513
    %1579 = vmatprep.subr.bf16.mxu0 %v1518
    %1580 = vmatpush1.bf16.msra.mxu0 %v1517
    %1581 = vmatprep.subr.bf16.mxu0 %v1522
    %1582 = vmatpush1.bf16.msra.mxu0 %v1521
    %1583 = vmatprep.subr.bf16.mxu0 %v1526
    %1584 = vmatpush1.bf16.msra.mxu0 %v1525
    %1585 = vmatprep.subr.bf16.mxu0 %v1530
    %1586 = vmatpush1.bf16.msra.mxu0 %v1529
    %1587 = vmatprep.subr.bf16.mxu0 %v1534
    %1588 = vmatpush1.bf16.msra.mxu0 %v1533
    %1589 = vmatprep.subr.bf16.mxu0 %v1538
    %1590 = vmatpush1.bf16.msra.mxu0 %v1537
    %1591 = vmatprep.subr.bf16.mxu0 %v1542
    %1592 = vmatpush1.bf16.msra.mxu0 %v1541
    %1593 = vmatprep.subr.bf16.mxu0 0
    %1594 = vmatpush1.bf16.msra.mxu0 0
    %1595 = vmatprep.subr.bf16.mxu0 0
    %1596 = vmatpush1.bf16.msra.mxu0 0
    %1597 = vmatprep.subr.bf16.mxu0 0
    %1598 = vmatpush1.bf16.msra.mxu0 0
    %1599 = vmatprep.subr.bf16.mxu0 0
    %1600 = vmatpush1.bf16.msra.mxu0 0
    %1601 = vmatprep.subr.bf16.mxu0 0
    %1602 = vmatpush1.bf16.msra.mxu0 0
    %1603 = vmatprep.subr.bf16.mxu0 0
    %1604 = vmatpush1.bf16.msra.mxu0 0
    %1605 = vmatprep.subr.bf16.mxu0 0
    %1606 = vmatpush1.bf16.msra.mxu0 0
    %1607 = vmatprep.subr.bf16.mxu0 0
    %1608 = vmatpush1.bf16.msra.mxu0 0
    %1609 = vmatprep.mubr.bf16.mxu0 0
    %1610 = vmatmul.mubr.bf16.gmra.mrb[0].mxu0 %v1384
    %v1611 = vpop.f32.mrb[0].mxu0
    %v1612 = vadd.f32 0.0, %v1611
    %v1613 = vpop.f32.mrb[0].mxu0
    %v1614 = vadd.f32 0.0, %v1613
    %v1615 = vpop.f32.mrb[0].mxu0
    %v1616 = vpop.f32.mrb[0].mxu0
    %1617 = vdwg.mxu0
    %1618 = vmatprep.subr.bf16.mxu0 %v1516
    %1619 = vmatpush1.bf16.msra.mxu0 %v1515
    %1620 = vmatprep.subr.bf16.mxu0 %v1520
    %1621 = vmatpush1.bf16.msra.mxu0 %v1519
    %1622 = vmatprep.subr.bf16.mxu0 %v1524
    %1623 = vmatpush1.bf16.msra.mxu0 %v1523
    %1624 = vmatprep.subr.bf16.mxu0 %v1528
    %1625 = vmatpush1.bf16.msra.mxu0 %v1527
    %1626 = vmatprep.subr.bf16.mxu0 %v1532
    %1627 = vmatpush1.bf16.msra.mxu0 %v1531
    %1628 = vmatprep.subr.bf16.mxu0 %v1536
    %1629 = vmatpush1.bf16.msra.mxu0 %v1535
    %1630 = vmatprep.subr.bf16.mxu0 %v1540
    %1631 = vmatpush1.bf16.msra.mxu0 %v1539
    %1632 = vmatprep.subr.bf16.mxu0 %v1544
    %1633 = vmatpush1.bf16.msra.mxu0 %v1543
    %1634 = vmatprep.subr.bf16.mxu0 0
    %1635 = vmatpush1.bf16.msra.mxu0 0
    %1636 = vmatprep.subr.bf16.mxu0 0
    %1637 = vmatpush1.bf16.msra.mxu0 0
    %1638 = vmatprep.subr.bf16.mxu0 0
    %1639 = vmatpush1.bf16.msra.mxu0 0
    %1640 = vmatprep.subr.bf16.mxu0 0
    %1641 = vmatpush1.bf16.msra.mxu0 0
    %1642 = vmatprep.subr.bf16.mxu0 0
    %1643 = vmatpush1.bf16.msra.mxu0 0
    %1644 = vmatprep.subr.bf16.mxu0 0
    %1645 = vmatpush1.bf16.msra.mxu0 0
    %1646 = vmatprep.subr.bf16.mxu0 0
    %1647 = vmatpush1.bf16.msra.mxu0 0
    %1648 = vmatprep.subr.bf16.mxu0 0
    %1649 = vmatpush1.bf16.msra.mxu0 0
    %1650 = vmatprep.mubr.bf16.mxu0 0
    %1651 = vmatmul.mubr.bf16.gmra.mrb[0].mxu0 %v1384
    %v1652 = vpop.f32.mrb[0].mxu0
    %v1653 = vadd.f32 0.0, %v1652
    %v1654 = vpop.f32.mrb[0].mxu0
    %v1655 = vadd.f32 0.0, %v1654
    %v1656 = vpop.f32.mrb[0].mxu0
    %v1657 = vpop.f32.mrb[0].mxu0
    %1658 = vdwg.mxu0
    %v1659 = vadd.f32 %v1380, %v1612
    %v1660 = vadd.f32 %v1381, %v1614
    %v1661 = vadd.f32 %v1382, %v1653
    %v1662 = vadd.f32 %v1383, %v1655
    %v1663 = vxor.u32 %v1659, 2147483648
    %v1664 = vmul.f32 %v1663, 1.442695
    %v1665 = vpow.pop %v1664
    %v1666 = vadd.f32 %v1665, 1.0
    %v1667 = vrcp.pop %v1666
    %v1668 = vmul.f32 1.0, %v1667
    %v1669 = vxor.u32 %v1660, 2147483648
    %v1670 = vmul.f32 %v1669, 1.442695
    %v1671 = vpow.pop %v1670
    %v1672 = vadd.f32 %v1671, 1.0
    %v1673 = vrcp.pop %v1672
    %v1674 = vmul.f32 1.0, %v1673
    %v1675 = vtanh.pop %v1661
    %v1676 = vxor.u32 %v1662, 2147483648
    %v1677 = vmul.f32 %v1676, 1.442695
    %v1678 = vpow.pop %v1677
    %v1679 = vadd.f32 %v1678, 1.0
    %v1680 = vrcp.pop %v1679
    %v1681 = vmul.f32 1.0, %v1680
    %v1682 = vmul.f32 %v1674, %v1368
    %v1683 = vmul.f32 %v1668, %v1675
    %v1684 = vadd.f32 %v1682, %v1683
    %v1685 = vtanh.pop %v1684
    %v1686 = vmul.f32 %v1681, %v1685
    %v1687 = vsel %vm1376, 1, 0
    %1688 = vset.pattern.permute.xlu0 0
    %1689 = vperm.xlu0 %1688, %v1687
    %v1690 = vpop.permute.xlu0 %1689
    %vm1691 = vcmp.eq.s32.totalorder %v1690, 1
    %v1692 = vsel %vm1691, %v1684, %v1368
    %v1693 = vsel %vm1691, %v1686, %v1369
    %v1694 = vsel %vm1691, %v1686, 0.0
    %v1695 = vpack.c.bf16 %v1694, %v1694
    %s1696 = scalar_lea.vmem %s6, 16
    %1697 = vst [vmem:[%s1696] sm:$0xf] %v1695
    %s1698 = sadd.s32 %s64, 5
    %v1699 = vstv %s1698
    %vm1700 = vcmp.lt.s32.totalorder %v1699, %v74
    %s1701 = scalar_lea.vmem %s2, 80
    %v1702 = vld [vmem:[%s1701] sm:$0xff]
    %v1703 = vld [vmem:[%s1701 + $0x8] sm:$0xff]
    %v1704 = vunpack.c.l.bf16 %v1702
    %v1705 = vunpack.c.h.bf16 %v1702
    %v1706 = vunpack.c.l.bf16 %v1703
    %v1707 = vunpack.c.h.bf16 %v1703
    %v1708 = vpack.c.bf16 %v1693, %v1693
    %v1709 = vld [vmem:[%s4] sm:$0xff]
    %v1710 = vld [vmem:[%s4 + $0x8] sm:$0xff]
    %v1711 = vld [vmem:[%s4 + $0x10] sm:$0xff]
    %v1712 = vld [vmem:[%s4 + $0x18] sm:$0xff]
    %v1713 = vld [vmem:[%s4 + $0x20] sm:$0xff]
    %v1714 = vld [vmem:[%s4 + $0x28] sm:$0xff]
    %v1715 = vld [vmem:[%s4 + $0x30] sm:$0xff]
    %v1716 = vld [vmem:[%s4 + $0x38] sm:$0xff]
    %v1717 = vld [vmem:[%s4 + $0x40] sm:$0xff]
    %v1718 = vld [vmem:[%s4 + $0x48] sm:$0xff]
    %v1719 = vld [vmem:[%s4 + $0x50] sm:$0xff]
    %v1720 = vld [vmem:[%s4 + $0x58] sm:$0xff]
    %v1721 = vld [vmem:[%s4 + $0x60] sm:$0xff]
    %v1722 = vld [vmem:[%s4 + $0x68] sm:$0xff]
    %v1723 = vld [vmem:[%s4 + $0x70] sm:$0xff]
    %v1724 = vld [vmem:[%s4 + $0x78] sm:$0xff]
    %v1725 = vld [vmem:[%s4 + $0x80] sm:$0xff]
    %v1726 = vld [vmem:[%s4 + $0x88] sm:$0xff]
    %v1727 = vld [vmem:[%s4 + $0x90] sm:$0xff]
    %v1728 = vld [vmem:[%s4 + $0x98] sm:$0xff]
    %v1729 = vld [vmem:[%s4 + $0xa0] sm:$0xff]
    %v1730 = vld [vmem:[%s4 + $0xa8] sm:$0xff]
    %v1731 = vld [vmem:[%s4 + $0xb0] sm:$0xff]
    %v1732 = vld [vmem:[%s4 + $0xb8] sm:$0xff]
    %v1733 = vld [vmem:[%s4 + $0xc0] sm:$0xff]
    %v1734 = vld [vmem:[%s4 + $0xc8] sm:$0xff]
    %v1735 = vld [vmem:[%s4 + $0xd0] sm:$0xff]
    %v1736 = vld [vmem:[%s4 + $0xd8] sm:$0xff]
    %v1737 = vld [vmem:[%s4 + $0xe0] sm:$0xff]
    %v1738 = vld [vmem:[%s4 + $0xe8] sm:$0xff]
    %v1739 = vld [vmem:[%s4 + $0xf0] sm:$0xff]
    %v1740 = vld [vmem:[%s4 + $0xf8] sm:$0xff]
    %v1773 = vunpack.c.l.b16 %v1709
    %v1774 = vunpack.c.h.b16 %v1709
    %v1775 = vunpack.c.l.b16 %v1710
    %v1776 = vunpack.c.h.b16 %v1710
    %v1777 = vunpack.c.l.b16 %v1711
    %v1778 = vunpack.c.h.b16 %v1711
    %v1779 = vunpack.c.l.b16 %v1712
    %v1780 = vunpack.c.h.b16 %v1712
    %v1781 = vunpack.c.l.b16 %v1713
    %v1782 = vunpack.c.h.b16 %v1713
    %v1783 = vunpack.c.l.b16 %v1714
    %v1784 = vunpack.c.h.b16 %v1714
    %v1785 = vunpack.c.l.b16 %v1715
    %v1786 = vunpack.c.h.b16 %v1715
    %v1787 = vunpack.c.l.b16 %v1716
    %v1788 = vunpack.c.h.b16 %v1716
    %v1789 = vunpack.c.l.b16 %v1717
    %v1790 = vunpack.c.h.b16 %v1717
    %v1791 = vunpack.c.l.b16 %v1718
    %v1792 = vunpack.c.h.b16 %v1718
    %v1793 = vunpack.c.l.b16 %v1719
    %v1794 = vunpack.c.h.b16 %v1719
    %v1795 = vunpack.c.l.b16 %v1720
    %v1796 = vunpack.c.h.b16 %v1720
    %v1797 = vunpack.c.l.b16 %v1721
    %v1798 = vunpack.c.h.b16 %v1721
    %v1799 = vunpack.c.l.b16 %v1722
    %v1800 = vunpack.c.h.b16 %v1722
    %v1801 = vunpack.c.l.b16 %v1723
    %v1802 = vunpack.c.h.b16 %v1723
    %v1803 = vunpack.c.l.b16 %v1724
    %v1804 = vunpack.c.h.b16 %v1724
    %v1805 = vunpack.c.l.b16 %v1725
    %v1806 = vunpack.c.h.b16 %v1725
    %v1807 = vunpack.c.l.b16 %v1726
    %v1808 = vunpack.c.h.b16 %v1726
    %v1809 = vunpack.c.l.b16 %v1727
    %v1810 = vunpack.c.h.b16 %v1727
    %v1811 = vunpack.c.l.b16 %v1728
    %v1812 = vunpack.c.h.b16 %v1728
    %v1813 = vunpack.c.l.b16 %v1729
    %v1814 = vunpack.c.h.b16 %v1729
    %v1815 = vunpack.c.l.b16 %v1730
    %v1816 = vunpack.c.h.b16 %v1730
    %v1817 = vunpack.c.l.b16 %v1731
    %v1818 = vunpack.c.h.b16 %v1731
    %v1819 = vunpack.c.l.b16 %v1732
    %v1820 = vunpack.c.h.b16 %v1732
    %v1821 = vunpack.c.l.b16 %v1733
    %v1822 = vunpack.c.h.b16 %v1733
    %v1823 = vunpack.c.l.b16 %v1734
    %v1824 = vunpack.c.h.b16 %v1734
    %v1825 = vunpack.c.l.b16 %v1735
    %v1826 = vunpack.c.h.b16 %v1735
    %v1827 = vunpack.c.l.b16 %v1736
    %v1828 = vunpack.c.h.b16 %v1736
    %v1829 = vunpack.c.l.b16 %v1737
    %v1830 = vunpack.c.h.b16 %v1737
    %v1831 = vunpack.c.l.b16 %v1738
    %v1832 = vunpack.c.h.b16 %v1738
    %v1833 = vunpack.c.l.b16 %v1739
    %v1834 = vunpack.c.h.b16 %v1739
    %v1835 = vunpack.c.l.b16 %v1740
    %v1836 = vunpack.c.h.b16 %v1740
    %v1837 = vpack.c.b16 %v1777, %v1773
    %v1838 = vpack.c.b16 %v1778, %v1774
    %v1839 = vpack.c.b16 %v1779, %v1775
    %v1840 = vpack.c.b16 %v1780, %v1776
    %v1841 = vpack.c.b16 %v1785, %v1781
    %v1842 = vpack.c.b16 %v1786, %v1782
    %v1843 = vpack.c.b16 %v1787, %v1783
    %v1844 = vpack.c.b16 %v1788, %v1784
    %v1845 = vpack.c.b16 %v1793, %v1789
    %v1846 = vpack.c.b16 %v1794, %v1790
    %v1847 = vpack.c.b16 %v1795, %v1791
    %v1848 = vpack.c.b16 %v1796, %v1792
    %v1849 = vpack.c.b16 %v1801, %v1797
    %v1850 = vpack.c.b16 %v1802, %v1798
    %v1851 = vpack.c.b16 %v1803, %v1799
    %v1852 = vpack.c.b16 %v1804, %v1800
    %v1853 = vpack.c.b16 %v1809, %v1805
    %v1854 = vpack.c.b16 %v1810, %v1806
    %v1855 = vpack.c.b16 %v1811, %v1807
    %v1856 = vpack.c.b16 %v1812, %v1808
    %v1857 = vpack.c.b16 %v1817, %v1813
    %v1858 = vpack.c.b16 %v1818, %v1814
    %v1859 = vpack.c.b16 %v1819, %v1815
    %v1860 = vpack.c.b16 %v1820, %v1816
    %v1861 = vpack.c.b16 %v1825, %v1821
    %v1862 = vpack.c.b16 %v1826, %v1822
    %v1863 = vpack.c.b16 %v1827, %v1823
    %v1864 = vpack.c.b16 %v1828, %v1824
    %v1865 = vpack.c.b16 %v1833, %v1829
    %v1866 = vpack.c.b16 %v1834, %v1830
    %v1867 = vpack.c.b16 %v1835, %v1831
    %v1868 = vpack.c.b16 %v1836, %v1832
    %1901 = vmatprep.subr.bf16.mxu0 %v1838
    %1902 = vmatpush1.bf16.msra.mxu0 %v1837
    %1903 = vmatprep.subr.bf16.mxu0 %v1842
    %1904 = vmatpush1.bf16.msra.mxu0 %v1841
    %1905 = vmatprep.subr.bf16.mxu0 %v1846
    %1906 = vmatpush1.bf16.msra.mxu0 %v1845
    %1907 = vmatprep.subr.bf16.mxu0 %v1850
    %1908 = vmatpush1.bf16.msra.mxu0 %v1849
    %1909 = vmatprep.subr.bf16.mxu0 %v1854
    %1910 = vmatpush1.bf16.msra.mxu0 %v1853
    %1911 = vmatprep.subr.bf16.mxu0 %v1858
    %1912 = vmatpush1.bf16.msra.mxu0 %v1857
    %1913 = vmatprep.subr.bf16.mxu0 %v1862
    %1914 = vmatpush1.bf16.msra.mxu0 %v1861
    %1915 = vmatprep.subr.bf16.mxu0 %v1866
    %1916 = vmatpush1.bf16.msra.mxu0 %v1865
    %1917 = vmatprep.subr.bf16.mxu0 0
    %1918 = vmatpush1.bf16.msra.mxu0 0
    %1919 = vmatprep.subr.bf16.mxu0 0
    %1920 = vmatpush1.bf16.msra.mxu0 0
    %1921 = vmatprep.subr.bf16.mxu0 0
    %1922 = vmatpush1.bf16.msra.mxu0 0
    %1923 = vmatprep.subr.bf16.mxu0 0
    %1924 = vmatpush1.bf16.msra.mxu0 0
    %1925 = vmatprep.subr.bf16.mxu0 0
    %1926 = vmatpush1.bf16.msra.mxu0 0
    %1927 = vmatprep.subr.bf16.mxu0 0
    %1928 = vmatpush1.bf16.msra.mxu0 0
    %1929 = vmatprep.subr.bf16.mxu0 0
    %1930 = vmatpush1.bf16.msra.mxu0 0
    %1931 = vmatprep.subr.bf16.mxu0 0
    %1932 = vmatpush1.bf16.msra.mxu0 0
    %1933 = vmatprep.mubr.bf16.mxu0 0
    %1934 = vmatmul.mubr.bf16.gmra.mrb[0].mxu0 %v1708
    %v1935 = vpop.f32.mrb[0].mxu0
    %v1936 = vadd.f32 0.0, %v1935
    %v1937 = vpop.f32.mrb[0].mxu0
    %v1938 = vadd.f32 0.0, %v1937
    %v1939 = vpop.f32.mrb[0].mxu0
    %v1940 = vpop.f32.mrb[0].mxu0
    %1941 = vdwg.mxu0
    %1942 = vmatprep.subr.bf16.mxu0 %v1840
    %1943 = vmatpush1.bf16.msra.mxu0 %v1839
    %1944 = vmatprep.subr.bf16.mxu0 %v1844
    %1945 = vmatpush1.bf16.msra.mxu0 %v1843
    %1946 = vmatprep.subr.bf16.mxu0 %v1848
    %1947 = vmatpush1.bf16.msra.mxu0 %v1847
    %1948 = vmatprep.subr.bf16.mxu0 %v1852
    %1949 = vmatpush1.bf16.msra.mxu0 %v1851
    %1950 = vmatprep.subr.bf16.mxu0 %v1856
    %1951 = vmatpush1.bf16.msra.mxu0 %v1855
    %1952 = vmatprep.subr.bf16.mxu0 %v1860
    %1953 = vmatpush1.bf16.msra.mxu0 %v1859
    %1954 = vmatprep.subr.bf16.mxu0 %v1864
    %1955 = vmatpush1.bf16.msra.mxu0 %v1863
    %1956 = vmatprep.subr.bf16.mxu0 %v1868
    %1957 = vmatpush1.bf16.msra.mxu0 %v1867
    %1958 = vmatprep.subr.bf16.mxu0 0
    %1959 = vmatpush1.bf16.msra.mxu0 0
    %1960 = vmatprep.subr.bf16.mxu0 0
    %1961 = vmatpush1.bf16.msra.mxu0 0
    %1962 = vmatprep.subr.bf16.mxu0 0
    %1963 = vmatpush1.bf16.msra.mxu0 0
    %1964 = vmatprep.subr.bf16.mxu0 0
    %1965 = vmatpush1.bf16.msra.mxu0 0
    %1966 = vmatprep.subr.bf16.mxu0 0
    %1967 = vmatpush1.bf16.msra.mxu0 0
    %1968 = vmatprep.subr.bf16.mxu0 0
    %1969 = vmatpush1.bf16.msra.mxu0 0
    %1970 = vmatprep.subr.bf16.mxu0 0
    %1971 = vmatpush1.bf16.msra.mxu0 0
    %1972 = vmatprep.subr.bf16.mxu0 0
    %1973 = vmatpush1.bf16.msra.mxu0 0
    %1974 = vmatprep.mubr.bf16.mxu0 0
    %1975 = vmatmul.mubr.bf16.gmra.mrb[0].mxu0 %v1708
    %v1976 = vpop.f32.mrb[0].mxu0
    %v1977 = vadd.f32 0.0, %v1976
    %v1978 = vpop.f32.mrb[0].mxu0
    %v1979 = vadd.f32 0.0, %v1978
    %v1980 = vpop.f32.mrb[0].mxu0
    %v1981 = vpop.f32.mrb[0].mxu0
    %1982 = vdwg.mxu0
    %v1983 = vadd.f32 %v1704, %v1936
    %v1984 = vadd.f32 %v1705, %v1938
    %v1985 = vadd.f32 %v1706, %v1977
    %v1986 = vadd.f32 %v1707, %v1979
    %v1987 = vxor.u32 %v1983, 2147483648
    %v1988 = vmul.f32 %v1987, 1.442695
    %v1989 = vpow.pop %v1988
    %v1990 = vadd.f32 %v1989, 1.0
    %v1991 = vrcp.pop %v1990
    %v1992 = vmul.f32 1.0, %v1991
    %v1993 = vxor.u32 %v1984, 2147483648
    %v1994 = vmul.f32 %v1993, 1.442695
    %v1995 = vpow.pop %v1994
    %v1996 = vadd.f32 %v1995, 1.0
    %v1997 = vrcp.pop %v1996
    %v1998 = vmul.f32 1.0, %v1997
    %v1999 = vtanh.pop %v1985
    %v2000 = vxor.u32 %v1986, 2147483648
    %v2001 = vmul.f32 %v2000, 1.442695
    %v2002 = vpow.pop %v2001
    %v2003 = vadd.f32 %v2002, 1.0
    %v2004 = vrcp.pop %v2003
    %v2005 = vmul.f32 1.0, %v2004
    %v2006 = vmul.f32 %v1998, %v1692
    %v2007 = vmul.f32 %v1992, %v1999
    %v2008 = vadd.f32 %v2006, %v2007
    %v2009 = vtanh.pop %v2008
    %v2010 = vmul.f32 %v2005, %v2009
    %v2011 = vsel %vm1700, 1, 0
    %2012 = vset.pattern.permute.xlu0 0
    %2013 = vperm.xlu0 %2012, %v2011
    %v2014 = vpop.permute.xlu0 %2013
    %vm2015 = vcmp.eq.s32.totalorder %v2014, 1
    %v2016 = vsel %vm2015, %v2008, %v1692
    %v2017 = vsel %vm2015, %v2010, %v1693
    %v2018 = vsel %vm2015, %v2010, 0.0
    %v2019 = vpack.c.bf16 %v2018, %v2018
    %s2020 = scalar_lea.vmem %s6, 20
    %2021 = vst [vmem:[%s2020] sm:$0xf] %v2019
    %s2022 = sadd.s32 %s64, 6
    %v2023 = vstv %s2022
    %vm2024 = vcmp.lt.s32.totalorder %v2023, %v74
    %s2025 = scalar_lea.vmem %s2, 96
    %v2026 = vld [vmem:[%s2025] sm:$0xff]
    %v2027 = vld [vmem:[%s2025 + $0x8] sm:$0xff]
    %v2028 = vunpack.c.l.bf16 %v2026
    %v2029 = vunpack.c.h.bf16 %v2026
    %v2030 = vunpack.c.l.bf16 %v2027
    %v2031 = vunpack.c.h.bf16 %v2027
    %v2032 = vpack.c.bf16 %v2017, %v2017
    %v2033 = vld [vmem:[%s4] sm:$0xff]
    %v2034 = vld [vmem:[%s4 + $0x8] sm:$0xff]
    %v2035 = vld [vmem:[%s4 + $0x10] sm:$0xff]
    %v2036 = vld [vmem:[%s4 + $0x18] sm:$0xff]
    %v2037 = vld [vmem:[%s4 + $0x20] sm:$0xff]
    %v2038 = vld [vmem:[%s4 + $0x28] sm:$0xff]
    %v2039 = vld [vmem:[%s4 + $0x30] sm:$0xff]
    %v2040 = vld [vmem:[%s4 + $0x38] sm:$0xff]
    %v2041 = vld [vmem:[%s4 + $0x40] sm:$0xff]
    %v2042 = vld [vmem:[%s4 + $0x48] sm:$0xff]
    %v2043 = vld [vmem:[%s4 + $0x50] sm:$0xff]
    %v2044 = vld [vmem:[%s4 + $0x58] sm:$0xff]
    %v2045 = vld [vmem:[%s4 + $0x60] sm:$0xff]
    %v2046 = vld [vmem:[%s4 + $0x68] sm:$0xff]
    %v2047 = vld [vmem:[%s4 + $0x70] sm:$0xff]
    %v2048 = vld [vmem:[%s4 + $0x78] sm:$0xff]
    %v2049 = vld [vmem:[%s4 + $0x80] sm:$0xff]
    %v2050 = vld [vmem:[%s4 + $0x88] sm:$0xff]
    %v2051 = vld [vmem:[%s4 + $0x90] sm:$0xff]
    %v2052 = vld [vmem:[%s4 + $0x98] sm:$0xff]
    %v2053 = vld [vmem:[%s4 + $0xa0] sm:$0xff]
    %v2054 = vld [vmem:[%s4 + $0xa8] sm:$0xff]
    %v2055 = vld [vmem:[%s4 + $0xb0] sm:$0xff]
    %v2056 = vld [vmem:[%s4 + $0xb8] sm:$0xff]
    %v2057 = vld [vmem:[%s4 + $0xc0] sm:$0xff]
    %v2058 = vld [vmem:[%s4 + $0xc8] sm:$0xff]
    %v2059 = vld [vmem:[%s4 + $0xd0] sm:$0xff]
    %v2060 = vld [vmem:[%s4 + $0xd8] sm:$0xff]
    %v2061 = vld [vmem:[%s4 + $0xe0] sm:$0xff]
    %v2062 = vld [vmem:[%s4 + $0xe8] sm:$0xff]
    %v2063 = vld [vmem:[%s4 + $0xf0] sm:$0xff]
    %v2064 = vld [vmem:[%s4 + $0xf8] sm:$0xff]
    %v2097 = vunpack.c.l.b16 %v2033
    %v2098 = vunpack.c.h.b16 %v2033
    %v2099 = vunpack.c.l.b16 %v2034
    %v2100 = vunpack.c.h.b16 %v2034
    %v2101 = vunpack.c.l.b16 %v2035
    %v2102 = vunpack.c.h.b16 %v2035
    %v2103 = vunpack.c.l.b16 %v2036
    %v2104 = vunpack.c.h.b16 %v2036
    %v2105 = vunpack.c.l.b16 %v2037
    %v2106 = vunpack.c.h.b16 %v2037
    %v2107 = vunpack.c.l.b16 %v2038
    %v2108 = vunpack.c.h.b16 %v2038
    %v2109 = vunpack.c.l.b16 %v2039
    %v2110 = vunpack.c.h.b16 %v2039
    %v2111 = vunpack.c.l.b16 %v2040
    %v2112 = vunpack.c.h.b16 %v2040
    %v2113 = vunpack.c.l.b16 %v2041
    %v2114 = vunpack.c.h.b16 %v2041
    %v2115 = vunpack.c.l.b16 %v2042
    %v2116 = vunpack.c.h.b16 %v2042
    %v2117 = vunpack.c.l.b16 %v2043
    %v2118 = vunpack.c.h.b16 %v2043
    %v2119 = vunpack.c.l.b16 %v2044
    %v2120 = vunpack.c.h.b16 %v2044
    %v2121 = vunpack.c.l.b16 %v2045
    %v2122 = vunpack.c.h.b16 %v2045
    %v2123 = vunpack.c.l.b16 %v2046
    %v2124 = vunpack.c.h.b16 %v2046
    %v2125 = vunpack.c.l.b16 %v2047
    %v2126 = vunpack.c.h.b16 %v2047
    %v2127 = vunpack.c.l.b16 %v2048
    %v2128 = vunpack.c.h.b16 %v2048
    %v2129 = vunpack.c.l.b16 %v2049
    %v2130 = vunpack.c.h.b16 %v2049
    %v2131 = vunpack.c.l.b16 %v2050
    %v2132 = vunpack.c.h.b16 %v2050
    %v2133 = vunpack.c.l.b16 %v2051
    %v2134 = vunpack.c.h.b16 %v2051
    %v2135 = vunpack.c.l.b16 %v2052
    %v2136 = vunpack.c.h.b16 %v2052
    %v2137 = vunpack.c.l.b16 %v2053
    %v2138 = vunpack.c.h.b16 %v2053
    %v2139 = vunpack.c.l.b16 %v2054
    %v2140 = vunpack.c.h.b16 %v2054
    %v2141 = vunpack.c.l.b16 %v2055
    %v2142 = vunpack.c.h.b16 %v2055
    %v2143 = vunpack.c.l.b16 %v2056
    %v2144 = vunpack.c.h.b16 %v2056
    %v2145 = vunpack.c.l.b16 %v2057
    %v2146 = vunpack.c.h.b16 %v2057
    %v2147 = vunpack.c.l.b16 %v2058
    %v2148 = vunpack.c.h.b16 %v2058
    %v2149 = vunpack.c.l.b16 %v2059
    %v2150 = vunpack.c.h.b16 %v2059
    %v2151 = vunpack.c.l.b16 %v2060
    %v2152 = vunpack.c.h.b16 %v2060
    %v2153 = vunpack.c.l.b16 %v2061
    %v2154 = vunpack.c.h.b16 %v2061
    %v2155 = vunpack.c.l.b16 %v2062
    %v2156 = vunpack.c.h.b16 %v2062
    %v2157 = vunpack.c.l.b16 %v2063
    %v2158 = vunpack.c.h.b16 %v2063
    %v2159 = vunpack.c.l.b16 %v2064
    %v2160 = vunpack.c.h.b16 %v2064
    %v2161 = vpack.c.b16 %v2101, %v2097
    %v2162 = vpack.c.b16 %v2102, %v2098
    %v2163 = vpack.c.b16 %v2103, %v2099
    %v2164 = vpack.c.b16 %v2104, %v2100
    %v2165 = vpack.c.b16 %v2109, %v2105
    %v2166 = vpack.c.b16 %v2110, %v2106
    %v2167 = vpack.c.b16 %v2111, %v2107
    %v2168 = vpack.c.b16 %v2112, %v2108
    %v2169 = vpack.c.b16 %v2117, %v2113
    %v2170 = vpack.c.b16 %v2118, %v2114
    %v2171 = vpack.c.b16 %v2119, %v2115
    %v2172 = vpack.c.b16 %v2120, %v2116
    %v2173 = vpack.c.b16 %v2125, %v2121
    %v2174 = vpack.c.b16 %v2126, %v2122
    %v2175 = vpack.c.b16 %v2127, %v2123
    %v2176 = vpack.c.b16 %v2128, %v2124
    %v2177 = vpack.c.b16 %v2133, %v2129
    %v2178 = vpack.c.b16 %v2134, %v2130
    %v2179 = vpack.c.b16 %v2135, %v2131
    %v2180 = vpack.c.b16 %v2136, %v2132
    %v2181 = vpack.c.b16 %v2141, %v2137
    %v2182 = vpack.c.b16 %v2142, %v2138
    %v2183 = vpack.c.b16 %v2143, %v2139
    %v2184 = vpack.c.b16 %v2144, %v2140
    %v2185 = vpack.c.b16 %v2149, %v2145
    %v2186 = vpack.c.b16 %v2150, %v2146
    %v2187 = vpack.c.b16 %v2151, %v2147
    %v2188 = vpack.c.b16 %v2152, %v2148
    %v2189 = vpack.c.b16 %v2157, %v2153
    %v2190 = vpack.c.b16 %v2158, %v2154
    %v2191 = vpack.c.b16 %v2159, %v2155
    %v2192 = vpack.c.b16 %v2160, %v2156
    %2225 = vmatprep.subr.bf16.mxu0 %v2162
    %2226 = vmatpush1.bf16.msra.mxu0 %v2161
    %2227 = vmatprep.subr.bf16.mxu0 %v2166
    %2228 = vmatpush1.bf16.msra.mxu0 %v2165
    %2229 = vmatprep.subr.bf16.mxu0 %v2170
    %2230 = vmatpush1.bf16.msra.mxu0 %v2169
    %2231 = vmatprep.subr.bf16.mxu0 %v2174
    %2232 = vmatpush1.bf16.msra.mxu0 %v2173
    %2233 = vmatprep.subr.bf16.mxu0 %v2178
    %2234 = vmatpush1.bf16.msra.mxu0 %v2177
    %2235 = vmatprep.subr.bf16.mxu0 %v2182
    %2236 = vmatpush1.bf16.msra.mxu0 %v2181
    %2237 = vmatprep.subr.bf16.mxu0 %v2186
    %2238 = vmatpush1.bf16.msra.mxu0 %v2185
    %2239 = vmatprep.subr.bf16.mxu0 %v2190
    %2240 = vmatpush1.bf16.msra.mxu0 %v2189
    %2241 = vmatprep.subr.bf16.mxu0 0
    %2242 = vmatpush1.bf16.msra.mxu0 0
    %2243 = vmatprep.subr.bf16.mxu0 0
    %2244 = vmatpush1.bf16.msra.mxu0 0
    %2245 = vmatprep.subr.bf16.mxu0 0
    %2246 = vmatpush1.bf16.msra.mxu0 0
    %2247 = vmatprep.subr.bf16.mxu0 0
    %2248 = vmatpush1.bf16.msra.mxu0 0
    %2249 = vmatprep.subr.bf16.mxu0 0
    %2250 = vmatpush1.bf16.msra.mxu0 0
    %2251 = vmatprep.subr.bf16.mxu0 0
    %2252 = vmatpush1.bf16.msra.mxu0 0
    %2253 = vmatprep.subr.bf16.mxu0 0
    %2254 = vmatpush1.bf16.msra.mxu0 0
    %2255 = vmatprep.subr.bf16.mxu0 0
    %2256 = vmatpush1.bf16.msra.mxu0 0
    %2257 = vmatprep.mubr.bf16.mxu0 0
    %2258 = vmatmul.mubr.bf16.gmra.mrb[0].mxu0 %v2032
    %v2259 = vpop.f32.mrb[0].mxu0
    %v2260 = vadd.f32 0.0, %v2259
    %v2261 = vpop.f32.mrb[0].mxu0
    %v2262 = vadd.f32 0.0, %v2261
    %v2263 = vpop.f32.mrb[0].mxu0
    %v2264 = vpop.f32.mrb[0].mxu0
    %2265 = vdwg.mxu0
    %2266 = vmatprep.subr.bf16.mxu0 %v2164
    %2267 = vmatpush1.bf16.msra.mxu0 %v2163
    %2268 = vmatprep.subr.bf16.mxu0 %v2168
    %2269 = vmatpush1.bf16.msra.mxu0 %v2167
    %2270 = vmatprep.subr.bf16.mxu0 %v2172
    %2271 = vmatpush1.bf16.msra.mxu0 %v2171
    %2272 = vmatprep.subr.bf16.mxu0 %v2176
    %2273 = vmatpush1.bf16.msra.mxu0 %v2175
    %2274 = vmatprep.subr.bf16.mxu0 %v2180
    %2275 = vmatpush1.bf16.msra.mxu0 %v2179
    %2276 = vmatprep.subr.bf16.mxu0 %v2184
    %2277 = vmatpush1.bf16.msra.mxu0 %v2183
    %2278 = vmatprep.subr.bf16.mxu0 %v2188
    %2279 = vmatpush1.bf16.msra.mxu0 %v2187
    %2280 = vmatprep.subr.bf16.mxu0 %v2192
    %2281 = vmatpush1.bf16.msra.mxu0 %v2191
    %2282 = vmatprep.subr.bf16.mxu0 0
    %2283 = vmatpush1.bf16.msra.mxu0 0
    %2284 = vmatprep.subr.bf16.mxu0 0
    %2285 = vmatpush1.bf16.msra.mxu0 0
    %2286 = vmatprep.subr.bf16.mxu0 0
    %2287 = vmatpush1.bf16.msra.mxu0 0
    %2288 = vmatprep.subr.bf16.mxu0 0
    %2289 = vmatpush1.bf16.msra.mxu0 0
    %2290 = vmatprep.subr.bf16.mxu0 0
    %2291 = vmatpush1.bf16.msra.mxu0 0
    %2292 = vmatprep.subr.bf16.mxu0 0
    %2293 = vmatpush1.bf16.msra.mxu0 0
    %2294 = vmatprep.subr.bf16.mxu0 0
    %2295 = vmatpush1.bf16.msra.mxu0 0
    %2296 = vmatprep.subr.bf16.mxu0 0
    %2297 = vmatpush1.bf16.msra.mxu0 0
    %2298 = vmatprep.mubr.bf16.mxu0 0
    %2299 = vmatmul.mubr.bf16.gmra.mrb[0].mxu0 %v2032
    %v2300 = vpop.f32.mrb[0].mxu0
    %v2301 = vadd.f32 0.0, %v2300
    %v2302 = vpop.f32.mrb[0].mxu0
    %v2303 = vadd.f32 0.0, %v2302
    %v2304 = vpop.f32.mrb[0].mxu0
    %v2305 = vpop.f32.mrb[0].mxu0
    %2306 = vdwg.mxu0
    %v2307 = vadd.f32 %v2028, %v2260
    %v2308 = vadd.f32 %v2029, %v2262
    %v2309 = vadd.f32 %v2030, %v2301
    %v2310 = vadd.f32 %v2031, %v2303
    %v2311 = vxor.u32 %v2307, 2147483648
    %v2312 = vmul.f32 %v2311, 1.442695
    %v2313 = vpow.pop %v2312
    %v2314 = vadd.f32 %v2313, 1.0
    %v2315 = vrcp.pop %v2314
    %v2316 = vmul.f32 1.0, %v2315
    %v2317 = vxor.u32 %v2308, 2147483648
    %v2318 = vmul.f32 %v2317, 1.442695
    %v2319 = vpow.pop %v2318
    %v2320 = vadd.f32 %v2319, 1.0
    %v2321 = vrcp.pop %v2320
    %v2322 = vmul.f32 1.0, %v2321
    %v2323 = vtanh.pop %v2309
    %v2324 = vxor.u32 %v2310, 2147483648
    %v2325 = vmul.f32 %v2324, 1.442695
    %v2326 = vpow.pop %v2325
    %v2327 = vadd.f32 %v2326, 1.0
    %v2328 = vrcp.pop %v2327
    %v2329 = vmul.f32 1.0, %v2328
    %v2330 = vmul.f32 %v2322, %v2016
    %v2331 = vmul.f32 %v2316, %v2323
    %v2332 = vadd.f32 %v2330, %v2331
    %v2333 = vtanh.pop %v2332
    %v2334 = vmul.f32 %v2329, %v2333
    %v2335 = vsel %vm2024, 1, 0
    %2336 = vset.pattern.permute.xlu0 0
    %2337 = vperm.xlu0 %2336, %v2335
    %v2338 = vpop.permute.xlu0 %2337
    %vm2339 = vcmp.eq.s32.totalorder %v2338, 1
    %v2340 = vsel %vm2339, %v2332, %v2016
    %v2341 = vsel %vm2339, %v2334, %v2017
    %v2342 = vsel %vm2339, %v2334, 0.0
    %v2343 = vpack.c.bf16 %v2342, %v2342
    %s2344 = scalar_lea.vmem %s6, 24
    %2345 = vst [vmem:[%s2344] sm:$0xf] %v2343
    %s2346 = sadd.s32 %s64, 7
    %v2347 = vstv %s2346
    %vm2348 = vcmp.lt.s32.totalorder %v2347, %v74
    %s2349 = scalar_lea.vmem %s2, 112
    %v2350 = vld [vmem:[%s2349] sm:$0xff]
    %v2351 = vld [vmem:[%s2349 + $0x8] sm:$0xff]
    %v2352 = vunpack.c.l.bf16 %v2350
    %v2353 = vunpack.c.h.bf16 %v2350
    %v2354 = vunpack.c.l.bf16 %v2351
    %v2355 = vunpack.c.h.bf16 %v2351
    %v2356 = vpack.c.bf16 %v2341, %v2341
    %v2357 = vld [vmem:[%s4] sm:$0xff]
    %v2358 = vld [vmem:[%s4 + $0x8] sm:$0xff]
    %v2359 = vld [vmem:[%s4 + $0x10] sm:$0xff]
    %v2360 = vld [vmem:[%s4 + $0x18] sm:$0xff]
    %v2361 = vld [vmem:[%s4 + $0x20] sm:$0xff]
    %v2362 = vld [vmem:[%s4 + $0x28] sm:$0xff]
    %v2363 = vld [vmem:[%s4 + $0x30] sm:$0xff]
    %v2364 = vld [vmem:[%s4 + $0x38] sm:$0xff]
    %v2365 = vld [vmem:[%s4 + $0x40] sm:$0xff]
    %v2366 = vld [vmem:[%s4 + $0x48] sm:$0xff]
    %v2367 = vld [vmem:[%s4 + $0x50] sm:$0xff]
    %v2368 = vld [vmem:[%s4 + $0x58] sm:$0xff]
    %v2369 = vld [vmem:[%s4 + $0x60] sm:$0xff]
    %v2370 = vld [vmem:[%s4 + $0x68] sm:$0xff]
    %v2371 = vld [vmem:[%s4 + $0x70] sm:$0xff]
    %v2372 = vld [vmem:[%s4 + $0x78] sm:$0xff]
    %v2373 = vld [vmem:[%s4 + $0x80] sm:$0xff]
    %v2374 = vld [vmem:[%s4 + $0x88] sm:$0xff]
    %v2375 = vld [vmem:[%s4 + $0x90] sm:$0xff]
    %v2376 = vld [vmem:[%s4 + $0x98] sm:$0xff]
    %v2377 = vld [vmem:[%s4 + $0xa0] sm:$0xff]
    %v2378 = vld [vmem:[%s4 + $0xa8] sm:$0xff]
    %v2379 = vld [vmem:[%s4 + $0xb0] sm:$0xff]
    %v2380 = vld [vmem:[%s4 + $0xb8] sm:$0xff]
    %v2381 = vld [vmem:[%s4 + $0xc0] sm:$0xff]
    %v2382 = vld [vmem:[%s4 + $0xc8] sm:$0xff]
    %v2383 = vld [vmem:[%s4 + $0xd0] sm:$0xff]
    %v2384 = vld [vmem:[%s4 + $0xd8] sm:$0xff]
    %v2385 = vld [vmem:[%s4 + $0xe0] sm:$0xff]
    %v2386 = vld [vmem:[%s4 + $0xe8] sm:$0xff]
    %v2387 = vld [vmem:[%s4 + $0xf0] sm:$0xff]
    %v2388 = vld [vmem:[%s4 + $0xf8] sm:$0xff]
    %v2421 = vunpack.c.l.b16 %v2357
    %v2422 = vunpack.c.h.b16 %v2357
    %v2423 = vunpack.c.l.b16 %v2358
    %v2424 = vunpack.c.h.b16 %v2358
    %v2425 = vunpack.c.l.b16 %v2359
    %v2426 = vunpack.c.h.b16 %v2359
    %v2427 = vunpack.c.l.b16 %v2360
    %v2428 = vunpack.c.h.b16 %v2360
    %v2429 = vunpack.c.l.b16 %v2361
    %v2430 = vunpack.c.h.b16 %v2361
    %v2431 = vunpack.c.l.b16 %v2362
    %v2432 = vunpack.c.h.b16 %v2362
    %v2433 = vunpack.c.l.b16 %v2363
    %v2434 = vunpack.c.h.b16 %v2363
    %v2435 = vunpack.c.l.b16 %v2364
    %v2436 = vunpack.c.h.b16 %v2364
    %v2437 = vunpack.c.l.b16 %v2365
    %v2438 = vunpack.c.h.b16 %v2365
    %v2439 = vunpack.c.l.b16 %v2366
    %v2440 = vunpack.c.h.b16 %v2366
    %v2441 = vunpack.c.l.b16 %v2367
    %v2442 = vunpack.c.h.b16 %v2367
    %v2443 = vunpack.c.l.b16 %v2368
    %v2444 = vunpack.c.h.b16 %v2368
    %v2445 = vunpack.c.l.b16 %v2369
    %v2446 = vunpack.c.h.b16 %v2369
    %v2447 = vunpack.c.l.b16 %v2370
    %v2448 = vunpack.c.h.b16 %v2370
    %v2449 = vunpack.c.l.b16 %v2371
    %v2450 = vunpack.c.h.b16 %v2371
    %v2451 = vunpack.c.l.b16 %v2372
    %v2452 = vunpack.c.h.b16 %v2372
    %v2453 = vunpack.c.l.b16 %v2373
    %v2454 = vunpack.c.h.b16 %v2373
    %v2455 = vunpack.c.l.b16 %v2374
    %v2456 = vunpack.c.h.b16 %v2374
    %v2457 = vunpack.c.l.b16 %v2375
    %v2458 = vunpack.c.h.b16 %v2375
    %v2459 = vunpack.c.l.b16 %v2376
    %v2460 = vunpack.c.h.b16 %v2376
    %v2461 = vunpack.c.l.b16 %v2377
    %v2462 = vunpack.c.h.b16 %v2377
    %v2463 = vunpack.c.l.b16 %v2378
    %v2464 = vunpack.c.h.b16 %v2378
    %v2465 = vunpack.c.l.b16 %v2379
    %v2466 = vunpack.c.h.b16 %v2379
    %v2467 = vunpack.c.l.b16 %v2380
    %v2468 = vunpack.c.h.b16 %v2380
    %v2469 = vunpack.c.l.b16 %v2381
    %v2470 = vunpack.c.h.b16 %v2381
    %v2471 = vunpack.c.l.b16 %v2382
    %v2472 = vunpack.c.h.b16 %v2382
    %v2473 = vunpack.c.l.b16 %v2383
    %v2474 = vunpack.c.h.b16 %v2383
    %v2475 = vunpack.c.l.b16 %v2384
    %v2476 = vunpack.c.h.b16 %v2384
    %v2477 = vunpack.c.l.b16 %v2385
    %v2478 = vunpack.c.h.b16 %v2385
    %v2479 = vunpack.c.l.b16 %v2386
    %v2480 = vunpack.c.h.b16 %v2386
    %v2481 = vunpack.c.l.b16 %v2387
    %v2482 = vunpack.c.h.b16 %v2387
    %v2483 = vunpack.c.l.b16 %v2388
    %v2484 = vunpack.c.h.b16 %v2388
    %v2485 = vpack.c.b16 %v2425, %v2421
    %v2486 = vpack.c.b16 %v2426, %v2422
    %v2487 = vpack.c.b16 %v2427, %v2423
    %v2488 = vpack.c.b16 %v2428, %v2424
    %v2489 = vpack.c.b16 %v2433, %v2429
    %v2490 = vpack.c.b16 %v2434, %v2430
    %v2491 = vpack.c.b16 %v2435, %v2431
    %v2492 = vpack.c.b16 %v2436, %v2432
    %v2493 = vpack.c.b16 %v2441, %v2437
    %v2494 = vpack.c.b16 %v2442, %v2438
    %v2495 = vpack.c.b16 %v2443, %v2439
    %v2496 = vpack.c.b16 %v2444, %v2440
    %v2497 = vpack.c.b16 %v2449, %v2445
    %v2498 = vpack.c.b16 %v2450, %v2446
    %v2499 = vpack.c.b16 %v2451, %v2447
    %v2500 = vpack.c.b16 %v2452, %v2448
    %v2501 = vpack.c.b16 %v2457, %v2453
    %v2502 = vpack.c.b16 %v2458, %v2454
    %v2503 = vpack.c.b16 %v2459, %v2455
    %v2504 = vpack.c.b16 %v2460, %v2456
    %v2505 = vpack.c.b16 %v2465, %v2461
    %v2506 = vpack.c.b16 %v2466, %v2462
    %v2507 = vpack.c.b16 %v2467, %v2463
    %v2508 = vpack.c.b16 %v2468, %v2464
    %v2509 = vpack.c.b16 %v2473, %v2469
    %v2510 = vpack.c.b16 %v2474, %v2470
    %v2511 = vpack.c.b16 %v2475, %v2471
    %v2512 = vpack.c.b16 %v2476, %v2472
    %v2513 = vpack.c.b16 %v2481, %v2477
    %v2514 = vpack.c.b16 %v2482, %v2478
    %v2515 = vpack.c.b16 %v2483, %v2479
    %v2516 = vpack.c.b16 %v2484, %v2480
    %2549 = vmatprep.subr.bf16.mxu0 %v2486
    %2550 = vmatpush1.bf16.msra.mxu0 %v2485
    %2551 = vmatprep.subr.bf16.mxu0 %v2490
    %2552 = vmatpush1.bf16.msra.mxu0 %v2489
    %2553 = vmatprep.subr.bf16.mxu0 %v2494
    %2554 = vmatpush1.bf16.msra.mxu0 %v2493
    %2555 = vmatprep.subr.bf16.mxu0 %v2498
    %2556 = vmatpush1.bf16.msra.mxu0 %v2497
    %2557 = vmatprep.subr.bf16.mxu0 %v2502
    %2558 = vmatpush1.bf16.msra.mxu0 %v2501
    %2559 = vmatprep.subr.bf16.mxu0 %v2506
    %2560 = vmatpush1.bf16.msra.mxu0 %v2505
    %2561 = vmatprep.subr.bf16.mxu0 %v2510
    %2562 = vmatpush1.bf16.msra.mxu0 %v2509
    %2563 = vmatprep.subr.bf16.mxu0 %v2514
    %2564 = vmatpush1.bf16.msra.mxu0 %v2513
    %2565 = vmatprep.subr.bf16.mxu0 0
    %2566 = vmatpush1.bf16.msra.mxu0 0
    %2567 = vmatprep.subr.bf16.mxu0 0
    %2568 = vmatpush1.bf16.msra.mxu0 0
    %2569 = vmatprep.subr.bf16.mxu0 0
    %2570 = vmatpush1.bf16.msra.mxu0 0
    %2571 = vmatprep.subr.bf16.mxu0 0
    %2572 = vmatpush1.bf16.msra.mxu0 0
    %2573 = vmatprep.subr.bf16.mxu0 0
    %2574 = vmatpush1.bf16.msra.mxu0 0
    %2575 = vmatprep.subr.bf16.mxu0 0
    %2576 = vmatpush1.bf16.msra.mxu0 0
    %2577 = vmatprep.subr.bf16.mxu0 0
    %2578 = vmatpush1.bf16.msra.mxu0 0
    %2579 = vmatprep.subr.bf16.mxu0 0
    %2580 = vmatpush1.bf16.msra.mxu0 0
    %2581 = vmatprep.mubr.bf16.mxu0 0
    %2582 = vmatmul.mubr.bf16.gmra.mrb[0].mxu0 %v2356
    %v2583 = vpop.f32.mrb[0].mxu0
    %v2584 = vadd.f32 0.0, %v2583
    %v2585 = vpop.f32.mrb[0].mxu0
    %v2586 = vadd.f32 0.0, %v2585
    %v2587 = vpop.f32.mrb[0].mxu0
    %v2588 = vpop.f32.mrb[0].mxu0
    %2589 = vdwg.mxu0
    %2590 = vmatprep.subr.bf16.mxu0 %v2488
    %2591 = vmatpush1.bf16.msra.mxu0 %v2487
    %2592 = vmatprep.subr.bf16.mxu0 %v2492
    %2593 = vmatpush1.bf16.msra.mxu0 %v2491
    %2594 = vmatprep.subr.bf16.mxu0 %v2496
    %2595 = vmatpush1.bf16.msra.mxu0 %v2495
    %2596 = vmatprep.subr.bf16.mxu0 %v2500
    %2597 = vmatpush1.bf16.msra.mxu0 %v2499
    %2598 = vmatprep.subr.bf16.mxu0 %v2504
    %2599 = vmatpush1.bf16.msra.mxu0 %v2503
    %2600 = vmatprep.subr.bf16.mxu0 %v2508
    %2601 = vmatpush1.bf16.msra.mxu0 %v2507
    %2602 = vmatprep.subr.bf16.mxu0 %v2512
    %2603 = vmatpush1.bf16.msra.mxu0 %v2511
    %2604 = vmatprep.subr.bf16.mxu0 %v2516
    %2605 = vmatpush1.bf16.msra.mxu0 %v2515
    %2606 = vmatprep.subr.bf16.mxu0 0
    %2607 = vmatpush1.bf16.msra.mxu0 0
    %2608 = vmatprep.subr.bf16.mxu0 0
    %2609 = vmatpush1.bf16.msra.mxu0 0
    %2610 = vmatprep.subr.bf16.mxu0 0
    %2611 = vmatpush1.bf16.msra.mxu0 0
    %2612 = vmatprep.subr.bf16.mxu0 0
    %2613 = vmatpush1.bf16.msra.mxu0 0
    %2614 = vmatprep.subr.bf16.mxu0 0
    %2615 = vmatpush1.bf16.msra.mxu0 0
    %2616 = vmatprep.subr.bf16.mxu0 0
    %2617 = vmatpush1.bf16.msra.mxu0 0
    %2618 = vmatprep.subr.bf16.mxu0 0
    %2619 = vmatpush1.bf16.msra.mxu0 0
    %2620 = vmatprep.subr.bf16.mxu0 0
    %2621 = vmatpush1.bf16.msra.mxu0 0
    %2622 = vmatprep.mubr.bf16.mxu0 0
    %2623 = vmatmul.mubr.bf16.gmra.mrb[0].mxu0 %v2356
    %v2624 = vpop.f32.mrb[0].mxu0
    %v2625 = vadd.f32 0.0, %v2624
    %v2626 = vpop.f32.mrb[0].mxu0
    %v2627 = vadd.f32 0.0, %v2626
    %v2628 = vpop.f32.mrb[0].mxu0
    %v2629 = vpop.f32.mrb[0].mxu0
    %2630 = vdwg.mxu0
    %v2631 = vadd.f32 %v2352, %v2584
    %v2632 = vadd.f32 %v2353, %v2586
    %v2633 = vadd.f32 %v2354, %v2625
    %v2634 = vadd.f32 %v2355, %v2627
    %v2635 = vxor.u32 %v2631, 2147483648
    %v2636 = vmul.f32 %v2635, 1.442695
    %v2637 = vpow.pop %v2636
    %v2638 = vadd.f32 %v2637, 1.0
    %v2639 = vrcp.pop %v2638
    %v2640 = vmul.f32 1.0, %v2639
    %v2641 = vxor.u32 %v2632, 2147483648
    %v2642 = vmul.f32 %v2641, 1.442695
    %v2643 = vpow.pop %v2642
    %v2644 = vadd.f32 %v2643, 1.0
    %v2645 = vrcp.pop %v2644
    %v2646 = vmul.f32 1.0, %v2645
    %v2647 = vtanh.pop %v2633
    %v2648 = vxor.u32 %v2634, 2147483648
    %v2649 = vmul.f32 %v2648, 1.442695
    %v2650 = vpow.pop %v2649
    %v2651 = vadd.f32 %v2650, 1.0
    %v2652 = vrcp.pop %v2651
    %v2653 = vmul.f32 1.0, %v2652
    %v2654 = vmul.f32 %v2646, %v2340
    %v2655 = vmul.f32 %v2640, %v2647
    %v2656 = vadd.f32 %v2654, %v2655
    %v2657 = vtanh.pop %v2656
    %v2658 = vmul.f32 %v2653, %v2657
    %v2659 = vsel %vm2348, 1, 0
    %2660 = vset.pattern.permute.xlu0 0
    %2661 = vperm.xlu0 %2660, %v2659
    %v2662 = vpop.permute.xlu0 %2661
    %vm2663 = vcmp.eq.s32.totalorder %v2662, 1
    %v2664 = vsel %vm2663, %v2656, %v2340
    %v2665 = vsel %vm2663, %v2658, %v2341
    %v2666 = vsel %vm2663, %v2658, 0.0
    %v2667 = vpack.c.bf16 %v2666, %v2666
    %s2668 = scalar_lea.vmem %s6, 28
    %2669 = vst [vmem:[%s2668] sm:$0xf] %v2667
    %2670 = vst [vmem:[#allocation2] sm:$0xff] %v2665
    %2671 = vst [vmem:[#allocation3] sm:$0xff] %v2664
  $region29: #{sentence_encoder_forward.2} parent=0 // pred_fallthru
    _
  %p2672 = scmp.ge.s32.totalorder %s64, %s65
  // Predicated region
  $region30: #{sentence_encoder_forward.2} parent=0 // pred_check
    %p2673 = pneg %p2672
  $region31: #{sentence_encoder_forward.2} parent=0 // pred_check_branch
    %2675 = sbr.rel (%p2673) target = $region33
  $region32: #{sentence_encoder_forward.2} parent=0 // pred_region
    %2676 = vst [vmem:[%s6] sm:$0xf] 0
    %2677 = vst [vmem:[%s6 + $0x4] sm:$0xf] 0
    %2678 = vst [vmem:[%s6 + $0x8] sm:$0xf] 0
    %2679 = vst [vmem:[%s6 + $0xc] sm:$0xf] 0
    %2680 = vst [vmem:[%s6 + $0x10] sm:$0xf] 0
    %2681 = vst [vmem:[%s6 + $0x14] sm:$0xf] 0
    %2682 = vst [vmem:[%s6 + $0x18] sm:$0xf] 0
    %2683 = vst [vmem:[%s6 + $0x1c] sm:$0xf] 0
  $region33: #{sentence_encoder_forward.2} parent=0 // pred_fallthru
    _
  %s2684 = ssub.s32 0, %s64
  %p2685 = scmp.lt.s32.totalorder %s2684, %s65
  // Predicated region
  $region34: #{sentence_encoder_forward.2} parent=0 // pred_check
    %p2686 = pneg %p2685
  $region35: #{sentence_encoder_forward.2} parent=0 // pred_check_branch
    %2688 = sbr.rel (%p2686) target = $region37
  $region36: #{sentence_encoder_forward.2} parent=0 // pred_region
    %v2689 = vld [vmem:[#allocation4] sm:$0xff]
    %v2690 = vld [vmem:[#allocation5] sm:$0xff]
    %s2691 = ssub.s32 7, %s64
    %v2692 = vstv %s2691
    %vm2693 = vcmp.lt.s32.totalorder %v2692, %v74
    %s2694 = scalar_lea.vmem %s52, 112
    %v2695 = vld [vmem:[%s2694] sm:$0xff]
    %v2696 = vld [vmem:[%s2694 + $0x8] sm:$0xff]
    %v2697 = vunpack.c.l.bf16 %v2695
    %v2698 = vunpack.c.h.bf16 %v2695
    %v2699 = vunpack.c.l.bf16 %v2696
    %v2700 = vunpack.c.h.bf16 %v2696
    %v2701 = vpack.c.bf16 %v2689, %v2689
    %v2702 = vld [vmem:[%s5] sm:$0xff]
    %v2703 = vld [vmem:[%s5 + $0x8] sm:$0xff]
    %v2704 = vld [vmem:[%s5 + $0x10] sm:$0xff]
    %v2705 = vld [vmem:[%s5 + $0x18] sm:$0xff]
    %v2706 = vld [vmem:[%s5 + $0x20] sm:$0xff]
    %v2707 = vld [vmem:[%s5 + $0x28] sm:$0xff]
    %v2708 = vld [vmem:[%s5 + $0x30] sm:$0xff]
    %v2709 = vld [vmem:[%s5 + $0x38] sm:$0xff]
    %v2710 = vld [vmem:[%s5 + $0x40] sm:$0xff]
    %v2711 = vld [vmem:[%s5 + $0x48] sm:$0xff]
    %v2712 = vld [vmem:[%s5 + $0x50] sm:$0xff]
    %v2713 = vld [vmem:[%s5 + $0x58] sm:$0xff]
    %v2714 = vld [vmem:[%s5 + $0x60] sm:$0xff]
    %v2715 = vld [vmem:[%s5 + $0x68] sm:$0xff]
    %v2716 = vld [vmem:[%s5 + $0x70] sm:$0xff]
    %v2717 = vld [vmem:[%s5 + $0x78] sm:$0xff]
    %v2718 = vld [vmem:[%s5 + $0x80] sm:$0xff]
    %v2719 = vld [vmem:[%s5 + $0x88] sm:$0xff]
    %v2720 = vld [vmem:[%s5 + $0x90] sm:$0xff]
    %v2721 = vld [vmem:[%s5 + $0x98] sm:$0xff]
    %v2722 = vld [vmem:[%s5 + $0xa0] sm:$0xff]
    %v2723 = vld [vmem:[%s5 + $0xa8] sm:$0xff]
    %v2724 = vld [vmem:[%s5 + $0xb0] sm:$0xff]
    %v2725 = vld [vmem:[%s5 + $0xb8] sm:$0xff]
    %v2726 = vld [vmem:[%s5 + $0xc0] sm:$0xff]
    %v2727 = vld [vmem:[%s5 + $0xc8] sm:$0xff]
    %v2728 = vld [vmem:[%s5 + $0xd0] sm:$0xff]
    %v2729 = vld [vmem:[%s5 + $0xd8] sm:$0xff]
    %v2730 = vld [vmem:[%s5 + $0xe0] sm:$0xff]
    %v2731 = vld [vmem:[%s5 + $0xe8] sm:$0xff]
    %v2732 = vld [vmem:[%s5 + $0xf0] sm:$0xff]
    %v2733 = vld [vmem:[%s5 + $0xf8] sm:$0xff]
    %v2766 = vunpack.c.l.b16 %v2702
    %v2767 = vunpack.c.h.b16 %v2702
    %v2768 = vunpack.c.l.b16 %v2703
    %v2769 = vunpack.c.h.b16 %v2703
    %v2770 = vunpack.c.l.b16 %v2704
    %v2771 = vunpack.c.h.b16 %v2704
    %v2772 = vunpack.c.l.b16 %v2705
    %v2773 = vunpack.c.h.b16 %v2705
    %v2774 = vunpack.c.l.b16 %v2706
    %v2775 = vunpack.c.h.b16 %v2706
    %v2776 = vunpack.c.l.b16 %v2707
    %v2777 = vunpack.c.h.b16 %v2707
    %v2778 = vunpack.c.l.b16 %v2708
    %v2779 = vunpack.c.h.b16 %v2708
    %v2780 = vunpack.c.l.b16 %v2709
    %v2781 = vunpack.c.h.b16 %v2709
    %v2782 = vunpack.c.l.b16 %v2710
    %v2783 = vunpack.c.h.b16 %v2710
    %v2784 = vunpack.c.l.b16 %v2711
    %v2785 = vunpack.c.h.b16 %v2711
    %v2786 = vunpack.c.l.b16 %v2712
    %v2787 = vunpack.c.h.b16 %v2712
    %v2788 = vunpack.c.l.b16 %v2713
    %v2789 = vunpack.c.h.b16 %v2713
    %v2790 = vunpack.c.l.b16 %v2714
    %v2791 = vunpack.c.h.b16 %v2714
    %v2792 = vunpack.c.l.b16 %v2715
    %v2793 = vunpack.c.h.b16 %v2715
    %v2794 = vunpack.c.l.b16 %v2716
    %v2795 = vunpack.c.h.b16 %v2716
    %v2796 = vunpack.c.l.b16 %v2717
    %v2797 = vunpack.c.h.b16 %v2717
    %v2798 = vunpack.c.l.b16 %v2718
    %v2799 = vunpack.c.h.b16 %v2718
    %v2800 = vunpack.c.l.b16 %v2719
    %v2801 = vunpack.c.h.b16 %v2719
    %v2802 = vunpack.c.l.b16 %v2720
    %v2803 = vunpack.c.h.b16 %v2720
    %v2804 = vunpack.c.l.b16 %v2721
    %v2805 = vunpack.c.h.b16 %v2721
    %v2806 = vunpack.c.l.b16 %v2722
    %v2807 = vunpack.c.h.b16 %v2722
    %v2808 = vunpack.c.l.b16 %v2723
    %v2809 = vunpack.c.h.b16 %v2723
    %v2810 = vunpack.c.l.b16 %v2724
    %v2811 = vunpack.c.h.b16 %v2724
    %v2812 = vunpack.c.l.b16 %v2725
    %v2813 = vunpack.c.h.b16 %v2725
    %v2814 = vunpack.c.l.b16 %v2726
    %v2815 = vunpack.c.h.b16 %v2726
    %v2816 = vunpack.c.l.b16 %v2727
    %v2817 = vunpack.c.h.b16 %v2727
    %v2818 = vunpack.c.l.b16 %v2728
    %v2819 = vunpack.c.h.b16 %v2728
    %v2820 = vunpack.c.l.b16 %v2729
    %v2821 = vunpack.c.h.b16 %v2729
    %v2822 = vunpack.c.l.b16 %v2730
    %v2823 = vunpack.c.h.b16 %v2730
    %v2824 = vunpack.c.l.b16 %v2731
    %v2825 = vunpack.c.h.b16 %v2731
    %v2826 = vunpack.c.l.b16 %v2732
    %v2827 = vunpack.c.h.b16 %v2732
    %v2828 = vunpack.c.l.b16 %v2733
    %v2829 = vunpack.c.h.b16 %v2733
    %v2830 = vpack.c.b16 %v2770, %v2766
    %v2831 = vpack.c.b16 %v2771, %v2767
    %v2832 = vpack.c.b16 %v2772, %v2768
    %v2833 = vpack.c.b16 %v2773, %v2769
    %v2834 = vpack.c.b16 %v2778, %v2774
    %v2835 = vpack.c.b16 %v2779, %v2775
    %v2836 = vpack.c.b16 %v2780, %v2776
    %v2837 = vpack.c.b16 %v2781, %v2777
    %v2838 = vpack.c.b16 %v2786, %v2782
    %v2839 = vpack.c.b16 %v2787, %v2783
    %v2840 = vpack.c.b16 %v2788, %v2784
    %v2841 = vpack.c.b16 %v2789, %v2785
    %v2842 = vpack.c.b16 %v2794, %v2790
    %v2843 = vpack.c.b16 %v2795, %v2791
    %v2844 = vpack.c.b16 %v2796, %v2792
    %v2845 = vpack.c.b16 %v2797, %v2793
    %v2846 = vpack.c.b16 %v2802, %v2798
    %v2847 = vpack.c.b16 %v2803, %v2799
    %v2848 = vpack.c.b16 %v2804, %v2800
    %v2849 = vpack.c.b16 %v2805, %v2801
    %v2850 = vpack.c.b16 %v2810, %v2806
    %v2851 = vpack.c.b16 %v2811, %v2807
    %v2852 = vpack.c.b16 %v2812, %v2808
    %v2853 = vpack.c.b16 %v2813, %v2809
    %v2854 = vpack.c.b16 %v2818, %v2814
    %v2855 = vpack.c.b16 %v2819, %v2815
    %v2856 = vpack.c.b16 %v2820, %v2816
    %v2857 = vpack.c.b16 %v2821, %v2817
    %v2858 = vpack.c.b16 %v2826, %v2822
    %v2859 = vpack.c.b16 %v2827, %v2823
    %v2860 = vpack.c.b16 %v2828, %v2824
    %v2861 = vpack.c.b16 %v2829, %v2825
    %2894 = vmatprep.subr.bf16.mxu0 %v2831
    %2895 = vmatpush1.bf16.msra.mxu0 %v2830
    %2896 = vmatprep.subr.bf16.mxu0 %v2835
    %2897 = vmatpush1.bf16.msra.mxu0 %v2834
    %2898 = vmatprep.subr.bf16.mxu0 %v2839
    %2899 = vmatpush1.bf16.msra.mxu0 %v2838
    %2900 = vmatprep.subr.bf16.mxu0 %v2843
    %2901 = vmatpush1.bf16.msra.mxu0 %v2842
    %2902 = vmatprep.subr.bf16.mxu0 %v2847
    %2903 = vmatpush1.bf16.msra.mxu0 %v2846
    %2904 = vmatprep.subr.bf16.mxu0 %v2851
    %2905 = vmatpush1.bf16.msra.mxu0 %v2850
    %2906 = vmatprep.subr.bf16.mxu0 %v2855
    %2907 = vmatpush1.bf16.msra.mxu0 %v2854
    %2908 = vmatprep.subr.bf16.mxu0 %v2859
    %2909 = vmatpush1.bf16.msra.mxu0 %v2858
    %2910 = vmatprep.subr.bf16.mxu0 0
    %2911 = vmatpush1.bf16.msra.mxu0 0
    %2912 = vmatprep.subr.bf16.mxu0 0
    %2913 = vmatpush1.bf16.msra.mxu0 0
    %2914 = vmatprep.subr.bf16.mxu0 0
    %2915 = vmatpush1.bf16.msra.mxu0 0
    %2916 = vmatprep.subr.bf16.mxu0 0
    %2917 = vmatpush1.bf16.msra.mxu0 0
    %2918 = vmatprep.subr.bf16.mxu0 0
    %2919 = vmatpush1.bf16.msra.mxu0 0
    %2920 = vmatprep.subr.bf16.mxu0 0
    %2921 = vmatpush1.bf16.msra.mxu0 0
    %2922 = vmatprep.subr.bf16.mxu0 0
    %2923 = vmatpush1.bf16.msra.mxu0 0
    %2924 = vmatprep.subr.bf16.mxu0 0
    %2925 = vmatpush1.bf16.msra.mxu0 0
    %2926 = vmatprep.mubr.bf16.mxu0 0
    %2927 = vmatmul.mubr.bf16.gmra.mrb[0].mxu0 %v2701
    %v2928 = vpop.f32.mrb[0].mxu0
    %v2929 = vadd.f32 0.0, %v2928
    %v2930 = vpop.f32.mrb[0].mxu0
    %v2931 = vadd.f32 0.0, %v2930
    %v2932 = vpop.f32.mrb[0].mxu0
    %v2933 = vpop.f32.mrb[0].mxu0
    %2934 = vdwg.mxu0
    %2935 = vmatprep.subr.bf16.mxu0 %v2833
    %2936 = vmatpush1.bf16.msra.mxu0 %v2832
    %2937 = vmatprep.subr.bf16.mxu0 %v2837
    %2938 = vmatpush1.bf16.msra.mxu0 %v2836
    %2939 = vmatprep.subr.bf16.mxu0 %v2841
    %2940 = vmatpush1.bf16.msra.mxu0 %v2840
    %2941 = vmatprep.subr.bf16.mxu0 %v2845
    %2942 = vmatpush1.bf16.msra.mxu0 %v2844
    %2943 = vmatprep.subr.bf16.mxu0 %v2849
    %2944 = vmatpush1.bf16.msra.mxu0 %v2848
    %2945 = vmatprep.subr.bf16.mxu0 %v2853
    %2946 = vmatpush1.bf16.msra.mxu0 %v2852
    %2947 = vmatprep.subr.bf16.mxu0 %v2857
    %2948 = vmatpush1.bf16.msra.mxu0 %v2856
    %2949 = vmatprep.subr.bf16.mxu0 %v2861
    %2950 = vmatpush1.bf16.msra.mxu0 %v2860
    %2951 = vmatprep.subr.bf16.mxu0 0
    %2952 = vmatpush1.bf16.msra.mxu0 0
    %2953 = vmatprep.subr.bf16.mxu0 0
    %2954 = vmatpush1.bf16.msra.mxu0 0
    %2955 = vmatprep.subr.bf16.mxu0 0
    %2956 = vmatpush1.bf16.msra.mxu0 0
    %2957 = vmatprep.subr.bf16.mxu0 0
    %2958 = vmatpush1.bf16.msra.mxu0 0
    %2959 = vmatprep.subr.bf16.mxu0 0
    %2960 = vmatpush1.bf16.msra.mxu0 0
    %2961 = vmatprep.subr.bf16.mxu0 0
    %2962 = vmatpush1.bf16.msra.mxu0 0
    %2963 = vmatprep.subr.bf16.mxu0 0
    %2964 = vmatpush1.bf16.msra.mxu0 0
    %2965 = vmatprep.subr.bf16.mxu0 0
    %2966 = vmatpush1.bf16.msra.mxu0 0
    %2967 = vmatprep.mubr.bf16.mxu0 0
    %2968 = vmatmul.mubr.bf16.gmra.mrb[0].mxu0 %v2701
    %v2969 = vpop.f32.mrb[0].mxu0
    %v2970 = vadd.f32 0.0, %v2969
    %v2971 = vpop.f32.mrb[0].mxu0
    %v2972 = vadd.f32 0.0, %v2971
    %v2973 = vpop.f32.mrb[0].mxu0
    %v2974 = vpop.f32.mrb[0].mxu0
    %2975 = vdwg.mxu0
    %v2976 = vadd.f32 %v2697, %v2929
    %v2977 = vadd.f32 %v2698, %v2931
    %v2978 = vadd.f32 %v2699, %v2970
    %v2979 = vadd.f32 %v2700, %v2972
    %v2980 = vxor.u32 %v2976, 2147483648
    %v2981 = vmul.f32 %v2980, 1.442695
    %v2982 = vpow.pop %v2981
    %v2983 = vadd.f32 %v2982, 1.0
    %v2984 = vrcp.pop %v2983
    %v2985 = vmul.f32 1.0, %v2984
    %v2986 = vxor.u32 %v2977, 2147483648
    %v2987 = vmul.f32 %v2986, 1.442695
    %v2988 = vpow.pop %v2987
    %v2989 = vadd.f32 %v2988, 1.0
    %v2990 = vrcp.pop %v2989
    %v2991 = vmul.f32 1.0, %v2990
    %v2992 = vtanh.pop %v2978
    %v2993 = vxor.u32 %v2979, 2147483648
    %v2994 = vmul.f32 %v2993, 1.442695
    %v2995 = vpow.pop %v2994
    %v2996 = vadd.f32 %v2995, 1.0
    %v2997 = vrcp.pop %v2996
    %v2998 = vmul.f32 1.0, %v2997
    %v2999 = vmul.f32 %v2991, %v2690
    %v3000 = vmul.f32 %v2985, %v2992
    %v3001 = vadd.f32 %v2999, %v3000
    %v3002 = vtanh.pop %v3001
    %v3003 = vmul.f32 %v2998, %v3002
    %v3004 = vsel %vm2693, 1, 0
    %3005 = vset.pattern.permute.xlu0 0
    %3006 = vperm.xlu0 %3005, %v3004
    %v3007 = vpop.permute.xlu0 %3006
    %vm3008 = vcmp.eq.s32.totalorder %v3007, 1
    %v3009 = vsel %vm3008, %v3001, %v2690
    %v3010 = vsel %vm3008, %v3003, %v2689
    %v3011 = vsel %vm3008, %v3003, 0.0
    %v3012 = vpack.c.bf16 %v3011, %v3011
    %s3013 = scalar_lea.vmem %s60, 28
    %3014 = vst [vmem:[%s3013] sm:$0xf] %v3012
    %s3015 = ssub.s32 6, %s64
    %v3016 = vstv %s3015
    %vm3017 = vcmp.lt.s32.totalorder %v3016, %v74
    %s3018 = scalar_lea.vmem %s52, 96
    %v3019 = vld [vmem:[%s3018] sm:$0xff]
    %v3020 = vld [vmem:[%s3018 + $0x8] sm:$0xff]
    %v3021 = vunpack.c.l.bf16 %v3019
    %v3022 = vunpack.c.h.bf16 %v3019
    %v3023 = vunpack.c.l.bf16 %v3020
    %v3024 = vunpack.c.h.bf16 %v3020
    %v3025 = vpack.c.bf16 %v3010, %v3010
    %v3026 = vld [vmem:[%s5] sm:$0xff]
    %v3027 = vld [vmem:[%s5 + $0x8] sm:$0xff]
    %v3028 = vld [vmem:[%s5 + $0x10] sm:$0xff]
    %v3029 = vld [vmem:[%s5 + $0x18] sm:$0xff]
    %v3030 = vld [vmem:[%s5 + $0x20] sm:$0xff]
    %v3031 = vld [vmem:[%s5 + $0x28] sm:$0xff]
    %v3032 = vld [vmem:[%s5 + $0x30] sm:$0xff]
    %v3033 = vld [vmem:[%s5 + $0x38] sm:$0xff]
    %v3034 = vld [vmem:[%s5 + $0x40] sm:$0xff]
    %v3035 = vld [vmem:[%s5 + $0x48] sm:$0xff]
    %v3036 = vld [vmem:[%s5 + $0x50] sm:$0xff]
    %v3037 = vld [vmem:[%s5 + $0x58] sm:$0xff]
    %v3038 = vld [vmem:[%s5 + $0x60] sm:$0xff]
    %v3039 = vld [vmem:[%s5 + $0x68] sm:$0xff]
    %v3040 = vld [vmem:[%s5 + $0x70] sm:$0xff]
    %v3041 = vld [vmem:[%s5 + $0x78] sm:$0xff]
    %v3042 = vld [vmem:[%s5 + $0x80] sm:$0xff]
    %v3043 = vld [vmem:[%s5 + $0x88] sm:$0xff]
    %v3044 = vld [vmem:[%s5 + $0x90] sm:$0xff]
    %v3045 = vld [vmem:[%s5 + $0x98] sm:$0xff]
    %v3046 = vld [vmem:[%s5 + $0xa0] sm:$0xff]
    %v3047 = vld [vmem:[%s5 + $0xa8] sm:$0xff]
    %v3048 = vld [vmem:[%s5 + $0xb0] sm:$0xff]
    %v3049 = vld [vmem:[%s5 + $0xb8] sm:$0xff]
    %v3050 = vld [vmem:[%s5 + $0xc0] sm:$0xff]
    %v3051 = vld [vmem:[%s5 + $0xc8] sm:$0xff]
    %v3052 = vld [vmem:[%s5 + $0xd0] sm:$0xff]
    %v3053 = vld [vmem:[%s5 + $0xd8] sm:$0xff]
    %v3054 = vld [vmem:[%s5 + $0xe0] sm:$0xff]
    %v3055 = vld [vmem:[%s5 + $0xe8] sm:$0xff]
    %v3056 = vld [vmem:[%s5 + $0xf0] sm:$0xff]
    %v3057 = vld [vmem:[%s5 + $0xf8] sm:$0xff]
    %v3090 = vunpack.c.l.b16 %v3026
    %v3091 = vunpack.c.h.b16 %v3026
    %v3092 = vunpack.c.l.b16 %v3027
    %v3093 = vunpack.c.h.b16 %v3027
    %v3094 = vunpack.c.l.b16 %v3028
    %v3095 = vunpack.c.h.b16 %v3028
    %v3096 = vunpack.c.l.b16 %v3029
    %v3097 = vunpack.c.h.b16 %v3029
    %v3098 = vunpack.c.l.b16 %v3030
    %v3099 = vunpack.c.h.b16 %v3030
    %v3100 = vunpack.c.l.b16 %v3031
    %v3101 = vunpack.c.h.b16 %v3031
    %v3102 = vunpack.c.l.b16 %v3032
    %v3103 = vunpack.c.h.b16 %v3032
    %v3104 = vunpack.c.l.b16 %v3033
    %v3105 = vunpack.c.h.b16 %v3033
    %v3106 = vunpack.c.l.b16 %v3034
    %v3107 = vunpack.c.h.b16 %v3034
    %v3108 = vunpack.c.l.b16 %v3035
    %v3109 = vunpack.c.h.b16 %v3035
    %v3110 = vunpack.c.l.b16 %v3036
    %v3111 = vunpack.c.h.b16 %v3036
    %v3112 = vunpack.c.l.b16 %v3037
    %v3113 = vunpack.c.h.b16 %v3037
    %v3114 = vunpack.c.l.b16 %v3038
    %v3115 = vunpack.c.h.b16 %v3038
    %v3116 = vunpack.c.l.b16 %v3039
    %v3117 = vunpack.c.h.b16 %v3039
    %v3118 = vunpack.c.l.b16 %v3040
    %v3119 = vunpack.c.h.b16 %v3040
    %v3120 = vunpack.c.l.b16 %v3041
    %v3121 = vunpack.c.h.b16 %v3041
    %v3122 = vunpack.c.l.b16 %v3042
    %v3123 = vunpack.c.h.b16 %v3042
    %v3124 = vunpack.c.l.b16 %v3043
    %v3125 = vunpack.c.h.b16 %v3043
    %v3126 = vunpack.c.l.b16 %v3044
    %v3127 = vunpack.c.h.b16 %v3044
    %v3128 = vunpack.c.l.b16 %v3045
    %v3129 = vunpack.c.h.b16 %v3045
    %v3130 = vunpack.c.l.b16 %v3046
    %v3131 = vunpack.c.h.b16 %v3046
    %v3132 = vunpack.c.l.b16 %v3047
    %v3133 = vunpack.c.h.b16 %v3047
    %v3134 = vunpack.c.l.b16 %v3048
    %v3135 = vunpack.c.h.b16 %v3048
    %v3136 = vunpack.c.l.b16 %v3049
    %v3137 = vunpack.c.h.b16 %v3049
    %v3138 = vunpack.c.l.b16 %v3050
    %v3139 = vunpack.c.h.b16 %v3050
    %v3140 = vunpack.c.l.b16 %v3051
    %v3141 = vunpack.c.h.b16 %v3051
    %v3142 = vunpack.c.l.b16 %v3052
    %v3143 = vunpack.c.h.b16 %v3052
    %v3144 = vunpack.c.l.b16 %v3053
    %v3145 = vunpack.c.h.b16 %v3053
    %v3146 = vunpack.c.l.b16 %v3054
    %v3147 = vunpack.c.h.b16 %v3054
    %v3148 = vunpack.c.l.b16 %v3055
    %v3149 = vunpack.c.h.b16 %v3055
    %v3150 = vunpack.c.l.b16 %v3056
    %v3151 = vunpack.c.h.b16 %v3056
    %v3152 = vunpack.c.l.b16 %v3057
    %v3153 = vunpack.c.h.b16 %v3057
    %v3154 = vpack.c.b16 %v3094, %v3090
    %v3155 = vpack.c.b16 %v3095, %v3091
    %v3156 = vpack.c.b16 %v3096, %v3092
    %v3157 = vpack.c.b16 %v3097, %v3093
    %v3158 = vpack.c.b16 %v3102, %v3098
    %v3159 = vpack.c.b16 %v3103, %v3099
    %v3160 = vpack.c.b16 %v3104, %v3100
    %v3161 = vpack.c.b16 %v3105, %v3101
    %v3162 = vpack.c.b16 %v3110, %v3106
    %v3163 = vpack.c.b16 %v3111, %v3107
    %v3164 = vpack.c.b16 %v3112, %v3108
    %v3165 = vpack.c.b16 %v3113, %v3109
    %v3166 = vpack.c.b16 %v3118, %v3114
    %v3167 = vpack.c.b16 %v3119, %v3115
    %v3168 = vpack.c.b16 %v3120, %v3116
    %v3169 = vpack.c.b16 %v3121, %v3117
    %v3170 = vpack.c.b16 %v3126, %v3122
    %v3171 = vpack.c.b16 %v3127, %v3123
    %v3172 = vpack.c.b16 %v3128, %v3124
    %v3173 = vpack.c.b16 %v3129, %v3125
    %v3174 = vpack.c.b16 %v3134, %v3130
    %v3175 = vpack.c.b16 %v3135, %v3131
    %v3176 = vpack.c.b16 %v3136, %v3132
    %v3177 = vpack.c.b16 %v3137, %v3133
    %v3178 = vpack.c.b16 %v3142, %v3138
    %v3179 = vpack.c.b16 %v3143, %v3139
    %v3180 = vpack.c.b16 %v3144, %v3140
    %v3181 = vpack.c.b16 %v3145, %v3141
    %v3182 = vpack.c.b16 %v3150, %v3146
    %v3183 = vpack.c.b16 %v3151, %v3147
    %v3184 = vpack.c.b16 %v3152, %v3148
    %v3185 = vpack.c.b16 %v3153, %v3149
    %3218 = vmatprep.subr.bf16.mxu0 %v3155
    %3219 = vmatpush1.bf16.msra.mxu0 %v3154
    %3220 = vmatprep.subr.bf16.mxu0 %v3159
    %3221 = vmatpush1.bf16.msra.mxu0 %v3158
    %3222 = vmatprep.subr.bf16.mxu0 %v3163
    %3223 = vmatpush1.bf16.msra.mxu0 %v3162
    %3224 = vmatprep.subr.bf16.mxu0 %v3167
    %3225 = vmatpush1.bf16.msra.mxu0 %v3166
    %3226 = vmatprep.subr.bf16.mxu0 %v3171
    %3227 = vmatpush1.bf16.msra.mxu0 %v3170
    %3228 = vmatprep.subr.bf16.mxu0 %v3175
    %3229 = vmatpush1.bf16.msra.mxu0 %v3174
    %3230 = vmatprep.subr.bf16.mxu0 %v3179
    %3231 = vmatpush1.bf16.msra.mxu0 %v3178
    %3232 = vmatprep.subr.bf16.mxu0 %v3183
    %3233 = vmatpush1.bf16.msra.mxu0 %v3182
    %3234 = vmatprep.subr.bf16.mxu0 0
    %3235 = vmatpush1.bf16.msra.mxu0 0
    %3236 = vmatprep.subr.bf16.mxu0 0
    %3237 = vmatpush1.bf16.msra.mxu0 0
    %3238 = vmatprep.subr.bf16.mxu0 0
    %3239 = vmatpush1.bf16.msra.mxu0 0
    %3240 = vmatprep.subr.bf16.mxu0 0
    %3241 = vmatpush1.bf16.msra.mxu0 0
    %3242 = vmatprep.subr.bf16.mxu0 0
    %3243 = vmatpush1.bf16.msra.mxu0 0
    %3244 = vmatprep.subr.bf16.mxu0 0
    %3245 = vmatpush1.bf16.msra.mxu0 0
    %3246 = vmatprep.subr.bf16.mxu0 0
    %3247 = vmatpush1.bf16.msra.mxu0 0
    %3248 = vmatprep.subr.bf16.mxu0 0
    %3249 = vmatpush1.bf16.msra.mxu0 0
    %3250 = vmatprep.mubr.bf16.mxu0 0
    %3251 = vmatmul.mubr.bf16.gmra.mrb[0].mxu0 %v3025
    %v3252 = vpop.f32.mrb[0].mxu0
    %v3253 = vadd.f32 0.0, %v3252
    %v3254 = vpop.f32.mrb[0].mxu0
    %v3255 = vadd.f32 0.0, %v3254
    %v3256 = vpop.f32.mrb[0].mxu0
    %v3257 = vpop.f32.mrb[0].mxu0
    %3258 = vdwg.mxu0
    %3259 = vmatprep.subr.bf16.mxu0 %v3157
    %3260 = vmatpush1.bf16.msra.mxu0 %v3156
    %3261 = vmatprep.subr.bf16.mxu0 %v3161
    %3262 = vmatpush1.bf16.msra.mxu0 %v3160
    %3263 = vmatprep.subr.bf16.mxu0 %v3165
    %3264 = vmatpush1.bf16.msra.mxu0 %v3164
    %3265 = vmatprep.subr.bf16.mxu0 %v3169
    %3266 = vmatpush1.bf16.msra.mxu0 %v3168
    %3267 = vmatprep.subr.bf16.mxu0 %v3173
    %3268 = vmatpush1.bf16.msra.mxu0 %v3172
    %3269 = vmatprep.subr.bf16.mxu0 %v3177
    %3270 = vmatpush1.bf16.msra.mxu0 %v3176
    %3271 = vmatprep.subr.bf16.mxu0 %v3181
    %3272 = vmatpush1.bf16.msra.mxu0 %v3180
    %3273 = vmatprep.subr.bf16.mxu0 %v3185
    %3274 = vmatpush1.bf16.msra.mxu0 %v3184
    %3275 = vmatprep.subr.bf16.mxu0 0
    %3276 = vmatpush1.bf16.msra.mxu0 0
    %3277 = vmatprep.subr.bf16.mxu0 0
    %3278 = vmatpush1.bf16.msra.mxu0 0
    %3279 = vmatprep.subr.bf16.mxu0 0
    %3280 = vmatpush1.bf16.msra.mxu0 0
    %3281 = vmatprep.subr.bf16.mxu0 0
    %3282 = vmatpush1.bf16.msra.mxu0 0
    %3283 = vmatprep.subr.bf16.mxu0 0
    %3284 = vmatpush1.bf16.msra.mxu0 0
    %3285 = vmatprep.subr.bf16.mxu0 0
    %3286 = vmatpush1.bf16.msra.mxu0 0
    %3287 = vmatprep.subr.bf16.mxu0 0
    %3288 = vmatpush1.bf16.msra.mxu0 0
    %3289 = vmatprep.subr.bf16.mxu0 0
    %3290 = vmatpush1.bf16.msra.mxu0 0
    %3291 = vmatprep.mubr.bf16.mxu0 0
    %3292 = vmatmul.mubr.bf16.gmra.mrb[0].mxu0 %v3025
    %v3293 = vpop.f32.mrb[0].mxu0
    %v3294 = vadd.f32 0.0, %v3293
    %v3295 = vpop.f32.mrb[0].mxu0
    %v3296 = vadd.f32 0.0, %v3295
    %v3297 = vpop.f32.mrb[0].mxu0
    %v3298 = vpop.f32.mrb[0].mxu0
    %3299 = vdwg.mxu0
    %v3300 = vadd.f32 %v3021, %v3253
    %v3301 = vadd.f32 %v3022, %v3255
    %v3302 = vadd.f32 %v3023, %v3294
    %v3303 = vadd.f32 %v3024, %v3296
    %v3304 = vxor.u32 %v3300, 2147483648
    %v3305 = vmul.f32 %v3304, 1.442695
    %v3306 = vpow.pop %v3305
    %v3307 = vadd.f32 %v3306, 1.0
    %v3308 = vrcp.pop %v3307
    %v3309 = vmul.f32 1.0, %v3308
    %v3310 = vxor.u32 %v3301, 2147483648
    %v3311 = vmul.f32 %v3310, 1.442695
    %v3312 = vpow.pop %v3311
    %v3313 = vadd.f32 %v3312, 1.0
    %v3314 = vrcp.pop %v3313
    %v3315 = vmul.f32 1.0, %v3314
    %v3316 = vtanh.pop %v3302
    %v3317 = vxor.u32 %v3303, 2147483648
    %v3318 = vmul.f32 %v3317, 1.442695
    %v3319 = vpow.pop %v3318
    %v3320 = vadd.f32 %v3319, 1.0
    %v3321 = vrcp.pop %v3320
    %v3322 = vmul.f32 1.0, %v3321
    %v3323 = vmul.f32 %v3315, %v3009
    %v3324 = vmul.f32 %v3309, %v3316
    %v3325 = vadd.f32 %v3323, %v3324
    %v3326 = vtanh.pop %v3325
    %v3327 = vmul.f32 %v3322, %v3326
    %v3328 = vsel %vm3017, 1, 0
    %3329 = vset.pattern.permute.xlu0 0
    %3330 = vperm.xlu0 %3329, %v3328
    %v3331 = vpop.permute.xlu0 %3330
    %vm3332 = vcmp.eq.s32.totalorder %v3331, 1
    %v3333 = vsel %vm3332, %v3325, %v3009
    %v3334 = vsel %vm3332, %v3327, %v3010
    %v3335 = vsel %vm3332, %v3327, 0.0
    %v3336 = vpack.c.bf16 %v3335, %v3335
    %s3337 = scalar_lea.vmem %s60, 24
    %3338 = vst [vmem:[%s3337] sm:$0xf] %v3336
    %s3339 = ssub.s32 5, %s64
    %v3340 = vstv %s3339
    %vm3341 = vcmp.lt.s32.totalorder %v3340, %v74
    %s3342 = scalar_lea.vmem %s52, 80
    %v3343 = vld [vmem:[%s3342] sm:$0xff]
    %v3344 = vld [vmem:[%s3342 + $0x8] sm:$0xff]
    %v3345 = vunpack.c.l.bf16 %v3343
    %v3346 = vunpack.c.h.bf16 %v3343
    %v3347 = vunpack.c.l.bf16 %v3344
    %v3348 = vunpack.c.h.bf16 %v3344
    %v3349 = vpack.c.bf16 %v3334, %v3334
    %v3350 = vld [vmem:[%s5] sm:$0xff]
    %v3351 = vld [vmem:[%s5 + $0x8] sm:$0xff]
    %v3352 = vld [vmem:[%s5 + $0x10] sm:$0xff]
    %v3353 = vld [vmem:[%s5 + $0x18] sm:$0xff]
    %v3354 = vld [vmem:[%s5 + $0x20] sm:$0xff]
    %v3355 = vld [vmem:[%s5 + $0x28] sm:$0xff]
    %v3356 = vld [vmem:[%s5 + $0x30] sm:$0xff]
    %v3357 = vld [vmem:[%s5 + $0x38] sm:$0xff]
    %v3358 = vld [vmem:[%s5 + $0x40] sm:$0xff]
    %v3359 = vld [vmem:[%s5 + $0x48] sm:$0xff]
    %v3360 = vld [vmem:[%s5 + $0x50] sm:$0xff]
    %v3361 = vld [vmem:[%s5 + $0x58] sm:$0xff]
    %v3362 = vld [vmem:[%s5 + $0x60] sm:$0xff]
    %v3363 = vld [vmem:[%s5 + $0x68] sm:$0xff]
    %v3364 = vld [vmem:[%s5 + $0x70] sm:$0xff]
    %v3365 = vld [vmem:[%s5 + $0x78] sm:$0xff]
    %v3366 = vld [vmem:[%s5 + $0x80] sm:$0xff]
    %v3367 = vld [vmem:[%s5 + $0x88] sm:$0xff]
    %v3368 = vld [vmem:[%s5 + $0x90] sm:$0xff]
    %v3369 = vld [vmem:[%s5 + $0x98] sm:$0xff]
    %v3370 = vld [vmem:[%s5 + $0xa0] sm:$0xff]
    %v3371 = vld [vmem:[%s5 + $0xa8] sm:$0xff]
    %v3372 = vld [vmem:[%s5 + $0xb0] sm:$0xff]
    %v3373 = vld [vmem:[%s5 + $0xb8] sm:$0xff]
    %v3374 = vld [vmem:[%s5 + $0xc0] sm:$0xff]
    %v3375 = vld [vmem:[%s5 + $0xc8] sm:$0xff]
    %v3376 = vld [vmem:[%s5 + $0xd0] sm:$0xff]
    %v3377 = vld [vmem:[%s5 + $0xd8] sm:$0xff]
    %v3378 = vld [vmem:[%s5 + $0xe0] sm:$0xff]
    %v3379 = vld [vmem:[%s5 + $0xe8] sm:$0xff]
    %v3380 = vld [vmem:[%s5 + $0xf0] sm:$0xff]
    %v3381 = vld [vmem:[%s5 + $0xf8] sm:$0xff]
    %v3414 = vunpack.c.l.b16 %v3350
    %v3415 = vunpack.c.h.b16 %v3350
    %v3416 = vunpack.c.l.b16 %v3351
    %v3417 = vunpack.c.h.b16 %v3351
    %v3418 = vunpack.c.l.b16 %v3352
    %v3419 = vunpack.c.h.b16 %v3352
    %v3420 = vunpack.c.l.b16 %v3353
    %v3421 = vunpack.c.h.b16 %v3353
    %v3422 = vunpack.c.l.b16 %v3354
    %v3423 = vunpack.c.h.b16 %v3354
    %v3424 = vunpack.c.l.b16 %v3355
    %v3425 = vunpack.c.h.b16 %v3355
    %v3426 = vunpack.c.l.b16 %v3356
    %v3427 = vunpack.c.h.b16 %v3356
    %v3428 = vunpack.c.l.b16 %v3357
    %v3429 = vunpack.c.h.b16 %v3357
    %v3430 = vunpack.c.l.b16 %v3358
    %v3431 = vunpack.c.h.b16 %v3358
    %v3432 = vunpack.c.l.b16 %v3359
    %v3433 = vunpack.c.h.b16 %v3359
    %v3434 = vunpack.c.l.b16 %v3360
    %v3435 = vunpack.c.h.b16 %v3360
    %v3436 = vunpack.c.l.b16 %v3361
    %v3437 = vunpack.c.h.b16 %v3361
    %v3438 = vunpack.c.l.b16 %v3362
    %v3439 = vunpack.c.h.b16 %v3362
    %v3440 = vunpack.c.l.b16 %v3363
    %v3441 = vunpack.c.h.b16 %v3363
    %v3442 = vunpack.c.l.b16 %v3364
    %v3443 = vunpack.c.h.b16 %v3364
    %v3444 = vunpack.c.l.b16 %v3365
    %v3445 = vunpack.c.h.b16 %v3365
    %v3446 = vunpack.c.l.b16 %v3366
    %v3447 = vunpack.c.h.b16 %v3366
    %v3448 = vunpack.c.l.b16 %v3367
    %v3449 = vunpack.c.h.b16 %v3367
    %v3450 = vunpack.c.l.b16 %v3368
    %v3451 = vunpack.c.h.b16 %v3368
    %v3452 = vunpack.c.l.b16 %v3369
    %v3453 = vunpack.c.h.b16 %v3369
    %v3454 = vunpack.c.l.b16 %v3370
    %v3455 = vunpack.c.h.b16 %v3370
    %v3456 = vunpack.c.l.b16 %v3371
    %v3457 = vunpack.c.h.b16 %v3371
    %v3458 = vunpack.c.l.b16 %v3372
    %v3459 = vunpack.c.h.b16 %v3372
    %v3460 = vunpack.c.l.b16 %v3373
    %v3461 = vunpack.c.h.b16 %v3373
    %v3462 = vunpack.c.l.b16 %v3374
    %v3463 = vunpack.c.h.b16 %v3374
    %v3464 = vunpack.c.l.b16 %v3375
    %v3465 = vunpack.c.h.b16 %v3375
    %v3466 = vunpack.c.l.b16 %v3376
    %v3467 = vunpack.c.h.b16 %v3376
    %v3468 = vunpack.c.l.b16 %v3377
    %v3469 = vunpack.c.h.b16 %v3377
    %v3470 = vunpack.c.l.b16 %v3378
    %v3471 = vunpack.c.h.b16 %v3378
    %v3472 = vunpack.c.l.b16 %v3379
    %v3473 = vunpack.c.h.b16 %v3379
    %v3474 = vunpack.c.l.b16 %v3380
    %v3475 = vunpack.c.h.b16 %v3380
    %v3476 = vunpack.c.l.b16 %v3381
    %v3477 = vunpack.c.h.b16 %v3381
    %v3478 = vpack.c.b16 %v3418, %v3414
    %v3479 = vpack.c.b16 %v3419, %v3415
    %v3480 = vpack.c.b16 %v3420, %v3416
    %v3481 = vpack.c.b16 %v3421, %v3417
    %v3482 = vpack.c.b16 %v3426, %v3422
    %v3483 = vpack.c.b16 %v3427, %v3423
    %v3484 = vpack.c.b16 %v3428, %v3424
    %v3485 = vpack.c.b16 %v3429, %v3425
    %v3486 = vpack.c.b16 %v3434, %v3430
    %v3487 = vpack.c.b16 %v3435, %v3431
    %v3488 = vpack.c.b16 %v3436, %v3432
    %v3489 = vpack.c.b16 %v3437, %v3433
    %v3490 = vpack.c.b16 %v3442, %v3438
    %v3491 = vpack.c.b16 %v3443, %v3439
    %v3492 = vpack.c.b16 %v3444, %v3440
    %v3493 = vpack.c.b16 %v3445, %v3441
    %v3494 = vpack.c.b16 %v3450, %v3446
    %v3495 = vpack.c.b16 %v3451, %v3447
    %v3496 = vpack.c.b16 %v3452, %v3448
    %v3497 = vpack.c.b16 %v3453, %v3449
    %v3498 = vpack.c.b16 %v3458, %v3454
    %v3499 = vpack.c.b16 %v3459, %v3455
    %v3500 = vpack.c.b16 %v3460, %v3456
    %v3501 = vpack.c.b16 %v3461, %v3457
    %v3502 = vpack.c.b16 %v3466, %v3462
    %v3503 = vpack.c.b16 %v3467, %v3463
    %v3504 = vpack.c.b16 %v3468, %v3464
    %v3505 = vpack.c.b16 %v3469, %v3465
    %v3506 = vpack.c.b16 %v3474, %v3470
    %v3507 = vpack.c.b16 %v3475, %v3471
    %v3508 = vpack.c.b16 %v3476, %v3472
    %v3509 = vpack.c.b16 %v3477, %v3473
    %3542 = vmatprep.subr.bf16.mxu0 %v3479
    %3543 = vmatpush1.bf16.msra.mxu0 %v3478
    %3544 = vmatprep.subr.bf16.mxu0 %v3483
    %3545 = vmatpush1.bf16.msra.mxu0 %v3482
    %3546 = vmatprep.subr.bf16.mxu0 %v3487
    %3547 = vmatpush1.bf16.msra.mxu0 %v3486
    %3548 = vmatprep.subr.bf16.mxu0 %v3491
    %3549 = vmatpush1.bf16.msra.mxu0 %v3490
    %3550 = vmatprep.subr.bf16.mxu0 %v3495
    %3551 = vmatpush1.bf16.msra.mxu0 %v3494
    %3552 = vmatprep.subr.bf16.mxu0 %v3499
    %3553 = vmatpush1.bf16.msra.mxu0 %v3498
    %3554 = vmatprep.subr.bf16.mxu0 %v3503
    %3555 = vmatpush1.bf16.msra.mxu0 %v3502
    %3556 = vmatprep.subr.bf16.mxu0 %v3507
    %3557 = vmatpush1.bf16.msra.mxu0 %v3506
    %3558 = vmatprep.subr.bf16.mxu0 0
    %3559 = vmatpush1.bf16.msra.mxu0 0
    %3560 = vmatprep.subr.bf16.mxu0 0
    %3561 = vmatpush1.bf16.msra.mxu0 0
    %3562 = vmatprep.subr.bf16.mxu0 0
    %3563 = vmatpush1.bf16.msra.mxu0 0
    %3564 = vmatprep.subr.bf16.mxu0 0
    %3565 = vmatpush1.bf16.msra.mxu0 0
    %3566 = vmatprep.subr.bf16.mxu0 0
    %3567 = vmatpush1.bf16.msra.mxu0 0
    %3568 = vmatprep.subr.bf16.mxu0 0
    %3569 = vmatpush1.bf16.msra.mxu0 0
    %3570 = vmatprep.subr.bf16.mxu0 0
    %3571 = vmatpush1.bf16.msra.mxu0 0
    %3572 = vmatprep.subr.bf16.mxu0 0
    %3573 = vmatpush1.bf16.msra.mxu0 0
    %3574 = vmatprep.mubr.bf16.mxu0 0
    %3575 = vmatmul.mubr.bf16.gmra.mrb[0].mxu0 %v3349
    %v3576 = vpop.f32.mrb[0].mxu0
    %v3577 = vadd.f32 0.0, %v3576
    %v3578 = vpop.f32.mrb[0].mxu0
    %v3579 = vadd.f32 0.0, %v3578
    %v3580 = vpop.f32.mrb[0].mxu0
    %v3581 = vpop.f32.mrb[0].mxu0
    %3582 = vdwg.mxu0
    %3583 = vmatprep.subr.bf16.mxu0 %v3481
    %3584 = vmatpush1.bf16.msra.mxu0 %v3480
    %3585 = vmatprep.subr.bf16.mxu0 %v3485
    %3586 = vmatpush1.bf16.msra.mxu0 %v3484
    %3587 = vmatprep.subr.bf16.mxu0 %v3489
    %3588 = vmatpush1.bf16.msra.mxu0 %v3488
    %3589 = vmatprep.subr.bf16.mxu0 %v3493
    %3590 = vmatpush1.bf16.msra.mxu0 %v3492
    %3591 = vmatprep.subr.bf16.mxu0 %v3497
    %3592 = vmatpush1.bf16.msra.mxu0 %v3496
    %3593 = vmatprep.subr.bf16.mxu0 %v3501
    %3594 = vmatpush1.bf16.msra.mxu0 %v3500
    %3595 = vmatprep.subr.bf16.mxu0 %v3505
    %3596 = vmatpush1.bf16.msra.mxu0 %v3504
    %3597 = vmatprep.subr.bf16.mxu0 %v3509
    %3598 = vmatpush1.bf16.msra.mxu0 %v3508
    %3599 = vmatprep.subr.bf16.mxu0 0
    %3600 = vmatpush1.bf16.msra.mxu0 0
    %3601 = vmatprep.subr.bf16.mxu0 0
    %3602 = vmatpush1.bf16.msra.mxu0 0
    %3603 = vmatprep.subr.bf16.mxu0 0
    %3604 = vmatpush1.bf16.msra.mxu0 0
    %3605 = vmatprep.subr.bf16.mxu0 0
    %3606 = vmatpush1.bf16.msra.mxu0 0
    %3607 = vmatprep.subr.bf16.mxu0 0
    %3608 = vmatpush1.bf16.msra.mxu0 0
    %3609 = vmatprep.subr.bf16.mxu0 0
    %3610 = vmatpush1.bf16.msra.mxu0 0
    %3611 = vmatprep.subr.bf16.mxu0 0
    %3612 = vmatpush1.bf16.msra.mxu0 0
    %3613 = vmatprep.subr.bf16.mxu0 0
    %3614 = vmatpush1.bf16.msra.mxu0 0
    %3615 = vmatprep.mubr.bf16.mxu0 0
    %3616 = vmatmul.mubr.bf16.gmra.mrb[0].mxu0 %v3349
    %v3617 = vpop.f32.mrb[0].mxu0
    %v3618 = vadd.f32 0.0, %v3617
    %v3619 = vpop.f32.mrb[0].mxu0
    %v3620 = vadd.f32 0.0, %v3619
    %v3621 = vpop.f32.mrb[0].mxu0
    %v3622 = vpop.f32.mrb[0].mxu0
    %3623 = vdwg.mxu0
    %v3624 = vadd.f32 %v3345, %v3577
    %v3625 = vadd.f32 %v3346, %v3579
    %v3626 = vadd.f32 %v3347, %v3618
    %v3627 = vadd.f32 %v3348, %v3620
    %v3628 = vxor.u32 %v3624, 2147483648
    %v3629 = vmul.f32 %v3628, 1.442695
    %v3630 = vpow.pop %v3629
    %v3631 = vadd.f32 %v3630, 1.0
    %v3632 = vrcp.pop %v3631
    %v3633 = vmul.f32 1.0, %v3632
    %v3634 = vxor.u32 %v3625, 2147483648
    %v3635 = vmul.f32 %v3634, 1.442695
    %v3636 = vpow.pop %v3635
    %v3637 = vadd.f32 %v3636, 1.0
    %v3638 = vrcp.pop %v3637
    %v3639 = vmul.f32 1.0, %v3638
    %v3640 = vtanh.pop %v3626
    %v3641 = vxor.u32 %v3627, 2147483648
    %v3642 = vmul.f32 %v3641, 1.442695
    %v3643 = vpow.pop %v3642
    %v3644 = vadd.f32 %v3643, 1.0
    %v3645 = vrcp.pop %v3644
    %v3646 = vmul.f32 1.0, %v3645
    %v3647 = vmul.f32 %v3639, %v3333
    %v3648 = vmul.f32 %v3633, %v3640
    %v3649 = vadd.f32 %v3647, %v3648
    %v3650 = vtanh.pop %v3649
    %v3651 = vmul.f32 %v3646, %v3650
    %v3652 = vsel %vm3341, 1, 0
    %3653 = vset.pattern.permute.xlu0 0
    %3654 = vperm.xlu0 %3653, %v3652
    %v3655 = vpop.permute.xlu0 %3654
    %vm3656 = vcmp.eq.s32.totalorder %v3655, 1
    %v3657 = vsel %vm3656, %v3649, %v3333
    %v3658 = vsel %vm3656, %v3651, %v3334
    %v3659 = vsel %vm3656, %v3651, 0.0
    %v3660 = vpack.c.bf16 %v3659, %v3659
    %s3661 = scalar_lea.vmem %s60, 20
    %3662 = vst [vmem:[%s3661] sm:$0xf] %v3660
    %s3663 = ssub.s32 4, %s64
    %v3664 = vstv %s3663
    %vm3665 = vcmp.lt.s32.totalorder %v3664, %v74
    %s3666 = scalar_lea.vmem %s52, 64
    %v3667 = vld [vmem:[%s3666] sm:$0xff]
    %v3668 = vld [vmem:[%s3666 + $0x8] sm:$0xff]
    %v3669 = vunpack.c.l.bf16 %v3667
    %v3670 = vunpack.c.h.bf16 %v3667
    %v3671 = vunpack.c.l.bf16 %v3668
    %v3672 = vunpack.c.h.bf16 %v3668
    %v3673 = vpack.c.bf16 %v3658, %v3658
    %v3674 = vld [vmem:[%s5] sm:$0xff]
    %v3675 = vld [vmem:[%s5 + $0x8] sm:$0xff]
    %v3676 = vld [vmem:[%s5 + $0x10] sm:$0xff]
    %v3677 = vld [vmem:[%s5 + $0x18] sm:$0xff]
    %v3678 = vld [vmem:[%s5 + $0x20] sm:$0xff]
    %v3679 = vld [vmem:[%s5 + $0x28] sm:$0xff]
    %v3680 = vld [vmem:[%s5 + $0x30] sm:$0xff]
    %v3681 = vld [vmem:[%s5 + $0x38] sm:$0xff]
    %v3682 = vld [vmem:[%s5 + $0x40] sm:$0xff]
    %v3683 = vld [vmem:[%s5 + $0x48] sm:$0xff]
    %v3684 = vld [vmem:[%s5 + $0x50] sm:$0xff]
    %v3685 = vld [vmem:[%s5 + $0x58] sm:$0xff]
    %v3686 = vld [vmem:[%s5 + $0x60] sm:$0xff]
    %v3687 = vld [vmem:[%s5 + $0x68] sm:$0xff]
    %v3688 = vld [vmem:[%s5 + $0x70] sm:$0xff]
    %v3689 = vld [vmem:[%s5 + $0x78] sm:$0xff]
    %v3690 = vld [vmem:[%s5 + $0x80] sm:$0xff]
    %v3691 = vld [vmem:[%s5 + $0x88] sm:$0xff]
    %v3692 = vld [vmem:[%s5 + $0x90] sm:$0xff]
    %v3693 = vld [vmem:[%s5 + $0x98] sm:$0xff]
    %v3694 = vld [vmem:[%s5 + $0xa0] sm:$0xff]
    %v3695 = vld [vmem:[%s5 + $0xa8] sm:$0xff]
    %v3696 = vld [vmem:[%s5 + $0xb0] sm:$0xff]
    %v3697 = vld [vmem:[%s5 + $0xb8] sm:$0xff]
    %v3698 = vld [vmem:[%s5 + $0xc0] sm:$0xff]
    %v3699 = vld [vmem:[%s5 + $0xc8] sm:$0xff]
    %v3700 = vld [vmem:[%s5 + $0xd0] sm:$0xff]
    %v3701 = vld [vmem:[%s5 + $0xd8] sm:$0xff]
    %v3702 = vld [vmem:[%s5 + $0xe0] sm:$0xff]
    %v3703 = vld [vmem:[%s5 + $0xe8] sm:$0xff]
    %v3704 = vld [vmem:[%s5 + $0xf0] sm:$0xff]
    %v3705 = vld [vmem:[%s5 + $0xf8] sm:$0xff]
    %v3738 = vunpack.c.l.b16 %v3674
    %v3739 = vunpack.c.h.b16 %v3674
    %v3740 = vunpack.c.l.b16 %v3675
    %v3741 = vunpack.c.h.b16 %v3675
    %v3742 = vunpack.c.l.b16 %v3676
    %v3743 = vunpack.c.h.b16 %v3676
    %v3744 = vunpack.c.l.b16 %v3677
    %v3745 = vunpack.c.h.b16 %v3677
    %v3746 = vunpack.c.l.b16 %v3678
    %v3747 = vunpack.c.h.b16 %v3678
    %v3748 = vunpack.c.l.b16 %v3679
    %v3749 = vunpack.c.h.b16 %v3679
    %v3750 = vunpack.c.l.b16 %v3680
    %v3751 = vunpack.c.h.b16 %v3680
    %v3752 = vunpack.c.l.b16 %v3681
    %v3753 = vunpack.c.h.b16 %v3681
    %v3754 = vunpack.c.l.b16 %v3682
    %v3755 = vunpack.c.h.b16 %v3682
    %v3756 = vunpack.c.l.b16 %v3683
    %v3757 = vunpack.c.h.b16 %v3683
    %v3758 = vunpack.c.l.b16 %v3684
    %v3759 = vunpack.c.h.b16 %v3684
    %v3760 = vunpack.c.l.b16 %v3685
    %v3761 = vunpack.c.h.b16 %v3685
    %v3762 = vunpack.c.l.b16 %v3686
    %v3763 = vunpack.c.h.b16 %v3686
    %v3764 = vunpack.c.l.b16 %v3687
    %v3765 = vunpack.c.h.b16 %v3687
    %v3766 = vunpack.c.l.b16 %v3688
    %v3767 = vunpack.c.h.b16 %v3688
    %v3768 = vunpack.c.l.b16 %v3689
    %v3769 = vunpack.c.h.b16 %v3689
    %v3770 = vunpack.c.l.b16 %v3690
    %v3771 = vunpack.c.h.b16 %v3690
    %v3772 = vunpack.c.l.b16 %v3691
    %v3773 = vunpack.c.h.b16 %v3691
    %v3774 = vunpack.c.l.b16 %v3692
    %v3775 = vunpack.c.h.b16 %v3692
    %v3776 = vunpack.c.l.b16 %v3693
    %v3777 = vunpack.c.h.b16 %v3693
    %v3778 = vunpack.c.l.b16 %v3694
    %v3779 = vunpack.c.h.b16 %v3694
    %v3780 = vunpack.c.l.b16 %v3695
    %v3781 = vunpack.c.h.b16 %v3695
    %v3782 = vunpack.c.l.b16 %v3696
    %v3783 = vunpack.c.h.b16 %v3696
    %v3784 = vunpack.c.l.b16 %v3697
    %v3785 = vunpack.c.h.b16 %v3697
    %v3786 = vunpack.c.l.b16 %v3698
    %v3787 = vunpack.c.h.b16 %v3698
    %v3788 = vunpack.c.l.b16 %v3699
    %v3789 = vunpack.c.h.b16 %v3699
    %v3790 = vunpack.c.l.b16 %v3700
    %v3791 = vunpack.c.h.b16 %v3700
    %v3792 = vunpack.c.l.b16 %v3701
    %v3793 = vunpack.c.h.b16 %v3701
    %v3794 = vunpack.c.l.b16 %v3702
    %v3795 = vunpack.c.h.b16 %v3702
    %v3796 = vunpack.c.l.b16 %v3703
    %v3797 = vunpack.c.h.b16 %v3703
    %v3798 = vunpack.c.l.b16 %v3704
    %v3799 = vunpack.c.h.b16 %v3704
    %v3800 = vunpack.c.l.b16 %v3705
    %v3801 = vunpack.c.h.b16 %v3705
    %v3802 = vpack.c.b16 %v3742, %v3738
    %v3803 = vpack.c.b16 %v3743, %v3739
    %v3804 = vpack.c.b16 %v3744, %v3740
    %v3805 = vpack.c.b16 %v3745, %v3741
    %v3806 = vpack.c.b16 %v3750, %v3746
    %v3807 = vpack.c.b16 %v3751, %v3747
    %v3808 = vpack.c.b16 %v3752, %v3748
    %v3809 = vpack.c.b16 %v3753, %v3749
    %v3810 = vpack.c.b16 %v3758, %v3754
    %v3811 = vpack.c.b16 %v3759, %v3755
    %v3812 = vpack.c.b16 %v3760, %v3756
    %v3813 = vpack.c.b16 %v3761, %v3757
    %v3814 = vpack.c.b16 %v3766, %v3762
    %v3815 = vpack.c.b16 %v3767, %v3763
    %v3816 = vpack.c.b16 %v3768, %v3764
    %v3817 = vpack.c.b16 %v3769, %v3765
    %v3818 = vpack.c.b16 %v3774, %v3770
    %v3819 = vpack.c.b16 %v3775, %v3771
    %v3820 = vpack.c.b16 %v3776, %v3772
    %v3821 = vpack.c.b16 %v3777, %v3773
    %v3822 = vpack.c.b16 %v3782, %v3778
    %v3823 = vpack.c.b16 %v3783, %v3779
    %v3824 = vpack.c.b16 %v3784, %v3780
    %v3825 = vpack.c.b16 %v3785, %v3781
    %v3826 = vpack.c.b16 %v3790, %v3786
    %v3827 = vpack.c.b16 %v3791, %v3787
    %v3828 = vpack.c.b16 %v3792, %v3788
    %v3829 = vpack.c.b16 %v3793, %v3789
    %v3830 = vpack.c.b16 %v3798, %v3794
    %v3831 = vpack.c.b16 %v3799, %v3795
    %v3832 = vpack.c.b16 %v3800, %v3796
    %v3833 = vpack.c.b16 %v3801, %v3797
    %3866 = vmatprep.subr.bf16.mxu0 %v3803
    %3867 = vmatpush1.bf16.msra.mxu0 %v3802
    %3868 = vmatprep.subr.bf16.mxu0 %v3807
    %3869 = vmatpush1.bf16.msra.mxu0 %v3806
    %3870 = vmatprep.subr.bf16.mxu0 %v3811
    %3871 = vmatpush1.bf16.msra.mxu0 %v3810
    %3872 = vmatprep.subr.bf16.mxu0 %v3815
    %3873 = vmatpush1.bf16.msra.mxu0 %v3814
    %3874 = vmatprep.subr.bf16.mxu0 %v3819
    %3875 = vmatpush1.bf16.msra.mxu0 %v3818
    %3876 = vmatprep.subr.bf16.mxu0 %v3823
    %3877 = vmatpush1.bf16.msra.mxu0 %v3822
    %3878 = vmatprep.subr.bf16.mxu0 %v3827
    %3879 = vmatpush1.bf16.msra.mxu0 %v3826
    %3880 = vmatprep.subr.bf16.mxu0 %v3831
    %3881 = vmatpush1.bf16.msra.mxu0 %v3830
    %3882 = vmatprep.subr.bf16.mxu0 0
    %3883 = vmatpush1.bf16.msra.mxu0 0
    %3884 = vmatprep.subr.bf16.mxu0 0
    %3885 = vmatpush1.bf16.msra.mxu0 0
    %3886 = vmatprep.subr.bf16.mxu0 0
    %3887 = vmatpush1.bf16.msra.mxu0 0
    %3888 = vmatprep.subr.bf16.mxu0 0
    %3889 = vmatpush1.bf16.msra.mxu0 0
    %3890 = vmatprep.subr.bf16.mxu0 0
    %3891 = vmatpush1.bf16.msra.mxu0 0
    %3892 = vmatprep.subr.bf16.mxu0 0
    %3893 = vmatpush1.bf16.msra.mxu0 0
    %3894 = vmatprep.subr.bf16.mxu0 0
    %3895 = vmatpush1.bf16.msra.mxu0 0
    %3896 = vmatprep.subr.bf16.mxu0 0
    %3897 = vmatpush1.bf16.msra.mxu0 0
    %3898 = vmatprep.mubr.bf16.mxu0 0
    %3899 = vmatmul.mubr.bf16.gmra.mrb[0].mxu0 %v3673
    %v3900 = vpop.f32.mrb[0].mxu0
    %v3901 = vadd.f32 0.0, %v3900
    %v3902 = vpop.f32.mrb[0].mxu0
    %v3903 = vadd.f32 0.0, %v3902
    %v3904 = vpop.f32.mrb[0].mxu0
    %v3905 = vpop.f32.mrb[0].mxu0
    %3906 = vdwg.mxu0
    %3907 = vmatprep.subr.bf16.mxu0 %v3805
    %3908 = vmatpush1.bf16.msra.mxu0 %v3804
    %3909 = vmatprep.subr.bf16.mxu0 %v3809
    %3910 = vmatpush1.bf16.msra.mxu0 %v3808
    %3911 = vmatprep.subr.bf16.mxu0 %v3813
    %3912 = vmatpush1.bf16.msra.mxu0 %v3812
    %3913 = vmatprep.subr.bf16.mxu0 %v3817
    %3914 = vmatpush1.bf16.msra.mxu0 %v3816
    %3915 = vmatprep.subr.bf16.mxu0 %v3821
    %3916 = vmatpush1.bf16.msra.mxu0 %v3820
    %3917 = vmatprep.subr.bf16.mxu0 %v3825
    %3918 = vmatpush1.bf16.msra.mxu0 %v3824
    %3919 = vmatprep.subr.bf16.mxu0 %v3829
    %3920 = vmatpush1.bf16.msra.mxu0 %v3828
    %3921 = vmatprep.subr.bf16.mxu0 %v3833
    %3922 = vmatpush1.bf16.msra.mxu0 %v3832
    %3923 = vmatprep.subr.bf16.mxu0 0
    %3924 = vmatpush1.bf16.msra.mxu0 0
    %3925 = vmatprep.subr.bf16.mxu0 0
    %3926 = vmatpush1.bf16.msra.mxu0 0
    %3927 = vmatprep.subr.bf16.mxu0 0
    %3928 = vmatpush1.bf16.msra.mxu0 0
    %3929 = vmatprep.subr.bf16.mxu0 0
    %3930 = vmatpush1.bf16.msra.mxu0 0
    %3931 = vmatprep.subr.bf16.mxu0 0
    %3932 = vmatpush1.bf16.msra.mxu0 0
    %3933 = vmatprep.subr.bf16.mxu0 0
    %3934 = vmatpush1.bf16.msra.mxu0 0
    %3935 = vmatprep.subr.bf16.mxu0 0
    %3936 = vmatpush1.bf16.msra.mxu0 0
    %3937 = vmatprep.subr.bf16.mxu0 0
    %3938 = vmatpush1.bf16.msra.mxu0 0
    %3939 = vmatprep.mubr.bf16.mxu0 0
    %3940 = vmatmul.mubr.bf16.gmra.mrb[0].mxu0 %v3673
    %v3941 = vpop.f32.mrb[0].mxu0
    %v3942 = vadd.f32 0.0, %v3941
    %v3943 = vpop.f32.mrb[0].mxu0
    %v3944 = vadd.f32 0.0, %v3943
    %v3945 = vpop.f32.mrb[0].mxu0
    %v3946 = vpop.f32.mrb[0].mxu0
    %3947 = vdwg.mxu0
    %v3948 = vadd.f32 %v3669, %v3901
    %v3949 = vadd.f32 %v3670, %v3903
    %v3950 = vadd.f32 %v3671, %v3942
    %v3951 = vadd.f32 %v3672, %v3944
    %v3952 = vxor.u32 %v3948, 2147483648
    %v3953 = vmul.f32 %v3952, 1.442695
    %v3954 = vpow.pop %v3953
    %v3955 = vadd.f32 %v3954, 1.0
    %v3956 = vrcp.pop %v3955
    %v3957 = vmul.f32 1.0, %v3956
    %v3958 = vxor.u32 %v3949, 2147483648
    %v3959 = vmul.f32 %v3958, 1.442695
    %v3960 = vpow.pop %v3959
    %v3961 = vadd.f32 %v3960, 1.0
    %v3962 = vrcp.pop %v3961
    %v3963 = vmul.f32 1.0, %v3962
    %v3964 = vtanh.pop %v3950
    %v3965 = vxor.u32 %v3951, 2147483648
    %v3966 = vmul.f32 %v3965, 1.442695
    %v3967 = vpow.pop %v3966
    %v3968 = vadd.f32 %v3967, 1.0
    %v3969 = vrcp.pop %v3968
    %v3970 = vmul.f32 1.0, %v3969
    %v3971 = vmul.f32 %v3963, %v3657
    %v3972 = vmul.f32 %v3957, %v3964
    %v3973 = vadd.f32 %v3971, %v3972
    %v3974 = vtanh.pop %v3973
    %v3975 = vmul.f32 %v3970, %v3974
    %v3976 = vsel %vm3665, 1, 0
    %3977 = vset.pattern.permute.xlu0 0
    %3978 = vperm.xlu0 %3977, %v3976
    %v3979 = vpop.permute.xlu0 %3978
    %vm3980 = vcmp.eq.s32.totalorder %v3979, 1
    %v3981 = vsel %vm3980, %v3973, %v3657
    %v3982 = vsel %vm3980, %v3975, %v3658
    %v3983 = vsel %vm3980, %v3975, 0.0
    %v3984 = vpack.c.bf16 %v3983, %v3983
    %s3985 = scalar_lea.vmem %s60, 16
    %3986 = vst [vmem:[%s3985] sm:$0xf] %v3984
    %s3987 = ssub.s32 3, %s64
    %v3988 = vstv %s3987
    %vm3989 = vcmp.lt.s32.totalorder %v3988, %v74
    %s3990 = scalar_lea.vmem %s52, 48
    %v3991 = vld [vmem:[%s3990] sm:$0xff]
    %v3992 = vld [vmem:[%s3990 + $0x8] sm:$0xff]
    %v3993 = vunpack.c.l.bf16 %v3991
    %v3994 = vunpack.c.h.bf16 %v3991
    %v3995 = vunpack.c.l.bf16 %v3992
    %v3996 = vunpack.c.h.bf16 %v3992
    %v3997 = vpack.c.bf16 %v3982, %v3982
    %v3998 = vld [vmem:[%s5] sm:$0xff]
    %v3999 = vld [vmem:[%s5 + $0x8] sm:$0xff]
    %v4000 = vld [vmem:[%s5 + $0x10] sm:$0xff]
    %v4001 = vld [vmem:[%s5 + $0x18] sm:$0xff]
    %v4002 = vld [vmem:[%s5 + $0x20] sm:$0xff]
    %v4003 = vld [vmem:[%s5 + $0x28] sm:$0xff]
    %v4004 = vld [vmem:[%s5 + $0x30] sm:$0xff]
    %v4005 = vld [vmem:[%s5 + $0x38] sm:$0xff]
    %v4006 = vld [vmem:[%s5 + $0x40] sm:$0xff]
    %v4007 = vld [vmem:[%s5 + $0x48] sm:$0xff]
    %v4008 = vld [vmem:[%s5 + $0x50] sm:$0xff]
    %v4009 = vld [vmem:[%s5 + $0x58] sm:$0xff]
    %v4010 = vld [vmem:[%s5 + $0x60] sm:$0xff]
    %v4011 = vld [vmem:[%s5 + $0x68] sm:$0xff]
    %v4012 = vld [vmem:[%s5 + $0x70] sm:$0xff]
    %v4013 = vld [vmem:[%s5 + $0x78] sm:$0xff]
    %v4014 = vld [vmem:[%s5 + $0x80] sm:$0xff]
    %v4015 = vld [vmem:[%s5 + $0x88] sm:$0xff]
    %v4016 = vld [vmem:[%s5 + $0x90] sm:$0xff]
    %v4017 = vld [vmem:[%s5 + $0x98] sm:$0xff]
    %v4018 = vld [vmem:[%s5 + $0xa0] sm:$0xff]
    %v4019 = vld [vmem:[%s5 + $0xa8] sm:$0xff]
    %v4020 = vld [vmem:[%s5 + $0xb0] sm:$0xff]
    %v4021 = vld [vmem:[%s5 + $0xb8] sm:$0xff]
    %v4022 = vld [vmem:[%s5 + $0xc0] sm:$0xff]
    %v4023 = vld [vmem:[%s5 + $0xc8] sm:$0xff]
    %v4024 = vld [vmem:[%s5 + $0xd0] sm:$0xff]
    %v4025 = vld [vmem:[%s5 + $0xd8] sm:$0xff]
    %v4026 = vld [vmem:[%s5 + $0xe0] sm:$0xff]
    %v4027 = vld [vmem:[%s5 + $0xe8] sm:$0xff]
    %v4028 = vld [vmem:[%s5 + $0xf0] sm:$0xff]
    %v4029 = vld [vmem:[%s5 + $0xf8] sm:$0xff]
    %v4062 = vunpack.c.l.b16 %v3998
    %v4063 = vunpack.c.h.b16 %v3998
    %v4064 = vunpack.c.l.b16 %v3999
    %v4065 = vunpack.c.h.b16 %v3999
    %v4066 = vunpack.c.l.b16 %v4000
    %v4067 = vunpack.c.h.b16 %v4000
    %v4068 = vunpack.c.l.b16 %v4001
    %v4069 = vunpack.c.h.b16 %v4001
    %v4070 = vunpack.c.l.b16 %v4002
    %v4071 = vunpack.c.h.b16 %v4002
    %v4072 = vunpack.c.l.b16 %v4003
    %v4073 = vunpack.c.h.b16 %v4003
    %v4074 = vunpack.c.l.b16 %v4004
    %v4075 = vunpack.c.h.b16 %v4004
    %v4076 = vunpack.c.l.b16 %v4005
    %v4077 = vunpack.c.h.b16 %v4005
    %v4078 = vunpack.c.l.b16 %v4006
    %v4079 = vunpack.c.h.b16 %v4006
    %v4080 = vunpack.c.l.b16 %v4007
    %v4081 = vunpack.c.h.b16 %v4007
    %v4082 = vunpack.c.l.b16 %v4008
    %v4083 = vunpack.c.h.b16 %v4008
    %v4084 = vunpack.c.l.b16 %v4009
    %v4085 = vunpack.c.h.b16 %v4009
    %v4086 = vunpack.c.l.b16 %v4010
    %v4087 = vunpack.c.h.b16 %v4010
    %v4088 = vunpack.c.l.b16 %v4011
    %v4089 = vunpack.c.h.b16 %v4011
    %v4090 = vunpack.c.l.b16 %v4012
    %v4091 = vunpack.c.h.b16 %v4012
    %v4092 = vunpack.c.l.b16 %v4013
    %v4093 = vunpack.c.h.b16 %v4013
    %v4094 = vunpack.c.l.b16 %v4014
    %v4095 = vunpack.c.h.b16 %v4014
    %v4096 = vunpack.c.l.b16 %v4015
    %v4097 = vunpack.c.h.b16 %v4015
    %v4098 = vunpack.c.l.b16 %v4016
    %v4099 = vunpack.c.h.b16 %v4016
    %v4100 = vunpack.c.l.b16 %v4017
    %v4101 = vunpack.c.h.b16 %v4017
    %v4102 = vunpack.c.l.b16 %v4018
    %v4103 = vunpack.c.h.b16 %v4018
    %v4104 = vunpack.c.l.b16 %v4019
    %v4105 = vunpack.c.h.b16 %v4019
    %v4106 = vunpack.c.l.b16 %v4020
    %v4107 = vunpack.c.h.b16 %v4020
    %v4108 = vunpack.c.l.b16 %v4021
    %v4109 = vunpack.c.h.b16 %v4021
    %v4110 = vunpack.c.l.b16 %v4022
    %v4111 = vunpack.c.h.b16 %v4022
    %v4112 = vunpack.c.l.b16 %v4023
    %v4113 = vunpack.c.h.b16 %v4023
    %v4114 = vunpack.c.l.b16 %v4024
    %v4115 = vunpack.c.h.b16 %v4024
    %v4116 = vunpack.c.l.b16 %v4025
    %v4117 = vunpack.c.h.b16 %v4025
    %v4118 = vunpack.c.l.b16 %v4026
    %v4119 = vunpack.c.h.b16 %v4026
    %v4120 = vunpack.c.l.b16 %v4027
    %v4121 = vunpack.c.h.b16 %v4027
    %v4122 = vunpack.c.l.b16 %v4028
    %v4123 = vunpack.c.h.b16 %v4028
    %v4124 = vunpack.c.l.b16 %v4029
    %v4125 = vunpack.c.h.b16 %v4029
    %v4126 = vpack.c.b16 %v4066, %v4062
    %v4127 = vpack.c.b16 %v4067, %v4063
    %v4128 = vpack.c.b16 %v4068, %v4064
    %v4129 = vpack.c.b16 %v4069, %v4065
    %v4130 = vpack.c.b16 %v4074, %v4070
    %v4131 = vpack.c.b16 %v4075, %v4071
    %v4132 = vpack.c.b16 %v4076, %v4072
    %v4133 = vpack.c.b16 %v4077, %v4073
    %v4134 = vpack.c.b16 %v4082, %v4078
    %v4135 = vpack.c.b16 %v4083, %v4079
    %v4136 = vpack.c.b16 %v4084, %v4080
    %v4137 = vpack.c.b16 %v4085, %v4081
    %v4138 = vpack.c.b16 %v4090, %v4086
    %v4139 = vpack.c.b16 %v4091, %v4087
    %v4140 = vpack.c.b16 %v4092, %v4088
    %v4141 = vpack.c.b16 %v4093, %v4089
    %v4142 = vpack.c.b16 %v4098, %v4094
    %v4143 = vpack.c.b16 %v4099, %v4095
    %v4144 = vpack.c.b16 %v4100, %v4096
    %v4145 = vpack.c.b16 %v4101, %v4097
    %v4146 = vpack.c.b16 %v4106, %v4102
    %v4147 = vpack.c.b16 %v4107, %v4103
    %v4148 = vpack.c.b16 %v4108, %v4104
    %v4149 = vpack.c.b16 %v4109, %v4105
    %v4150 = vpack.c.b16 %v4114, %v4110
    %v4151 = vpack.c.b16 %v4115, %v4111
    %v4152 = vpack.c.b16 %v4116, %v4112
    %v4153 = vpack.c.b16 %v4117, %v4113
    %v4154 = vpack.c.b16 %v4122, %v4118
    %v4155 = vpack.c.b16 %v4123, %v4119
    %v4156 = vpack.c.b16 %v4124, %v4120
    %v4157 = vpack.c.b16 %v4125, %v4121
    %4190 = vmatprep.subr.bf16.mxu0 %v4127
    %4191 = vmatpush1.bf16.msra.mxu0 %v4126
    %4192 = vmatprep.subr.bf16.mxu0 %v4131
    %4193 = vmatpush1.bf16.msra.mxu0 %v4130
    %4194 = vmatprep.subr.bf16.mxu0 %v4135
    %4195 = vmatpush1.bf16.msra.mxu0 %v4134
    %4196 = vmatprep.subr.bf16.mxu0 %v4139
    %4197 = vmatpush1.bf16.msra.mxu0 %v4138
    %4198 = vmatprep.subr.bf16.mxu0 %v4143
    %4199 = vmatpush1.bf16.msra.mxu0 %v4142
    %4200 = vmatprep.subr.bf16.mxu0 %v4147
    %4201 = vmatpush1.bf16.msra.mxu0 %v4146
    %4202 = vmatprep.subr.bf16.mxu0 %v4151
    %4203 = vmatpush1.bf16.msra.mxu0 %v4150
    %4204 = vmatprep.subr.bf16.mxu0 %v4155
    %4205 = vmatpush1.bf16.msra.mxu0 %v4154
    %4206 = vmatprep.subr.bf16.mxu0 0
    %4207 = vmatpush1.bf16.msra.mxu0 0
    %4208 = vmatprep.subr.bf16.mxu0 0
    %4209 = vmatpush1.bf16.msra.mxu0 0
    %4210 = vmatprep.subr.bf16.mxu0 0
    %4211 = vmatpush1.bf16.msra.mxu0 0
    %4212 = vmatprep.subr.bf16.mxu0 0
    %4213 = vmatpush1.bf16.msra.mxu0 0
    %4214 = vmatprep.subr.bf16.mxu0 0
    %4215 = vmatpush1.bf16.msra.mxu0 0
    %4216 = vmatprep.subr.bf16.mxu0 0
    %4217 = vmatpush1.bf16.msra.mxu0 0
    %4218 = vmatprep.subr.bf16.mxu0 0
    %4219 = vmatpush1.bf16.msra.mxu0 0
    %4220 = vmatprep.subr.bf16.mxu0 0
    %4221 = vmatpush1.bf16.msra.mxu0 0
    %4222 = vmatprep.mubr.bf16.mxu0 0
    %4223 = vmatmul.mubr.bf16.gmra.mrb[0].mxu0 %v3997
    %v4224 = vpop.f32.mrb[0].mxu0
    %v4225 = vadd.f32 0.0, %v4224
    %v4226 = vpop.f32.mrb[0].mxu0
    %v4227 = vadd.f32 0.0, %v4226
    %v4228 = vpop.f32.mrb[0].mxu0
    %v4229 = vpop.f32.mrb[0].mxu0
    %4230 = vdwg.mxu0
    %4231 = vmatprep.subr.bf16.mxu0 %v4129
    %4232 = vmatpush1.bf16.msra.mxu0 %v4128
    %4233 = vmatprep.subr.bf16.mxu0 %v4133
    %4234 = vmatpush1.bf16.msra.mxu0 %v4132
    %4235 = vmatprep.subr.bf16.mxu0 %v4137
    %4236 = vmatpush1.bf16.msra.mxu0 %v4136
    %4237 = vmatprep.subr.bf16.mxu0 %v4141
    %4238 = vmatpush1.bf16.msra.mxu0 %v4140
    %4239 = vmatprep.subr.bf16.mxu0 %v4145
    %4240 = vmatpush1.bf16.msra.mxu0 %v4144
    %4241 = vmatprep.subr.bf16.mxu0 %v4149
    %4242 = vmatpush1.bf16.msra.mxu0 %v4148
    %4243 = vmatprep.subr.bf16.mxu0 %v4153
    %4244 = vmatpush1.bf16.msra.mxu0 %v4152
    %4245 = vmatprep.subr.bf16.mxu0 %v4157
    %4246 = vmatpush1.bf16.msra.mxu0 %v4156
    %4247 = vmatprep.subr.bf16.mxu0 0
    %4248 = vmatpush1.bf16.msra.mxu0 0
    %4249 = vmatprep.subr.bf16.mxu0 0
    %4250 = vmatpush1.bf16.msra.mxu0 0
    %4251 = vmatprep.subr.bf16.mxu0 0
    %4252 = vmatpush1.bf16.msra.mxu0 0
    %4253 = vmatprep.subr.bf16.mxu0 0
    %4254 = vmatpush1.bf16.msra.mxu0 0
    %4255 = vmatprep.subr.bf16.mxu0 0
    %4256 = vmatpush1.bf16.msra.mxu0 0
    %4257 = vmatprep.subr.bf16.mxu0 0
    %4258 = vmatpush1.bf16.msra.mxu0 0
    %4259 = vmatprep.subr.bf16.mxu0 0
    %4260 = vmatpush1.bf16.msra.mxu0 0
    %4261 = vmatprep.subr.bf16.mxu0 0
    %4262 = vmatpush1.bf16.msra.mxu0 0
    %4263 = vmatprep.mubr.bf16.mxu0 0
    %4264 = vmatmul.mubr.bf16.gmra.mrb[0].mxu0 %v3997
    %v4265 = vpop.f32.mrb[0].mxu0
    %v4266 = vadd.f32 0.0, %v4265
    %v4267 = vpop.f32.mrb[0].mxu0
    %v4268 = vadd.f32 0.0, %v4267
    %v4269 = vpop.f32.mrb[0].mxu0
    %v4270 = vpop.f32.mrb[0].mxu0
    %4271 = vdwg.mxu0
    %v4272 = vadd.f32 %v3993, %v4225
    %v4273 = vadd.f32 %v3994, %v4227
    %v4274 = vadd.f32 %v3995, %v4266
    %v4275 = vadd.f32 %v3996, %v4268
    %v4276 = vxor.u32 %v4272, 2147483648
    %v4277 = vmul.f32 %v4276, 1.442695
    %v4278 = vpow.pop %v4277
    %v4279 = vadd.f32 %v4278, 1.0
    %v4280 = vrcp.pop %v4279
    %v4281 = vmul.f32 1.0, %v4280
    %v4282 = vxor.u32 %v4273, 2147483648
    %v4283 = vmul.f32 %v4282, 1.442695
    %v4284 = vpow.pop %v4283
    %v4285 = vadd.f32 %v4284, 1.0
    %v4286 = vrcp.pop %v4285
    %v4287 = vmul.f32 1.0, %v4286
    %v4288 = vtanh.pop %v4274
    %v4289 = vxor.u32 %v4275, 2147483648
    %v4290 = vmul.f32 %v4289, 1.442695
    %v4291 = vpow.pop %v4290
    %v4292 = vadd.f32 %v4291, 1.0
    %v4293 = vrcp.pop %v4292
    %v4294 = vmul.f32 1.0, %v4293
    %v4295 = vmul.f32 %v4287, %v3981
    %v4296 = vmul.f32 %v4281, %v4288
    %v4297 = vadd.f32 %v4295, %v4296
    %v4298 = vtanh.pop %v4297
    %v4299 = vmul.f32 %v4294, %v4298
    %v4300 = vsel %vm3989, 1, 0
    %4301 = vset.pattern.permute.xlu0 0
    %4302 = vperm.xlu0 %4301, %v4300
    %v4303 = vpop.permute.xlu0 %4302
    %vm4304 = vcmp.eq.s32.totalorder %v4303, 1
    %v4305 = vsel %vm4304, %v4297, %v3981
    %v4306 = vsel %vm4304, %v4299, %v3982
    %v4307 = vsel %vm4304, %v4299, 0.0
    %v4308 = vpack.c.bf16 %v4307, %v4307
    %s4309 = scalar_lea.vmem %s60, 12
    %4310 = vst [vmem:[%s4309] sm:$0xf] %v4308
    %s4311 = ssub.s32 2, %s64
    %v4312 = vstv %s4311
    %vm4313 = vcmp.lt.s32.totalorder %v4312, %v74
    %s4314 = scalar_lea.vmem %s52, 32
    %v4315 = vld [vmem:[%s4314] sm:$0xff]
    %v4316 = vld [vmem:[%s4314 + $0x8] sm:$0xff]
    %v4317 = vunpack.c.l.bf16 %v4315
    %v4318 = vunpack.c.h.bf16 %v4315
    %v4319 = vunpack.c.l.bf16 %v4316
    %v4320 = vunpack.c.h.bf16 %v4316
    %v4321 = vpack.c.bf16 %v4306, %v4306
    %v4322 = vld [vmem:[%s5] sm:$0xff]
    %v4323 = vld [vmem:[%s5 + $0x8] sm:$0xff]
    %v4324 = vld [vmem:[%s5 + $0x10] sm:$0xff]
    %v4325 = vld [vmem:[%s5 + $0x18] sm:$0xff]
    %v4326 = vld [vmem:[%s5 + $0x20] sm:$0xff]
    %v4327 = vld [vmem:[%s5 + $0x28] sm:$0xff]
    %v4328 = vld [vmem:[%s5 + $0x30] sm:$0xff]
    %v4329 = vld [vmem:[%s5 + $0x38] sm:$0xff]
    %v4330 = vld [vmem:[%s5 + $0x40] sm:$0xff]
    %v4331 = vld [vmem:[%s5 + $0x48] sm:$0xff]
    %v4332 = vld [vmem:[%s5 + $0x50] sm:$0xff]
    %v4333 = vld [vmem:[%s5 + $0x58] sm:$0xff]
    %v4334 = vld [vmem:[%s5 + $0x60] sm:$0xff]
    %v4335 = vld [vmem:[%s5 + $0x68] sm:$0xff]
    %v4336 = vld [vmem:[%s5 + $0x70] sm:$0xff]
    %v4337 = vld [vmem:[%s5 + $0x78] sm:$0xff]
    %v4338 = vld [vmem:[%s5 + $0x80] sm:$0xff]
    %v4339 = vld [vmem:[%s5 + $0x88] sm:$0xff]
    %v4340 = vld [vmem:[%s5 + $0x90] sm:$0xff]
    %v4341 = vld [vmem:[%s5 + $0x98] sm:$0xff]
    %v4342 = vld [vmem:[%s5 + $0xa0] sm:$0xff]
    %v4343 = vld [vmem:[%s5 + $0xa8] sm:$0xff]
    %v4344 = vld [vmem:[%s5 + $0xb0] sm:$0xff]
    %v4345 = vld [vmem:[%s5 + $0xb8] sm:$0xff]
    %v4346 = vld [vmem:[%s5 + $0xc0] sm:$0xff]
    %v4347 = vld [vmem:[%s5 + $0xc8] sm:$0xff]
    %v4348 = vld [vmem:[%s5 + $0xd0] sm:$0xff]
    %v4349 = vld [vmem:[%s5 + $0xd8] sm:$0xff]
    %v4350 = vld [vmem:[%s5 + $0xe0] sm:$0xff]
    %v4351 = vld [vmem:[%s5 + $0xe8] sm:$0xff]
    %v4352 = vld [vmem:[%s5 + $0xf0] sm:$0xff]
    %v4353 = vld [vmem:[%s5 + $0xf8] sm:$0xff]
    %v4386 = vunpack.c.l.b16 %v4322
    %v4387 = vunpack.c.h.b16 %v4322
    %v4388 = vunpack.c.l.b16 %v4323
    %v4389 = vunpack.c.h.b16 %v4323
    %v4390 = vunpack.c.l.b16 %v4324
    %v4391 = vunpack.c.h.b16 %v4324
    %v4392 = vunpack.c.l.b16 %v4325
    %v4393 = vunpack.c.h.b16 %v4325
    %v4394 = vunpack.c.l.b16 %v4326
    %v4395 = vunpack.c.h.b16 %v4326
    %v4396 = vunpack.c.l.b16 %v4327
    %v4397 = vunpack.c.h.b16 %v4327
    %v4398 = vunpack.c.l.b16 %v4328
    %v4399 = vunpack.c.h.b16 %v4328
    %v4400 = vunpack.c.l.b16 %v4329
    %v4401 = vunpack.c.h.b16 %v4329
    %v4402 = vunpack.c.l.b16 %v4330
    %v4403 = vunpack.c.h.b16 %v4330
    %v4404 = vunpack.c.l.b16 %v4331
    %v4405 = vunpack.c.h.b16 %v4331
    %v4406 = vunpack.c.l.b16 %v4332
    %v4407 = vunpack.c.h.b16 %v4332
    %v4408 = vunpack.c.l.b16 %v4333
    %v4409 = vunpack.c.h.b16 %v4333
    %v4410 = vunpack.c.l.b16 %v4334
    %v4411 = vunpack.c.h.b16 %v4334
    %v4412 = vunpack.c.l.b16 %v4335
    %v4413 = vunpack.c.h.b16 %v4335
    %v4414 = vunpack.c.l.b16 %v4336
    %v4415 = vunpack.c.h.b16 %v4336
    %v4416 = vunpack.c.l.b16 %v4337
    %v4417 = vunpack.c.h.b16 %v4337
    %v4418 = vunpack.c.l.b16 %v4338
    %v4419 = vunpack.c.h.b16 %v4338
    %v4420 = vunpack.c.l.b16 %v4339
    %v4421 = vunpack.c.h.b16 %v4339
    %v4422 = vunpack.c.l.b16 %v4340
    %v4423 = vunpack.c.h.b16 %v4340
    %v4424 = vunpack.c.l.b16 %v4341
    %v4425 = vunpack.c.h.b16 %v4341
    %v4426 = vunpack.c.l.b16 %v4342
    %v4427 = vunpack.c.h.b16 %v4342
    %v4428 = vunpack.c.l.b16 %v4343
    %v4429 = vunpack.c.h.b16 %v4343
    %v4430 = vunpack.c.l.b16 %v4344
    %v4431 = vunpack.c.h.b16 %v4344
    %v4432 = vunpack.c.l.b16 %v4345
    %v4433 = vunpack.c.h.b16 %v4345
    %v4434 = vunpack.c.l.b16 %v4346
    %v4435 = vunpack.c.h.b16 %v4346
    %v4436 = vunpack.c.l.b16 %v4347
    %v4437 = vunpack.c.h.b16 %v4347
    %v4438 = vunpack.c.l.b16 %v4348
    %v4439 = vunpack.c.h.b16 %v4348
    %v4440 = vunpack.c.l.b16 %v4349
    %v4441 = vunpack.c.h.b16 %v4349
    %v4442 = vunpack.c.l.b16 %v4350
    %v4443 = vunpack.c.h.b16 %v4350
    %v4444 = vunpack.c.l.b16 %v4351
    %v4445 = vunpack.c.h.b16 %v4351
    %v4446 = vunpack.c.l.b16 %v4352
    %v4447 = vunpack.c.h.b16 %v4352
    %v4448 = vunpack.c.l.b16 %v4353
    %v4449 = vunpack.c.h.b16 %v4353
    %v4450 = vpack.c.b16 %v4390, %v4386
    %v4451 = vpack.c.b16 %v4391, %v4387
    %v4452 = vpack.c.b16 %v4392, %v4388
    %v4453 = vpack.c.b16 %v4393, %v4389
    %v4454 = vpack.c.b16 %v4398, %v4394
    %v4455 = vpack.c.b16 %v4399, %v4395
    %v4456 = vpack.c.b16 %v4400, %v4396
    %v4457 = vpack.c.b16 %v4401, %v4397
    %v4458 = vpack.c.b16 %v4406, %v4402
    %v4459 = vpack.c.b16 %v4407, %v4403
    %v4460 = vpack.c.b16 %v4408, %v4404
    %v4461 = vpack.c.b16 %v4409, %v4405
    %v4462 = vpack.c.b16 %v4414, %v4410
    %v4463 = vpack.c.b16 %v4415, %v4411
    %v4464 = vpack.c.b16 %v4416, %v4412
    %v4465 = vpack.c.b16 %v4417, %v4413
    %v4466 = vpack.c.b16 %v4422, %v4418
    %v4467 = vpack.c.b16 %v4423, %v4419
    %v4468 = vpack.c.b16 %v4424, %v4420
    %v4469 = vpack.c.b16 %v4425, %v4421
    %v4470 = vpack.c.b16 %v4430, %v4426
    %v4471 = vpack.c.b16 %v4431, %v4427
    %v4472 = vpack.c.b16 %v4432, %v4428
    %v4473 = vpack.c.b16 %v4433, %v4429
    %v4474 = vpack.c.b16 %v4438, %v4434
    %v4475 = vpack.c.b16 %v4439, %v4435
    %v4476 = vpack.c.b16 %v4440, %v4436
    %v4477 = vpack.c.b16 %v4441, %v4437
    %v4478 = vpack.c.b16 %v4446, %v4442
    %v4479 = vpack.c.b16 %v4447, %v4443
    %v4480 = vpack.c.b16 %v4448, %v4444
    %v4481 = vpack.c.b16 %v4449, %v4445
    %4514 = vmatprep.subr.bf16.mxu0 %v4451
    %4515 = vmatpush1.bf16.msra.mxu0 %v4450
    %4516 = vmatprep.subr.bf16.mxu0 %v4455
    %4517 = vmatpush1.bf16.msra.mxu0 %v4454
    %4518 = vmatprep.subr.bf16.mxu0 %v4459
    %4519 = vmatpush1.bf16.msra.mxu0 %v4458
    %4520 = vmatprep.subr.bf16.mxu0 %v4463
    %4521 = vmatpush1.bf16.msra.mxu0 %v4462
    %4522 = vmatprep.subr.bf16.mxu0 %v4467
    %4523 = vmatpush1.bf16.msra.mxu0 %v4466
    %4524 = vmatprep.subr.bf16.mxu0 %v4471
    %4525 = vmatpush1.bf16.msra.mxu0 %v4470
    %4526 = vmatprep.subr.bf16.mxu0 %v4475
    %4527 = vmatpush1.bf16.msra.mxu0 %v4474
    %4528 = vmatprep.subr.bf16.mxu0 %v4479
    %4529 = vmatpush1.bf16.msra.mxu0 %v4478
    %4530 = vmatprep.subr.bf16.mxu0 0
    %4531 = vmatpush1.bf16.msra.mxu0 0
    %4532 = vmatprep.subr.bf16.mxu0 0
    %4533 = vmatpush1.bf16.msra.mxu0 0
    %4534 = vmatprep.subr.bf16.mxu0 0
    %4535 = vmatpush1.bf16.msra.mxu0 0
    %4536 = vmatprep.subr.bf16.mxu0 0
    %4537 = vmatpush1.bf16.msra.mxu0 0
    %4538 = vmatprep.subr.bf16.mxu0 0
    %4539 = vmatpush1.bf16.msra.mxu0 0
    %4540 = vmatprep.subr.bf16.mxu0 0
    %4541 = vmatpush1.bf16.msra.mxu0 0
    %4542 = vmatprep.subr.bf16.mxu0 0
    %4543 = vmatpush1.bf16.msra.mxu0 0
    %4544 = vmatprep.subr.bf16.mxu0 0
    %4545 = vmatpush1.bf16.msra.mxu0 0
    %4546 = vmatprep.mubr.bf16.mxu0 0
    %4547 = vmatmul.mubr.bf16.gmra.mrb[0].mxu0 %v4321
    %v4548 = vpop.f32.mrb[0].mxu0
    %v4549 = vadd.f32 0.0, %v4548
    %v4550 = vpop.f32.mrb[0].mxu0
    %v4551 = vadd.f32 0.0, %v4550
    %v4552 = vpop.f32.mrb[0].mxu0
    %v4553 = vpop.f32.mrb[0].mxu0
    %4554 = vdwg.mxu0
    %4555 = vmatprep.subr.bf16.mxu0 %v4453
    %4556 = vmatpush1.bf16.msra.mxu0 %v4452
    %4557 = vmatprep.subr.bf16.mxu0 %v4457
    %4558 = vmatpush1.bf16.msra.mxu0 %v4456
    %4559 = vmatprep.subr.bf16.mxu0 %v4461
    %4560 = vmatpush1.bf16.msra.mxu0 %v4460
    %4561 = vmatprep.subr.bf16.mxu0 %v4465
    %4562 = vmatpush1.bf16.msra.mxu0 %v4464
    %4563 = vmatprep.subr.bf16.mxu0 %v4469
    %4564 = vmatpush1.bf16.msra.mxu0 %v4468
    %4565 = vmatprep.subr.bf16.mxu0 %v4473
    %4566 = vmatpush1.bf16.msra.mxu0 %v4472
    %4567 = vmatprep.subr.bf16.mxu0 %v4477
    %4568 = vmatpush1.bf16.msra.mxu0 %v4476
    %4569 = vmatprep.subr.bf16.mxu0 %v4481
    %4570 = vmatpush1.bf16.msra.mxu0 %v4480
    %4571 = vmatprep.subr.bf16.mxu0 0
    %4572 = vmatpush1.bf16.msra.mxu0 0
    %4573 = vmatprep.subr.bf16.mxu0 0
    %4574 = vmatpush1.bf16.msra.mxu0 0
    %4575 = vmatprep.subr.bf16.mxu0 0
    %4576 = vmatpush1.bf16.msra.mxu0 0
    %4577 = vmatprep.subr.bf16.mxu0 0
    %4578 = vmatpush1.bf16.msra.mxu0 0
    %4579 = vmatprep.subr.bf16.mxu0 0
    %4580 = vmatpush1.bf16.msra.mxu0 0
    %4581 = vmatprep.subr.bf16.mxu0 0
    %4582 = vmatpush1.bf16.msra.mxu0 0
    %4583 = vmatprep.subr.bf16.mxu0 0
    %4584 = vmatpush1.bf16.msra.mxu0 0
    %4585 = vmatprep.subr.bf16.mxu0 0
    %4586 = vmatpush1.bf16.msra.mxu0 0
    %4587 = vmatprep.mubr.bf16.mxu0 0
    %4588 = vmatmul.mubr.bf16.gmra.mrb[0].mxu0 %v4321
    %v4589 = vpop.f32.mrb[0].mxu0
    %v4590 = vadd.f32 0.0, %v4589
    %v4591 = vpop.f32.mrb[0].mxu0
    %v4592 = vadd.f32 0.0, %v4591
    %v4593 = vpop.f32.mrb[0].mxu0
    %v4594 = vpop.f32.mrb[0].mxu0
    %4595 = vdwg.mxu0
    %v4596 = vadd.f32 %v4317, %v4549
    %v4597 = vadd.f32 %v4318, %v4551
    %v4598 = vadd.f32 %v4319, %v4590
    %v4599 = vadd.f32 %v4320, %v4592
    %v4600 = vxor.u32 %v4596, 2147483648
    %v4601 = vmul.f32 %v4600, 1.442695
    %v4602 = vpow.pop %v4601
    %v4603 = vadd.f32 %v4602, 1.0
    %v4604 = vrcp.pop %v4603
    %v4605 = vmul.f32 1.0, %v4604
    %v4606 = vxor.u32 %v4597, 2147483648
    %v4607 = vmul.f32 %v4606, 1.442695
    %v4608 = vpow.pop %v4607
    %v4609 = vadd.f32 %v4608, 1.0
    %v4610 = vrcp.pop %v4609
    %v4611 = vmul.f32 1.0, %v4610
    %v4612 = vtanh.pop %v4598
    %v4613 = vxor.u32 %v4599, 2147483648
    %v4614 = vmul.f32 %v4613, 1.442695
    %v4615 = vpow.pop %v4614
    %v4616 = vadd.f32 %v4615, 1.0
    %v4617 = vrcp.pop %v4616
    %v4618 = vmul.f32 1.0, %v4617
    %v4619 = vmul.f32 %v4611, %v4305
    %v4620 = vmul.f32 %v4605, %v4612
    %v4621 = vadd.f32 %v4619, %v4620
    %v4622 = vtanh.pop %v4621
    %v4623 = vmul.f32 %v4618, %v4622
    %v4624 = vsel %vm4313, 1, 0
    %4625 = vset.pattern.permute.xlu0 0
    %4626 = vperm.xlu0 %4625, %v4624
    %v4627 = vpop.permute.xlu0 %4626
    %vm4628 = vcmp.eq.s32.totalorder %v4627, 1
    %v4629 = vsel %vm4628, %v4621, %v4305
    %v4630 = vsel %vm4628, %v4623, %v4306
    %v4631 = vsel %vm4628, %v4623, 0.0
    %v4632 = vpack.c.bf16 %v4631, %v4631
    %s4633 = scalar_lea.vmem %s60, 8
    %4634 = vst [vmem:[%s4633] sm:$0xf] %v4632
    %s4635 = ssub.s32 1, %s64
    %v4636 = vstv %s4635
    %vm4637 = vcmp.lt.s32.totalorder %v4636, %v74
    %s4638 = scalar_lea.vmem %s52, 16
    %v4639 = vld [vmem:[%s4638] sm:$0xff]
    %v4640 = vld [vmem:[%s4638 + $0x8] sm:$0xff]
    %v4641 = vunpack.c.l.bf16 %v4639
    %v4642 = vunpack.c.h.bf16 %v4639
    %v4643 = vunpack.c.l.bf16 %v4640
    %v4644 = vunpack.c.h.bf16 %v4640
    %v4645 = vpack.c.bf16 %v4630, %v4630
    %v4646 = vld [vmem:[%s5] sm:$0xff]
    %v4647 = vld [vmem:[%s5 + $0x8] sm:$0xff]
    %v4648 = vld [vmem:[%s5 + $0x10] sm:$0xff]
    %v4649 = vld [vmem:[%s5 + $0x18] sm:$0xff]
    %v4650 = vld [vmem:[%s5 + $0x20] sm:$0xff]
    %v4651 = vld [vmem:[%s5 + $0x28] sm:$0xff]
    %v4652 = vld [vmem:[%s5 + $0x30] sm:$0xff]
    %v4653 = vld [vmem:[%s5 + $0x38] sm:$0xff]
    %v4654 = vld [vmem:[%s5 + $0x40] sm:$0xff]
    %v4655 = vld [vmem:[%s5 + $0x48] sm:$0xff]
    %v4656 = vld [vmem:[%s5 + $0x50] sm:$0xff]
    %v4657 = vld [vmem:[%s5 + $0x58] sm:$0xff]
    %v4658 = vld [vmem:[%s5 + $0x60] sm:$0xff]
    %v4659 = vld [vmem:[%s5 + $0x68] sm:$0xff]
    %v4660 = vld [vmem:[%s5 + $0x70] sm:$0xff]
    %v4661 = vld [vmem:[%s5 + $0x78] sm:$0xff]
    %v4662 = vld [vmem:[%s5 + $0x80] sm:$0xff]
    %v4663 = vld [vmem:[%s5 + $0x88] sm:$0xff]
    %v4664 = vld [vmem:[%s5 + $0x90] sm:$0xff]
    %v4665 = vld [vmem:[%s5 + $0x98] sm:$0xff]
    %v4666 = vld [vmem:[%s5 + $0xa0] sm:$0xff]
    %v4667 = vld [vmem:[%s5 + $0xa8] sm:$0xff]
    %v4668 = vld [vmem:[%s5 + $0xb0] sm:$0xff]
    %v4669 = vld [vmem:[%s5 + $0xb8] sm:$0xff]
    %v4670 = vld [vmem:[%s5 + $0xc0] sm:$0xff]
    %v4671 = vld [vmem:[%s5 + $0xc8] sm:$0xff]
    %v4672 = vld [vmem:[%s5 + $0xd0] sm:$0xff]
    %v4673 = vld [vmem:[%s5 + $0xd8] sm:$0xff]
    %v4674 = vld [vmem:[%s5 + $0xe0] sm:$0xff]
    %v4675 = vld [vmem:[%s5 + $0xe8] sm:$0xff]
    %v4676 = vld [vmem:[%s5 + $0xf0] sm:$0xff]
    %v4677 = vld [vmem:[%s5 + $0xf8] sm:$0xff]
    %v4710 = vunpack.c.l.b16 %v4646
    %v4711 = vunpack.c.h.b16 %v4646
    %v4712 = vunpack.c.l.b16 %v4647
    %v4713 = vunpack.c.h.b16 %v4647
    %v4714 = vunpack.c.l.b16 %v4648
    %v4715 = vunpack.c.h.b16 %v4648
    %v4716 = vunpack.c.l.b16 %v4649
    %v4717 = vunpack.c.h.b16 %v4649
    %v4718 = vunpack.c.l.b16 %v4650
    %v4719 = vunpack.c.h.b16 %v4650
    %v4720 = vunpack.c.l.b16 %v4651
    %v4721 = vunpack.c.h.b16 %v4651
    %v4722 = vunpack.c.l.b16 %v4652
    %v4723 = vunpack.c.h.b16 %v4652
    %v4724 = vunpack.c.l.b16 %v4653
    %v4725 = vunpack.c.h.b16 %v4653
    %v4726 = vunpack.c.l.b16 %v4654
    %v4727 = vunpack.c.h.b16 %v4654
    %v4728 = vunpack.c.l.b16 %v4655
    %v4729 = vunpack.c.h.b16 %v4655
    %v4730 = vunpack.c.l.b16 %v4656
    %v4731 = vunpack.c.h.b16 %v4656
    %v4732 = vunpack.c.l.b16 %v4657
    %v4733 = vunpack.c.h.b16 %v4657
    %v4734 = vunpack.c.l.b16 %v4658
    %v4735 = vunpack.c.h.b16 %v4658
    %v4736 = vunpack.c.l.b16 %v4659
    %v4737 = vunpack.c.h.b16 %v4659
    %v4738 = vunpack.c.l.b16 %v4660
    %v4739 = vunpack.c.h.b16 %v4660
    %v4740 = vunpack.c.l.b16 %v4661
    %v4741 = vunpack.c.h.b16 %v4661
    %v4742 = vunpack.c.l.b16 %v4662
    %v4743 = vunpack.c.h.b16 %v4662
    %v4744 = vunpack.c.l.b16 %v4663
    %v4745 = vunpack.c.h.b16 %v4663
    %v4746 = vunpack.c.l.b16 %v4664
    %v4747 = vunpack.c.h.b16 %v4664
    %v4748 = vunpack.c.l.b16 %v4665
    %v4749 = vunpack.c.h.b16 %v4665
    %v4750 = vunpack.c.l.b16 %v4666
    %v4751 = vunpack.c.h.b16 %v4666
    %v4752 = vunpack.c.l.b16 %v4667
    %v4753 = vunpack.c.h.b16 %v4667
    %v4754 = vunpack.c.l.b16 %v4668
    %v4755 = vunpack.c.h.b16 %v4668
    %v4756 = vunpack.c.l.b16 %v4669
    %v4757 = vunpack.c.h.b16 %v4669
    %v4758 = vunpack.c.l.b16 %v4670
    %v4759 = vunpack.c.h.b16 %v4670
    %v4760 = vunpack.c.l.b16 %v4671
    %v4761 = vunpack.c.h.b16 %v4671
    %v4762 = vunpack.c.l.b16 %v4672
    %v4763 = vunpack.c.h.b16 %v4672
    %v4764 = vunpack.c.l.b16 %v4673
    %v4765 = vunpack.c.h.b16 %v4673
    %v4766 = vunpack.c.l.b16 %v4674
    %v4767 = vunpack.c.h.b16 %v4674
    %v4768 = vunpack.c.l.b16 %v4675
    %v4769 = vunpack.c.h.b16 %v4675
    %v4770 = vunpack.c.l.b16 %v4676
    %v4771 = vunpack.c.h.b16 %v4676
    %v4772 = vunpack.c.l.b16 %v4677
    %v4773 = vunpack.c.h.b16 %v4677
    %v4774 = vpack.c.b16 %v4714, %v4710
    %v4775 = vpack.c.b16 %v4715, %v4711
    %v4776 = vpack.c.b16 %v4716, %v4712
    %v4777 = vpack.c.b16 %v4717, %v4713
    %v4778 = vpack.c.b16 %v4722, %v4718
    %v4779 = vpack.c.b16 %v4723, %v4719
    %v4780 = vpack.c.b16 %v4724, %v4720
    %v4781 = vpack.c.b16 %v4725, %v4721
    %v4782 = vpack.c.b16 %v4730, %v4726
    %v4783 = vpack.c.b16 %v4731, %v4727
    %v4784 = vpack.c.b16 %v4732, %v4728
    %v4785 = vpack.c.b16 %v4733, %v4729
    %v4786 = vpack.c.b16 %v4738, %v4734
    %v4787 = vpack.c.b16 %v4739, %v4735
    %v4788 = vpack.c.b16 %v4740, %v4736
    %v4789 = vpack.c.b16 %v4741, %v4737
    %v4790 = vpack.c.b16 %v4746, %v4742
    %v4791 = vpack.c.b16 %v4747, %v4743
    %v4792 = vpack.c.b16 %v4748, %v4744
    %v4793 = vpack.c.b16 %v4749, %v4745
    %v4794 = vpack.c.b16 %v4754, %v4750
    %v4795 = vpack.c.b16 %v4755, %v4751
    %v4796 = vpack.c.b16 %v4756, %v4752
    %v4797 = vpack.c.b16 %v4757, %v4753
    %v4798 = vpack.c.b16 %v4762, %v4758
    %v4799 = vpack.c.b16 %v4763, %v4759
    %v4800 = vpack.c.b16 %v4764, %v4760
    %v4801 = vpack.c.b16 %v4765, %v4761
    %v4802 = vpack.c.b16 %v4770, %v4766
    %v4803 = vpack.c.b16 %v4771, %v4767
    %v4804 = vpack.c.b16 %v4772, %v4768
    %v4805 = vpack.c.b16 %v4773, %v4769
    %4838 = vmatprep.subr.bf16.mxu0 %v4775
    %4839 = vmatpush1.bf16.msra.mxu0 %v4774
    %4840 = vmatprep.subr.bf16.mxu0 %v4779
    %4841 = vmatpush1.bf16.msra.mxu0 %v4778
    %4842 = vmatprep.subr.bf16.mxu0 %v4783
    %4843 = vmatpush1.bf16.msra.mxu0 %v4782
    %4844 = vmatprep.subr.bf16.mxu0 %v4787
    %4845 = vmatpush1.bf16.msra.mxu0 %v4786
    %4846 = vmatprep.subr.bf16.mxu0 %v4791
    %4847 = vmatpush1.bf16.msra.mxu0 %v4790
    %4848 = vmatprep.subr.bf16.mxu0 %v4795
    %4849 = vmatpush1.bf16.msra.mxu0 %v4794
    %4850 = vmatprep.subr.bf16.mxu0 %v4799
    %4851 = vmatpush1.bf16.msra.mxu0 %v4798
    %4852 = vmatprep.subr.bf16.mxu0 %v4803
    %4853 = vmatpush1.bf16.msra.mxu0 %v4802
    %4854 = vmatprep.subr.bf16.mxu0 0
    %4855 = vmatpush1.bf16.msra.mxu0 0
    %4856 = vmatprep.subr.bf16.mxu0 0
    %4857 = vmatpush1.bf16.msra.mxu0 0
    %4858 = vmatprep.subr.bf16.mxu0 0
    %4859 = vmatpush1.bf16.msra.mxu0 0
    %4860 = vmatprep.subr.bf16.mxu0 0
    %4861 = vmatpush1.bf16.msra.mxu0 0
    %4862 = vmatprep.subr.bf16.mxu0 0
    %4863 = vmatpush1.bf16.msra.mxu0 0
    %4864 = vmatprep.subr.bf16.mxu0 0
    %4865 = vmatpush1.bf16.msra.mxu0 0
    %4866 = vmatprep.subr.bf16.mxu0 0
    %4867 = vmatpush1.bf16.msra.mxu0 0
    %4868 = vmatprep.subr.bf16.mxu0 0
    %4869 = vmatpush1.bf16.msra.mxu0 0
    %4870 = vmatprep.mubr.bf16.mxu0 0
    %4871 = vmatmul.mubr.bf16.gmra.mrb[0].mxu0 %v4645
    %v4872 = vpop.f32.mrb[0].mxu0
    %v4873 = vadd.f32 0.0, %v4872
    %v4874 = vpop.f32.mrb[0].mxu0
    %v4875 = vadd.f32 0.0, %v4874
    %v4876 = vpop.f32.mrb[0].mxu0
    %v4877 = vpop.f32.mrb[0].mxu0
    %4878 = vdwg.mxu0
    %4879 = vmatprep.subr.bf16.mxu0 %v4777
    %4880 = vmatpush1.bf16.msra.mxu0 %v4776
    %4881 = vmatprep.subr.bf16.mxu0 %v4781
    %4882 = vmatpush1.bf16.msra.mxu0 %v4780
    %4883 = vmatprep.subr.bf16.mxu0 %v4785
    %4884 = vmatpush1.bf16.msra.mxu0 %v4784
    %4885 = vmatprep.subr.bf16.mxu0 %v4789
    %4886 = vmatpush1.bf16.msra.mxu0 %v4788
    %4887 = vmatprep.subr.bf16.mxu0 %v4793
    %4888 = vmatpush1.bf16.msra.mxu0 %v4792
    %4889 = vmatprep.subr.bf16.mxu0 %v4797
    %4890 = vmatpush1.bf16.msra.mxu0 %v4796
    %4891 = vmatprep.subr.bf16.mxu0 %v4801
    %4892 = vmatpush1.bf16.msra.mxu0 %v4800
    %4893 = vmatprep.subr.bf16.mxu0 %v4805
    %4894 = vmatpush1.bf16.msra.mxu0 %v4804
    %4895 = vmatprep.subr.bf16.mxu0 0
    %4896 = vmatpush1.bf16.msra.mxu0 0
    %4897 = vmatprep.subr.bf16.mxu0 0
    %4898 = vmatpush1.bf16.msra.mxu0 0
    %4899 = vmatprep.subr.bf16.mxu0 0
    %4900 = vmatpush1.bf16.msra.mxu0 0
    %4901 = vmatprep.subr.bf16.mxu0 0
    %4902 = vmatpush1.bf16.msra.mxu0 0
    %4903 = vmatprep.subr.bf16.mxu0 0
    %4904 = vmatpush1.bf16.msra.mxu0 0
    %4905 = vmatprep.subr.bf16.mxu0 0
    %4906 = vmatpush1.bf16.msra.mxu0 0
    %4907 = vmatprep.subr.bf16.mxu0 0
    %4908 = vmatpush1.bf16.msra.mxu0 0
    %4909 = vmatprep.subr.bf16.mxu0 0
    %4910 = vmatpush1.bf16.msra.mxu0 0
    %4911 = vmatprep.mubr.bf16.mxu0 0
    %4912 = vmatmul.mubr.bf16.gmra.mrb[0].mxu0 %v4645
    %v4913 = vpop.f32.mrb[0].mxu0
    %v4914 = vadd.f32 0.0, %v4913
    %v4915 = vpop.f32.mrb[0].mxu0
    %v4916 = vadd.f32 0.0, %v4915
    %v4917 = vpop.f32.mrb[0].mxu0
    %v4918 = vpop.f32.mrb[0].mxu0
    %4919 = vdwg.mxu0
    %v4920 = vadd.f32 %v4641, %v4873
    %v4921 = vadd.f32 %v4642, %v4875
    %v4922 = vadd.f32 %v4643, %v4914
    %v4923 = vadd.f32 %v4644, %v4916
    %v4924 = vxor.u32 %v4920, 2147483648
    %v4925 = vmul.f32 %v4924, 1.442695
    %v4926 = vpow.pop %v4925
    %v4927 = vadd.f32 %v4926, 1.0
    %v4928 = vrcp.pop %v4927
    %v4929 = vmul.f32 1.0, %v4928
    %v4930 = vxor.u32 %v4921, 2147483648
    %v4931 = vmul.f32 %v4930, 1.442695
    %v4932 = vpow.pop %v4931
    %v4933 = vadd.f32 %v4932, 1.0
    %v4934 = vrcp.pop %v4933
    %v4935 = vmul.f32 1.0, %v4934
    %v4936 = vtanh.pop %v4922
    %v4937 = vxor.u32 %v4923, 2147483648
    %v4938 = vmul.f32 %v4937, 1.442695
    %v4939 = vpow.pop %v4938
    %v4940 = vadd.f32 %v4939, 1.0
    %v4941 = vrcp.pop %v4940
    %v4942 = vmul.f32 1.0, %v4941
    %v4943 = vmul.f32 %v4935, %v4629
    %v4944 = vmul.f32 %v4929, %v4936
    %v4945 = vadd.f32 %v4943, %v4944
    %v4946 = vtanh.pop %v4945
    %v4947 = vmul.f32 %v4942, %v4946
    %v4948 = vsel %vm4637, 1, 0
    %4949 = vset.pattern.permute.xlu0 0
    %4950 = vperm.xlu0 %4949, %v4948
    %v4951 = vpop.permute.xlu0 %4950
    %vm4952 = vcmp.eq.s32.totalorder %v4951, 1
    %v4953 = vsel %vm4952, %v4945, %v4629
    %v4954 = vsel %vm4952, %v4947, %v4630
    %v4955 = vsel %vm4952, %v4947, 0.0
    %v4956 = vpack.c.bf16 %v4955, %v4955
    %s4957 = scalar_lea.vmem %s60, 4
    %4958 = vst [vmem:[%s4957] sm:$0xf] %v4956
    %v4959 = vstv %s2684
    %vm4960 = vcmp.lt.s32.totalorder %v4959, %v74
    %v4961 = vld [vmem:[%s52] sm:$0xff]
    %v4962 = vld [vmem:[%s52 + $0x8] sm:$0xff]
    %v4963 = vunpack.c.l.bf16 %v4961
    %v4964 = vunpack.c.h.bf16 %v4961
    %v4965 = vunpack.c.l.bf16 %v4962
    %v4966 = vunpack.c.h.bf16 %v4962
    %v4967 = vpack.c.bf16 %v4954, %v4954
    %v4968 = vld [vmem:[%s5] sm:$0xff]
    %v4969 = vld [vmem:[%s5 + $0x8] sm:$0xff]
    %v4970 = vld [vmem:[%s5 + $0x10] sm:$0xff]
    %v4971 = vld [vmem:[%s5 + $0x18] sm:$0xff]
    %v4972 = vld [vmem:[%s5 + $0x20] sm:$0xff]
    %v4973 = vld [vmem:[%s5 + $0x28] sm:$0xff]
    %v4974 = vld [vmem:[%s5 + $0x30] sm:$0xff]
    %v4975 = vld [vmem:[%s5 + $0x38] sm:$0xff]
    %v4976 = vld [vmem:[%s5 + $0x40] sm:$0xff]
    %v4977 = vld [vmem:[%s5 + $0x48] sm:$0xff]
    %v4978 = vld [vmem:[%s5 + $0x50] sm:$0xff]
    %v4979 = vld [vmem:[%s5 + $0x58] sm:$0xff]
    %v4980 = vld [vmem:[%s5 + $0x60] sm:$0xff]
    %v4981 = vld [vmem:[%s5 + $0x68] sm:$0xff]
    %v4982 = vld [vmem:[%s5 + $0x70] sm:$0xff]
    %v4983 = vld [vmem:[%s5 + $0x78] sm:$0xff]
    %v4984 = vld [vmem:[%s5 + $0x80] sm:$0xff]
    %v4985 = vld [vmem:[%s5 + $0x88] sm:$0xff]
    %v4986 = vld [vmem:[%s5 + $0x90] sm:$0xff]
    %v4987 = vld [vmem:[%s5 + $0x98] sm:$0xff]
    %v4988 = vld [vmem:[%s5 + $0xa0] sm:$0xff]
    %v4989 = vld [vmem:[%s5 + $0xa8] sm:$0xff]
    %v4990 = vld [vmem:[%s5 + $0xb0] sm:$0xff]
    %v4991 = vld [vmem:[%s5 + $0xb8] sm:$0xff]
    %v4992 = vld [vmem:[%s5 + $0xc0] sm:$0xff]
    %v4993 = vld [vmem:[%s5 + $0xc8] sm:$0xff]
    %v4994 = vld [vmem:[%s5 + $0xd0] sm:$0xff]
    %v4995 = vld [vmem:[%s5 + $0xd8] sm:$0xff]
    %v4996 = vld [vmem:[%s5 + $0xe0] sm:$0xff]
    %v4997 = vld [vmem:[%s5 + $0xe8] sm:$0xff]
    %v4998 = vld [vmem:[%s5 + $0xf0] sm:$0xff]
    %v4999 = vld [vmem:[%s5 + $0xf8] sm:$0xff]
    %v5032 = vunpack.c.l.b16 %v4968
    %v5033 = vunpack.c.h.b16 %v4968
    %v5034 = vunpack.c.l.b16 %v4969
    %v5035 = vunpack.c.h.b16 %v4969
    %v5036 = vunpack.c.l.b16 %v4970
    %v5037 = vunpack.c.h.b16 %v4970
    %v5038 = vunpack.c.l.b16 %v4971
    %v5039 = vunpack.c.h.b16 %v4971
    %v5040 = vunpack.c.l.b16 %v4972
    %v5041 = vunpack.c.h.b16 %v4972
    %v5042 = vunpack.c.l.b16 %v4973
    %v5043 = vunpack.c.h.b16 %v4973
    %v5044 = vunpack.c.l.b16 %v4974
    %v5045 = vunpack.c.h.b16 %v4974
    %v5046 = vunpack.c.l.b16 %v4975
    %v5047 = vunpack.c.h.b16 %v4975
    %v5048 = vunpack.c.l.b16 %v4976
    %v5049 = vunpack.c.h.b16 %v4976
    %v5050 = vunpack.c.l.b16 %v4977
    %v5051 = vunpack.c.h.b16 %v4977
    %v5052 = vunpack.c.l.b16 %v4978
    %v5053 = vunpack.c.h.b16 %v4978
    %v5054 = vunpack.c.l.b16 %v4979
    %v5055 = vunpack.c.h.b16 %v4979
    %v5056 = vunpack.c.l.b16 %v4980
    %v5057 = vunpack.c.h.b16 %v4980
    %v5058 = vunpack.c.l.b16 %v4981
    %v5059 = vunpack.c.h.b16 %v4981
    %v5060 = vunpack.c.l.b16 %v4982
    %v5061 = vunpack.c.h.b16 %v4982
    %v5062 = vunpack.c.l.b16 %v4983
    %v5063 = vunpack.c.h.b16 %v4983
    %v5064 = vunpack.c.l.b16 %v4984
    %v5065 = vunpack.c.h.b16 %v4984
    %v5066 = vunpack.c.l.b16 %v4985
    %v5067 = vunpack.c.h.b16 %v4985
    %v5068 = vunpack.c.l.b16 %v4986
    %v5069 = vunpack.c.h.b16 %v4986
    %v5070 = vunpack.c.l.b16 %v4987
    %v5071 = vunpack.c.h.b16 %v4987
    %v5072 = vunpack.c.l.b16 %v4988
    %v5073 = vunpack.c.h.b16 %v4988
    %v5074 = vunpack.c.l.b16 %v4989
    %v5075 = vunpack.c.h.b16 %v4989
    %v5076 = vunpack.c.l.b16 %v4990
    %v5077 = vunpack.c.h.b16 %v4990
    %v5078 = vunpack.c.l.b16 %v4991
    %v5079 = vunpack.c.h.b16 %v4991
    %v5080 = vunpack.c.l.b16 %v4992
    %v5081 = vunpack.c.h.b16 %v4992
    %v5082 = vunpack.c.l.b16 %v4993
    %v5083 = vunpack.c.h.b16 %v4993
    %v5084 = vunpack.c.l.b16 %v4994
    %v5085 = vunpack.c.h.b16 %v4994
    %v5086 = vunpack.c.l.b16 %v4995
    %v5087 = vunpack.c.h.b16 %v4995
    %v5088 = vunpack.c.l.b16 %v4996
    %v5089 = vunpack.c.h.b16 %v4996
    %v5090 = vunpack.c.l.b16 %v4997
    %v5091 = vunpack.c.h.b16 %v4997
    %v5092 = vunpack.c.l.b16 %v4998
    %v5093 = vunpack.c.h.b16 %v4998
    %v5094 = vunpack.c.l.b16 %v4999
    %v5095 = vunpack.c.h.b16 %v4999
    %v5096 = vpack.c.b16 %v5036, %v5032
    %v5097 = vpack.c.b16 %v5037, %v5033
    %v5098 = vpack.c.b16 %v5038, %v5034
    %v5099 = vpack.c.b16 %v5039, %v5035
    %v5100 = vpack.c.b16 %v5044, %v5040
    %v5101 = vpack.c.b16 %v5045, %v5041
    %v5102 = vpack.c.b16 %v5046, %v5042
    %v5103 = vpack.c.b16 %v5047, %v5043
    %v5104 = vpack.c.b16 %v5052, %v5048
    %v5105 = vpack.c.b16 %v5053, %v5049
    %v5106 = vpack.c.b16 %v5054, %v5050
    %v5107 = vpack.c.b16 %v5055, %v5051
    %v5108 = vpack.c.b16 %v5060, %v5056
    %v5109 = vpack.c.b16 %v5061, %v5057
    %v5110 = vpack.c.b16 %v5062, %v5058
    %v5111 = vpack.c.b16 %v5063, %v5059
    %v5112 = vpack.c.b16 %v5068, %v5064
    %v5113 = vpack.c.b16 %v5069, %v5065
    %v5114 = vpack.c.b16 %v5070, %v5066
    %v5115 = vpack.c.b16 %v5071, %v5067
    %v5116 = vpack.c.b16 %v5076, %v5072
    %v5117 = vpack.c.b16 %v5077, %v5073
    %v5118 = vpack.c.b16 %v5078, %v5074
    %v5119 = vpack.c.b16 %v5079, %v5075
    %v5120 = vpack.c.b16 %v5084, %v5080
    %v5121 = vpack.c.b16 %v5085, %v5081
    %v5122 = vpack.c.b16 %v5086, %v5082
    %v5123 = vpack.c.b16 %v5087, %v5083
    %v5124 = vpack.c.b16 %v5092, %v5088
    %v5125 = vpack.c.b16 %v5093, %v5089
    %v5126 = vpack.c.b16 %v5094, %v5090
    %v5127 = vpack.c.b16 %v5095, %v5091
    %5160 = vmatprep.subr.bf16.mxu0 %v5097
    %5161 = vmatpush1.bf16.msra.mxu0 %v5096
    %5162 = vmatprep.subr.bf16.mxu0 %v5101
    %5163 = vmatpush1.bf16.msra.mxu0 %v5100
    %5164 = vmatprep.subr.bf16.mxu0 %v5105
    %5165 = vmatpush1.bf16.msra.mxu0 %v5104
    %5166 = vmatprep.subr.bf16.mxu0 %v5109
    %5167 = vmatpush1.bf16.msra.mxu0 %v5108
    %5168 = vmatprep.subr.bf16.mxu0 %v5113
    %5169 = vmatpush1.bf16.msra.mxu0 %v5112
    %5170 = vmatprep.subr.bf16.mxu0 %v5117
    %5171 = vmatpush1.bf16.msra.mxu0 %v5116
    %5172 = vmatprep.subr.bf16.mxu0 %v5121
    %5173 = vmatpush1.bf16.msra.mxu0 %v5120
    %5174 = vmatprep.subr.bf16.mxu0 %v5125
    %5175 = vmatpush1.bf16.msra.mxu0 %v5124
    %5176 = vmatprep.subr.bf16.mxu0 0
    %5177 = vmatpush1.bf16.msra.mxu0 0
    %5178 = vmatprep.subr.bf16.mxu0 0
    %5179 = vmatpush1.bf16.msra.mxu0 0
    %5180 = vmatprep.subr.bf16.mxu0 0
    %5181 = vmatpush1.bf16.msra.mxu0 0
    %5182 = vmatprep.subr.bf16.mxu0 0
    %5183 = vmatpush1.bf16.msra.mxu0 0
    %5184 = vmatprep.subr.bf16.mxu0 0
    %5185 = vmatpush1.bf16.msra.mxu0 0
    %5186 = vmatprep.subr.bf16.mxu0 0
    %5187 = vmatpush1.bf16.msra.mxu0 0
    %5188 = vmatprep.subr.bf16.mxu0 0
    %5189 = vmatpush1.bf16.msra.mxu0 0
    %5190 = vmatprep.subr.bf16.mxu0 0
    %5191 = vmatpush1.bf16.msra.mxu0 0
    %5192 = vmatprep.mubr.bf16.mxu0 0
    %5193 = vmatmul.mubr.bf16.gmra.mrb[0].mxu0 %v4967
    %v5194 = vpop.f32.mrb[0].mxu0
    %v5195 = vadd.f32 0.0, %v5194
    %v5196 = vpop.f32.mrb[0].mxu0
    %v5197 = vadd.f32 0.0, %v5196
    %v5198 = vpop.f32.mrb[0].mxu0
    %v5199 = vpop.f32.mrb[0].mxu0
    %5200 = vdwg.mxu0
    %5201 = vmatprep.subr.bf16.mxu0 %v5099
    %5202 = vmatpush1.bf16.msra.mxu0 %v5098
    %5203 = vmatprep.subr.bf16.mxu0 %v5103
    %5204 = vmatpush1.bf16.msra.mxu0 %v5102
    %5205 = vmatprep.subr.bf16.mxu0 %v5107
    %5206 = vmatpush1.bf16.msra.mxu0 %v5106
    %5207 = vmatprep.subr.bf16.mxu0 %v5111
    %5208 = vmatpush1.bf16.msra.mxu0 %v5110
    %5209 = vmatprep.subr.bf16.mxu0 %v5115
    %5210 = vmatpush1.bf16.msra.mxu0 %v5114
    %5211 = vmatprep.subr.bf16.mxu0 %v5119
    %5212 = vmatpush1.bf16.msra.mxu0 %v5118
    %5213 = vmatprep.subr.bf16.mxu0 %v5123
    %5214 = vmatpush1.bf16.msra.mxu0 %v5122
    %5215 = vmatprep.subr.bf16.mxu0 %v5127
    %5216 = vmatpush1.bf16.msra.mxu0 %v5126
    %5217 = vmatprep.subr.bf16.mxu0 0
    %5218 = vmatpush1.bf16.msra.mxu0 0
    %5219 = vmatprep.subr.bf16.mxu0 0
    %5220 = vmatpush1.bf16.msra.mxu0 0
    %5221 = vmatprep.subr.bf16.mxu0 0
    %5222 = vmatpush1.bf16.msra.mxu0 0
    %5223 = vmatprep.subr.bf16.mxu0 0
    %5224 = vmatpush1.bf16.msra.mxu0 0
    %5225 = vmatprep.subr.bf16.mxu0 0
    %5226 = vmatpush1.bf16.msra.mxu0 0
    %5227 = vmatprep.subr.bf16.mxu0 0
    %5228 = vmatpush1.bf16.msra.mxu0 0
    %5229 = vmatprep.subr.bf16.mxu0 0
    %5230 = vmatpush1.bf16.msra.mxu0 0
    %5231 = vmatprep.subr.bf16.mxu0 0
    %5232 = vmatpush1.bf16.msra.mxu0 0
    %5233 = vmatprep.mubr.bf16.mxu0 0
    %5234 = vmatmul.mubr.bf16.gmra.mrb[0].mxu0 %v4967
    %v5235 = vpop.f32.mrb[0].mxu0
    %v5236 = vadd.f32 0.0, %v5235
    %v5237 = vpop.f32.mrb[0].mxu0
    %v5238 = vadd.f32 0.0, %v5237
    %v5239 = vpop.f32.mrb[0].mxu0
    %v5240 = vpop.f32.mrb[0].mxu0
    %5241 = vdwg.mxu0
    %v5242 = vadd.f32 %v4963, %v5195
    %v5243 = vadd.f32 %v4964, %v5197
    %v5244 = vadd.f32 %v4965, %v5236
    %v5245 = vadd.f32 %v4966, %v5238
    %v5246 = vxor.u32 %v5242, 2147483648
    %v5247 = vmul.f32 %v5246, 1.442695
    %v5248 = vpow.pop %v5247
    %v5249 = vadd.f32 %v5248, 1.0
    %v5250 = vrcp.pop %v5249
    %v5251 = vmul.f32 1.0, %v5250
    %v5252 = vxor.u32 %v5243, 2147483648
    %v5253 = vmul.f32 %v5252, 1.442695
    %v5254 = vpow.pop %v5253
    %v5255 = vadd.f32 %v5254, 1.0
    %v5256 = vrcp.pop %v5255
    %v5257 = vmul.f32 1.0, %v5256
    %v5258 = vtanh.pop %v5244
    %v5259 = vxor.u32 %v5245, 2147483648
    %v5260 = vmul.f32 %v5259, 1.442695
    %v5261 = vpow.pop %v5260
    %v5262 = vadd.f32 %v5261, 1.0
    %v5263 = vrcp.pop %v5262
    %v5264 = vmul.f32 1.0, %v5263
    %v5265 = vmul.f32 %v5257, %v4953
    %v5266 = vmul.f32 %v5251, %v5258
    %v5267 = vadd.f32 %v5265, %v5266
    %v5268 = vtanh.pop %v5267
    %v5269 = vmul.f32 %v5264, %v5268
    %v5270 = vsel %vm4960, 1, 0
    %5271 = vset.pattern.permute.xlu0 0
    %5272 = vperm.xlu0 %5271, %v5270
    %v5273 = vpop.permute.xlu0 %5272
    %vm5274 = vcmp.eq.s32.totalorder %v5273, 1
    %v5275 = vsel %vm5274, %v5267, %v4953
    %v5276 = vsel %vm5274, %v5269, %v4954
    %v5277 = vsel %vm5274, %v5269, 0.0
    %v5278 = vpack.c.bf16 %v5277, %v5277
    %5279 = vst [vmem:[%s60] sm:$0xf] %v5278
    %5280 = vst [vmem:[#allocation4] sm:$0xff] %v5276
    %5281 = vst [vmem:[#allocation5] sm:$0xff] %v5275
  $region37: #{sentence_encoder_forward.2} parent=0 // pred_fallthru
    _
  %p5282 = scmp.ge.s32.totalorder %s2684, %s65
  // Predicated region
  $region38: #{sentence_encoder_forward.2} parent=0 // pred_check
    %p5283 = pneg %p5282
  $region39: #{sentence_encoder_forward.2} parent=0 // pred_check_branch
    %5285 = sbr.rel (%p5283) target = $region41
  $region40: #{sentence_encoder_forward.2} parent=0 // pred_region
    %5286 = vst [vmem:[%s60] sm:$0xf] 0
    %5287 = vst [vmem:[%s60 + $0x4] sm:$0xf] 0
    %5288 = vst [vmem:[%s60 + $0x8] sm:$0xf] 0
    %5289 = vst [vmem:[%s60 + $0xc] sm:$0xf] 0
    %5290 = vst [vmem:[%s60 + $0x10] sm:$0xf] 0
    %5291 = vst [vmem:[%s60 + $0x14] sm:$0xf] 0
    %5292 = vst [vmem:[%s60 + $0x18] sm:$0xf] 0
    %5293 = vst [vmem:[%s60 + $0x1c] sm:$0xf] 0
  $region41: #{sentence_encoder_forward.2} parent=0 // pred_fallthru
    _
  %s5294 = ssub.s32 0, 0
  %s5295 = smul.u32 8, %s5294
  %p5296 = scmp.lt.s32.totalorder %s5295, 7
  %s5297 = scalar_select %p5296, %s5295, 7
  %s5298 = smul.addr %s5297, 4
  %s5299 = scalar_lea.vmem %s7, %s5298
  // Predicated region
  $region42: #{sentence_encoder_forward.2} parent=0 // pred_check
    _
  $region43: #{sentence_encoder_forward.2} parent=0 // pred_check_branch
    %5301 = sbr.rel (0) target = $region45
  $region44: #{sentence_encoder_forward.2} parent=0 // pred_region
    _
  $region45: #{sentence_encoder_forward.2} parent=0 // pred_fallthru
    _
  // Predicated region
  $region46: #{sentence_encoder_forward.2} parent=0 // pred_check
    _
  $region47: #{sentence_encoder_forward.2} parent=0 // pred_check_branch
    %5303 = sbr.rel (0) target = $region49
  $region48: #{sentence_encoder_forward.2} parent=0 // pred_region
    %s5304 = ssub.s32 0, 0
    %s5305 = smul.u32 8, %s5304
  $region49: #{sentence_encoder_forward.2} parent=0 // pred_fallthru
    _
  // Predicated region
  $region50: #{sentence_encoder_forward.2} parent=0 // pred_check
    _
  $region51: #{sentence_encoder_forward.2} parent=0 // pred_check_branch
    %5307 = sbr.rel (0) target = $region53
  $region52: #{sentence_encoder_forward.2} parent=0 // pred_region
    _
  $region53: #{sentence_encoder_forward.2} parent=0 // pred_fallthru
    _
  // Predicated region
  $region54: #{sentence_encoder_forward.2} parent=0 // pred_check
    _
  $region55: #{sentence_encoder_forward.2} parent=0 // pred_check_branch
    %5309 = sbr.rel (0) target = $region57
  $region56: #{sentence_encoder_forward.2} parent=0 // pred_region
    %s5310 = ssub.s32 0, 0
    %s5311 = smul.u32 8, %s5310
    %p5312 = scmp.lt.s32.totalorder %s5311, 7
    %s5313 = scalar_select %p5312, %s5311, 7
    %s5314 = smul.addr %s5313, 4
    %s5315 = scalar_lea.vmem %s7, %s5314
  $region57: #{sentence_encoder_forward.2} parent=0 // pred_fallthru
    _

</llo_original>
